<compile_context>
chip_gen: v5e
topology: v5e:2x2
jax: 0.10.0
libtpu: 0.0.40
codegen_flags: <defaults>
</compile_context>

<pallas_src>
import numpy as np
import jax
import jax.numpy as jnp
from jax import lax
from jax.experimental import pallas as pl
from jax.experimental.pallas import tpu as pltpu


def _round_up(x, m):
    return ((x + m - 1) // m) * m


def _lstm_mlp_kernel(x_ref, sl_ref,
                     wih_ref, whh_f_ref, whh_b_ref, bias_ref,
                     w1f_ref, w1b_ref, b1_ref, w2_ref, b2_ref,
                     out_ref,
                     xwf_ref, xwb_ref, mask_ref):
    T, BB, I = x_ref.shape
    HP = whh_f_ref.shape[0]          # lane-padded hidden size (multiple of 128)
    G4 = whh_f_ref.shape[1]          # 4 * HP (gate blocks, each lane-aligned)
    f32 = jnp.float32

    # ---- hoisted input projection: one (T*BB, I) @ (I, 8*HP) matmul for both directions,
    #      biases folded in; done once, off the recurrence critical path ----
    x2d = x_ref[...].reshape(T * BB, I)
    proj = jnp.dot(x2d, wih_ref[...], preferred_element_type=f32) + bias_ref[...]
    proj = proj.reshape(T, BB, 2 * G4)
    xwf_ref[...] = proj[:, :, :G4]
    xwb_ref[...] = proj[:, :, G4:]

    # ---- one-hot "last valid timestep" mask over original time, built once ----
    # NOTE: seq_len == 0 (or > T) never matches -> gathered hidden stays zero (as before).
    last_t = (sl_ref[...].astype(jnp.int32) - 1).reshape(1, BB, 1)
    t_iota = lax.broadcasted_iota(jnp.int32, (T, BB, HP), 0)
    mask_ref[...] = (t_iota == last_t).astype(f32)

    def lstm_update(gates, c):
        # each gate is a full 128-lane block -> free views (PyTorch gate order i, f, g, o)
        i = jax.nn.sigmoid(gates[:, 0 * HP:1 * HP])
        f = jax.nn.sigmoid(gates[:, 1 * HP:2 * HP])
        g = jnp.tanh(gates[:, 2 * HP:3 * HP])
        o = jax.nn.sigmoid(gates[:, 3 * HP:4 * HP])
        c_new = f * c + i * g
        h_new = o * jnp.tanh(c_new)
        return h_new, c_new

    zeros = jnp.zeros((BB, HP), f32)

    # ---- fused fwd/bwd recurrence: both independent chains advance each iteration ----
    def body(t, carry):
        h_f, c_f, acc_f, h_b, c_b, acc_b = carry
        tb = T - 1 - t
        gates_f = xwf_ref[t] + jnp.dot(h_f, whh_f_ref[...], preferred_element_type=f32)
        gates_b = xwb_ref[tb] + jnp.dot(h_b, whh_b_ref[...], preferred_element_type=f32)
        h_f, c_f = lstm_update(gates_f, c_f)
        h_b, c_b = lstm_update(gates_b, c_b)
        acc_f = acc_f + mask_ref[t] * h_f
        acc_b = acc_b + mask_ref[tb] * h_b
        return h_f, c_f, acc_f, h_b, c_b, acc_b

    carry = (zeros, zeros, zeros, zeros, zeros, zeros)
    if T <= 16:
        carry = lax.fori_loop(0, T, body, carry, unroll=True)
    else:
        carry = lax.fori_loop(0, T, body, carry)
    _, _, gath_f, _, _, gath_b = carry

    # ---- MLP head, lane-aligned: each direction hits its own half of W1 (no 2H concat) ----
    h1 = jnp.maximum(
        jnp.dot(gath_f, w1f_ref[...], preferred_element_type=f32)
        + jnp.dot(gath_b, w1b_ref[...], preferred_element_type=f32)
        + b1_ref[...], 0.0)
    out_ref[...] = jnp.dot(h1, w2_ref[...], preferred_element_type=f32) + b2_ref[...]


def fancy_model2_forward(x, seq_lens, params):
    """x: (B, T, I) float32, seq_lens: (B,) int. Returns (B, out) float32."""
    x = jnp.asarray(x, jnp.float32)
    B, T, I = x.shape
    H = params["whh_f"].shape[1]          # hid1
    H2 = params["w1"].shape[0]            # hid2
    OUTD = params["w2"].shape[0]

    BB = 8                                 # batch tile = f32 sublane multiple
    Bp = _round_up(B, BB)
    HP = _round_up(H, 128)                 # lane-pad hidden: each gate owns 128-lane blocks
    H2P = _round_up(H2, 128)
    OP = _round_up(OUTD, 128)              # lane-dense output block (unmasked stores)
    G4 = 4 * HP
    f32 = jnp.float32

    def pad_gates_cols(w_rows_by_4h):      # (rows, 4H) -> (rows, 4HP), gate order (i,f,g,o)
        rows = w_rows_by_4h.shape[0]
        out = jnp.zeros((rows, G4), f32)
        for g in range(4):
            out = out.at[:, g * HP:g * HP + H].set(w_rows_by_4h[:, g * H:(g + 1) * H])
        return out

    def pad_rows(w, rp):                   # zero-pad the contraction dim
        out = jnp.zeros((rp,) + w.shape[1:], f32)
        return out.at[:w.shape[0]].set(w)

    # combined input-projection weight / bias for both directions, gate-block padded
    wih_cat = jnp.concatenate(
        [pad_gates_cols(params["wih_f"].T.astype(f32)),
         pad_gates_cols(params["wih_b"].T.astype(f32))], axis=1)              # (I, 8HP)
    bias_cat = jnp.concatenate(
        [pad_gates_cols((params["bih_f"] + params["bhh_f"]).reshape(1, -1).astype(f32)),
         pad_gates_cols((params["bih_b"] + params["bhh_b"]).reshape(1, -1).astype(f32))],
        axis=1)                                                                # (1, 8HP)

    whh_f_pad = pad_rows(pad_gates_cols(params["whh_f"].T.astype(f32)), HP)    # (HP, 4HP)
    whh_b_pad = pad_rows(pad_gates_cols(params["whh_b"].T.astype(f32)), HP)    # (HP, 4HP)

    w1 = params["w1"].astype(f32)                                              # (H2, 2H)
    w1f = jnp.zeros((HP, H2P), f32).at[:H, :H2].set(w1[:, :H].T)
    w1b = jnp.zeros((HP, H2P), f32).at[:H, :H2].set(w1[:, H:].T)
    b1p = jnp.zeros((1, H2P), f32).at[0, :H2].set(params["b1"].astype(f32))
    w2p = jnp.zeros((H2P, OP), f32).at[:H2, :OUTD].set(params["w2"].astype(f32).T)
    b2p = jnp.zeros((1, OP), f32).at[0, :OUTD].set(params["b2"].astype(f32))

    # pad batch to a sublane multiple, go time-major
    xp = jnp.zeros((Bp, T, I), f32).at[:B].set(x)
    xt = jnp.transpose(xp, (1, 0, 2))                                          # (T, Bp, I)
    sl = jnp.ones((Bp, 1), jnp.int32).at[:B, 0].set(jnp.asarray(seq_lens, jnp.int32))

    full2d = lambda a: pl.BlockSpec(a.shape, lambda i: (0, 0))

    out_full = pl.pallas_call(
        _lstm_mlp_kernel,
        out_shape=jax.ShapeDtypeStruct((Bp, OP), f32),
        grid=(Bp // BB,),
        in_specs=[
            pl.BlockSpec((T, BB, I), lambda i: (0, i, 0)),      # x, time-major batch block
            pl.BlockSpec((BB, 1), lambda i: (i, 0)),            # seq_lens
            full2d(wih_cat), full2d(whh_f_pad), full2d(whh_b_pad), full2d(bias_cat),
            full2d(w1f), full2d(w1b), full2d(b1p), full2d(w2p), full2d(b2p),
        ],
        out_specs=pl.BlockSpec((BB, OP), lambda i: (i, 0)),
        scratch_shapes=[
            pltpu.VMEM((T, BB, G4), f32),    # fwd input projection, indexed by original time
            pltpu.VMEM((T, BB, G4), f32),    # bwd input projection, indexed by original time
            pltpu.VMEM((T, BB, HP), f32),    # one-hot last-timestep mask
        ],
        compiler_params=pltpu.CompilerParams(
            dimension_semantics=("parallel",)),  # v7x: batch blocks split across the 2 TCs
    )(xt, sl, wih_cat, whh_f_pad, whh_b_pad, bias_cat, w1f, w1b, b1p, w2p, b2p)

    return out_full[:B, :OUTD]


# ------------------------- pure-numpy reference -------------------------
def _ref_forward(x, seq_lens, p):
    x = np.asarray(x); B, T, I = x.shape
    H = p["whh_f"].shape[1]

    def sigmoid(z):
        return 1.0 / (1.0 + np.exp(-z))

    def run_dir(wih, whh, bih, bhh, reverse):
        h = np.zeros((B, H), np.float32)
        c = np.zeros((B, H), np.float32)
        outs = np.zeros((B, T, H), np.float32)
        ts = range(T - 1, -1, -1) if reverse else range(T)
        for t in ts:
            g = x[:, t, :] @ np.asarray(wih).T + h @ np.asarray(whh).T + np.asarray(bih) + np.asarray(bhh)
            i = sigmoid(g[:, 0:H]); f = sigmoid(g[:, H:2 * H])
            gg = np.tanh(g[:, 2 * H:3 * H]); o = sigmoid(g[:, 3 * H:4 * H])
            c = f * c + i * gg
            h = o * np.tanh(c)
            outs[:, t, :] = h
        return outs

    out_f = run_dir(p["wih_f"], p["whh_f"], p["bih_f"], p["bhh_f"], False)
    out_b = run_dir(p["wih_b"], p["whh_b"], p["bih_b"], p["bhh_b"], True)
    output = np.concatenate([out_f, out_b], axis=-1)
    req = np.stack([output[i, int(seq_lens[i]) - 1, :] for i in range(B)])
    h1 = np.maximum(req @ np.asarray(p["w1"]).T + np.asarray(p["b1"]), 0.0)
    return h1 @ np.asarray(p["w2"]).T + np.asarray(p["b2"])


if __name__ == "__main__":
    B, T = 4, 8
    INP, HID1, HID2, OUT = 16, 32, 32, 8

    key = jax.random.PRNGKey(0)
    ks = jax.random.split(key, 16)
    k_lstm = 1.0 / np.sqrt(HID1)

    def u(k, shape, bound):
        return jax.random.uniform(k, shape, jnp.float32, -bound, bound)

    params = {
        # forward-direction LSTM weights (PyTorch shapes)
        "wih_f": u(ks[0], (4 * HID1, INP), k_lstm),
        "whh_f": u(ks[1], (4 * HID1, HID1), k_lstm),
        "bih_f": u(ks[2], (4 * HID1,), k_lstm),
        "bhh_f": u(ks[3], (4 * HID1,), k_lstm),
        # reverse-direction LSTM weights
        "wih_b": u(ks[4], (4 * HID1, INP), k_lstm),
        "whh_b": u(ks[5], (4 * HID1, HID1), k_lstm),
        "bih_b": u(ks[6], (4 * HID1,), k_lstm),
        "bhh_b": u(ks[7], (4 * HID1,), k_lstm),
        # W: Linear(2*hid1, hid2)
        "w1": u(ks[8], (HID2, 2 * HID1), 1.0 / np.sqrt(2 * HID1)),
        "b1": u(ks[9], (HID2,), 1.0 / np.sqrt(2 * HID1)),
        # W2: Linear(hid2, out)
        "w2": u(ks[10], (OUT, HID2), 1.0 / np.sqrt(HID2)),
        "b2": u(ks[11], (OUT,), 1.0 / np.sqrt(HID2)),
    }

    x = jax.random.normal(ks[12], (B, T, INP), jnp.float32)
    seq_lens = jnp.array([8, 5, 1, 3], dtype=jnp.int32)

    out = fancy_model2_forward(x, seq_lens, params)
    out = jax.block_until_ready(out)

    ref = _ref_forward(np.asarray(x), np.asarray(seq_lens), params)
    np.testing.assert_allclose(np.asarray(out), ref, rtol=1e-2, atol=1e-2)

    print("KERNEL_OK")
</pallas_src>

<mosaic_0001>
module attributes {stable_mosaic.version = 11 : i64} {
  func.func @_lstm_mlp_kernel(%arg0: i32, %arg1: memref<8x8x16xf32, #tpu.memory_space<vmem>>, %arg2: memref<8x1xi32, #tpu.memory_space<vmem>>, %arg3: memref<16x1024xf32, #tpu.memory_space<vmem>>, %arg4: memref<128x512xf32, #tpu.memory_space<vmem>>, %arg5: memref<128x512xf32, #tpu.memory_space<vmem>>, %arg6: memref<1x1024xf32, #tpu.memory_space<vmem>>, %arg7: memref<128x128xf32, #tpu.memory_space<vmem>>, %arg8: memref<128x128xf32, #tpu.memory_space<vmem>>, %arg9: memref<1x128xf32, #tpu.memory_space<vmem>>, %arg10: memref<128x128xf32, #tpu.memory_space<vmem>>, %arg11: memref<1x128xf32, #tpu.memory_space<vmem>>, %arg12: memref<8x128xf32, #tpu.memory_space<vmem>>, %arg13: memref<8x8x512xf32, #tpu.memory_space<vmem>>, %arg14: memref<8x8x512xf32, #tpu.memory_space<vmem>>, %arg15: memref<8x8x128xf32, #tpu.memory_space<vmem>>) attributes {dimension_semantics = [#tpu.dimension_semantics<parallel>], iteration_bounds = array<i64: 1>, scalar_prefetch = 0 : i64, scratch_operands = 3 : i64, tpu.core_type = #tpu.core_type<tc>, window_params = [{transform_indices = @transform_0, window_bounds = array<i64: 8, 8, 16>}, {transform_indices = @transform_1, window_bounds = array<i64: 8, 1>}, {pipeline_mode = #tpu.pipeline_mode<synchronous>, transform_indices = @transform_2, window_bounds = array<i64: 16, 1024>}, {pipeline_mode = #tpu.pipeline_mode<synchronous>, transform_indices = @transform_3, window_bounds = array<i64: 128, 512>}, {pipeline_mode = #tpu.pipeline_mode<synchronous>, transform_indices = @transform_4, window_bounds = array<i64: 128, 512>}, {pipeline_mode = #tpu.pipeline_mode<synchronous>, transform_indices = @transform_5, window_bounds = array<i64: 1, 1024>}, {pipeline_mode = #tpu.pipeline_mode<synchronous>, transform_indices = @transform_6, window_bounds = array<i64: 128, 128>}, {pipeline_mode = #tpu.pipeline_mode<synchronous>, transform_indices = @transform_7, window_bounds = array<i64: 128, 128>}, {pipeline_mode = #tpu.pipeline_mode<synchronous>, transform_indices = @transform_8, window_bounds = array<i64: 1, 128>}, {pipeline_mode = #tpu.pipeline_mode<synchronous>, transform_indices = @transform_9, window_bounds = array<i64: 128, 128>}, {pipeline_mode = #tpu.pipeline_mode<synchronous>, transform_indices = @transform_10, window_bounds = array<i64: 1, 128>}, {transform_indices = @transform_11, window_bounds = array<i64: 8, 128>}]} {
    %c0 = arith.constant 0 : index
    %c0_0 = arith.constant 0 : index
    %c0_1 = arith.constant 0 : index
    %0 = vector.load %arg1[%c0, %c0_0, %c0_1] : memref<8x8x16xf32, #tpu.memory_space<vmem>>, vector<8x8x16xf32>
    %1 = vector.shape_cast %0 : vector<8x8x16xf32> to vector<64x16xf32>
    %c0_2 = arith.constant 0 : index
    %c0_3 = arith.constant 0 : index
    %2 = vector.load %arg3[%c0_2, %c0_3] : memref<16x1024xf32, #tpu.memory_space<vmem>>, vector<16x1024xf32>
    %cst = arith.constant dense<0.000000e+00> : vector<64x1024xf32>
    %3 = tpu.matmul %1, %2, %cst {dimension_numbers = #tpu.dot_dimension_numbers<[1], [0], [0], [1], [0, 0, 1, 1], [], []>} : vector<64x16xf32>, vector<16x1024xf32>, vector<64x1024xf32> -> vector<64x1024xf32>
    %c0_4 = arith.constant 0 : index
    %c0_5 = arith.constant 0 : index
    %4 = vector.load %arg6[%c0_4, %c0_5] : memref<1x1024xf32, #tpu.memory_space<vmem>>, vector<1x1024xf32>
    %5 = vector.broadcast %4 : vector<1x1024xf32> to vector<64x1024xf32>
    %6 = arith.addf %3, %5 : vector<64x1024xf32>
    %7 = vector.shape_cast %6 : vector<64x1024xf32> to vector<8x8x1024xf32>
    %8 = vector.extract_strided_slice %7 {offsets = [0, 0, 0], sizes = [8, 8, 512], strides = [1, 1, 1]} : vector<8x8x1024xf32> to vector<8x8x512xf32>
    %c0_6 = arith.constant 0 : index
    %c0_7 = arith.constant 0 : index
    %c0_8 = arith.constant 0 : index
    %9 = vector.load %arg13[%c0_6, %c0_7, %c0_8] : memref<8x8x512xf32, #tpu.memory_space<vmem>>, vector<8x8x512xf32>
    tpu.vector_store %arg13[%c0_6, %c0_7, %c0_8], %8 {strides = array<i32>} : memref<8x8x512xf32, #tpu.memory_space<vmem>>, vector<8x8x512xf32>,
    %10 = vector.extract_strided_slice %7 {offsets = [0, 0, 512], sizes = [8, 8, 512], strides = [1, 1, 1]} : vector<8x8x1024xf32> to vector<8x8x512xf32>
    %c0_9 = arith.constant 0 : index
    %c0_10 = arith.constant 0 : index
    %c0_11 = arith.constant 0 : index
    %11 = vector.load %arg14[%c0_9, %c0_10, %c0_11] : memref<8x8x512xf32, #tpu.memory_space<vmem>>, vector<8x8x512xf32>
    tpu.vector_store %arg14[%c0_9, %c0_10, %c0_11], %10 {strides = array<i32>} : memref<8x8x512xf32, #tpu.memory_space<vmem>>, vector<8x8x512xf32>,
    %c0_12 = arith.constant 0 : index
    %c0_13 = arith.constant 0 : index
    %12 = vector.load %arg2[%c0_12, %c0_13] : memref<8x1xi32, #tpu.memory_space<vmem>>, vector<8x1xi32>
    %c1_i32 = arith.constant 1 : i32
    %13 = vector.broadcast %c1_i32 : i32 to vector<8x1xi32>
    %14 = arith.subi %12, %13 : vector<8x1xi32>
    %15 = vector.shape_cast %14 : vector<8x1xi32> to vector<1x8x1xi32>
    %16 = tpu.iota {dimensions = array<i32: 0>} : vector<8x8x128xi32>
    %17 = vector.broadcast %15 : vector<1x8x1xi32> to vector<8x8x128xi32>
    %18 = arith.cmpi eq, %16, %17 : vector<8x8x128xi32>
    %19 = arith.extui %18 : vector<8x8x128xi1> to vector<8x8x128xi32>
    %20 = arith.sitofp %19 : vector<8x8x128xi32> to vector<8x8x128xf32>
    %c0_14 = arith.constant 0 : index
    %c0_15 = arith.constant 0 : index
    %c0_16 = arith.constant 0 : index
    %21 = vector.load %arg15[%c0_14, %c0_15, %c0_16] : memref<8x8x128xf32, #tpu.memory_space<vmem>>, vector<8x8x128xf32>
    tpu.vector_store %arg15[%c0_14, %c0_15, %c0_16], %20 {strides = array<i32>} : memref<8x8x128xf32, #tpu.memory_space<vmem>>, vector<8x8x128xf32>,
    %cst_17 = arith.constant 0.000000e+00 : f32
    %22 = vector.broadcast %cst_17 : f32 to vector<8x128xf32>
    %c0_i32 = arith.constant 0 : i32
    %c7_i32 = arith.constant 7 : i32
    %23 = arith.subi %c7_i32, %c0_i32 : i32
    %24 = arith.index_cast %c0_i32 : i32 to index
    %c0_18 = arith.constant 0 : index
    %c0_19 = arith.constant 0 : index
    %25 = vector.load %arg13[%24, %c0_18, %c0_19] : memref<8x8x512xf32, #tpu.memory_space<vmem>>, vector<1x8x512xf32>
    %26 = vector.shape_cast %25 : vector<1x8x512xf32> to vector<8x512xf32>
    %c0_20 = arith.constant 0 : index
    %c0_21 = arith.constant 0 : index
    %27 = vector.load %arg4[%c0_20, %c0_21] : memref<128x512xf32, #tpu.memory_space<vmem>>, vector<128x512xf32>
    %cst_22 = arith.constant dense<0.000000e+00> : vector<8x512xf32>
    %28 = tpu.matmul %22, %27, %cst_22 {dimension_numbers = #tpu.dot_dimension_numbers<[1], [0], [0], [1], [0, 0, 1, 1], [], []>} : vector<8x128xf32>, vector<128x512xf32>, vector<8x512xf32> -> vector<8x512xf32>
    %29 = arith.addf %26, %28 : vector<8x512xf32>
    %30 = arith.index_cast %23 : i32 to index
    %c0_23 = arith.constant 0 : index
    %c0_24 = arith.constant 0 : index
    %31 = vector.load %arg14[%30, %c0_23, %c0_24] : memref<8x8x512xf32, #tpu.memory_space<vmem>>, vector<1x8x512xf32>
    %32 = vector.shape_cast %31 : vector<1x8x512xf32> to vector<8x512xf32>
    %c0_25 = arith.constant 0 : index
    %c0_26 = arith.constant 0 : index
    %33 = vector.load %arg5[%c0_25, %c0_26] : memref<128x512xf32, #tpu.memory_space<vmem>>, vector<128x512xf32>
    %cst_27 = arith.constant dense<0.000000e+00> : vector<8x512xf32>
    %34 = tpu.matmul %22, %33, %cst_27 {dimension_numbers = #tpu.dot_dimension_numbers<[1], [0], [0], [1], [0, 0, 1, 1], [], []>} : vector<8x128xf32>, vector<128x512xf32>, vector<8x512xf32> -> vector<8x512xf32>
    %35 = arith.addf %32, %34 : vector<8x512xf32>
    %36 = vector.extract_strided_slice %29 {offsets = [0, 0], sizes = [8, 128], strides = [1, 1]} : vector<8x512xf32> to vector<8x128xf32>
    %37 = arith.negf %36 : vector<8x128xf32>
    %38 = math.exp %37 : vector<8x128xf32>
    %cst_28 = arith.constant 1.000000e+00 : f32
    %39 = vector.broadcast %cst_28 : f32 to vector<8x128xf32>
    %40 = arith.addf %39, %38 : vector<8x128xf32>
    %41 = arith.divf %39, %40 : vector<8x128xf32>
    %42 = vector.extract_strided_slice %29 {offsets = [0, 128], sizes = [8, 128], strides = [1, 1]} : vector<8x512xf32> to vector<8x128xf32>
    %43 = arith.negf %42 : vector<8x128xf32>
    %44 = math.exp %43 : vector<8x128xf32>
    %cst_29 = arith.constant 1.000000e+00 : f32
    %45 = vector.broadcast %cst_29 : f32 to vector<8x128xf32>
    %46 = arith.addf %45, %44 : vector<8x128xf32>
    %47 = arith.divf %45, %46 : vector<8x128xf32>
    %48 = vector.extract_strided_slice %29 {offsets = [0, 256], sizes = [8, 128], strides = [1, 1]} : vector<8x512xf32> to vector<8x128xf32>
    %49 = math.tanh %48 : vector<8x128xf32>
    %50 = vector.extract_strided_slice %29 {offsets = [0, 384], sizes = [8, 128], strides = [1, 1]} : vector<8x512xf32> to vector<8x128xf32>
    %51 = arith.negf %50 : vector<8x128xf32>
    %52 = math.exp %51 : vector<8x128xf32>
    %cst_30 = arith.constant 1.000000e+00 : f32
    %53 = vector.broadcast %cst_30 : f32 to vector<8x128xf32>
    %54 = arith.addf %53, %52 : vector<8x128xf32>
    %55 = arith.divf %53, %54 : vector<8x128xf32>
    %56 = arith.mulf %47, %22 : vector<8x128xf32>
    %57 = arith.mulf %41, %49 : vector<8x128xf32>
    %58 = arith.addf %56, %57 : vector<8x128xf32>
    %59 = math.tanh %58 : vector<8x128xf32>
    %60 = arith.mulf %55, %59 : vector<8x128xf32>
    %61 = vector.extract_strided_slice %35 {offsets = [0, 0], sizes = [8, 128], strides = [1, 1]} : vector<8x512xf32> to vector<8x128xf32>
    %62 = arith.negf %61 : vector<8x128xf32>
    %63 = math.exp %62 : vector<8x128xf32>
    %cst_31 = arith.constant 1.000000e+00 : f32
    %64 = vector.broadcast %cst_31 : f32 to vector<8x128xf32>
    %65 = arith.addf %64, %63 : vector<8x128xf32>
    %66 = arith.divf %64, %65 : vector<8x128xf32>
    %67 = vector.extract_strided_slice %35 {offsets = [0, 128], sizes = [8, 128], strides = [1, 1]} : vector<8x512xf32> to vector<8x128xf32>
    %68 = arith.negf %67 : vector<8x128xf32>
    %69 = math.exp %68 : vector<8x128xf32>
    %cst_32 = arith.constant 1.000000e+00 : f32
    %70 = vector.broadcast %cst_32 : f32 to vector<8x128xf32>
    %71 = arith.addf %70, %69 : vector<8x128xf32>
    %72 = arith.divf %70, %71 : vector<8x128xf32>
    %73 = vector.extract_strided_slice %35 {offsets = [0, 256], sizes = [8, 128], strides = [1, 1]} : vector<8x512xf32> to vector<8x128xf32>
    %74 = math.tanh %73 : vector<8x128xf32>
    %75 = vector.extract_strided_slice %35 {offsets = [0, 384], sizes = [8, 128], strides = [1, 1]} : vector<8x512xf32> to vector<8x128xf32>
    %76 = arith.negf %75 : vector<8x128xf32>
    %77 = math.exp %76 : vector<8x128xf32>
    %cst_33 = arith.constant 1.000000e+00 : f32
    %78 = vector.broadcast %cst_33 : f32 to vector<8x128xf32>
    %79 = arith.addf %78, %77 : vector<8x128xf32>
    %80 = arith.divf %78, %79 : vector<8x128xf32>
    %81 = arith.mulf %72, %22 : vector<8x128xf32>
    %82 = arith.mulf %66, %74 : vector<8x128xf32>
    %83 = arith.addf %81, %82 : vector<8x128xf32>
    %84 = math.tanh %83 : vector<8x128xf32>
    %85 = arith.mulf %80, %84 : vector<8x128xf32>
    %86 = arith.index_cast %c0_i32 : i32 to index
    %c0_34 = arith.constant 0 : index
    %c0_35 = arith.constant 0 : index
    %87 = vector.load %arg15[%86, %c0_34, %c0_35] : memref<8x8x128xf32, #tpu.memory_space<vmem>>, vector<1x8x128xf32>
    %88 = vector.shape_cast %87 : vector<1x8x128xf32> to vector<8x128xf32>
    %89 = arith.mulf %88, %60 : vector<8x128xf32>
    %90 = arith.addf %22, %89 : vector<8x128xf32>
    %91 = arith.index_cast %23 : i32 to index
    %c0_36 = arith.constant 0 : index
    %c0_37 = arith.constant 0 : index
    %92 = vector.load %arg15[%91, %c0_36, %c0_37] : memref<8x8x128xf32, #tpu.memory_space<vmem>>, vector<1x8x128xf32>
    %93 = vector.shape_cast %92 : vector<1x8x128xf32> to vector<8x128xf32>
    %94 = arith.mulf %93, %85 : vector<8x128xf32>
    %95 = arith.addf %22, %94 : vector<8x128xf32>
    %c1_i32_38 = arith.constant 1 : i32
    %c7_i32_39 = arith.constant 7 : i32
    %96 = arith.subi %c7_i32_39, %c1_i32_38 : i32
    %97 = arith.index_cast %c1_i32_38 : i32 to index
    %c0_40 = arith.constant 0 : index
    %c0_41 = arith.constant 0 : index
    %98 = vector.load %arg13[%97, %c0_40, %c0_41] : memref<8x8x512xf32, #tpu.memory_space<vmem>>, vector<1x8x512xf32>
    %99 = vector.shape_cast %98 : vector<1x8x512xf32> to vector<8x512xf32>
    %c0_42 = arith.constant 0 : index
    %c0_43 = arith.constant 0 : index
    %100 = vector.load %arg4[%c0_42, %c0_43] : memref<128x512xf32, #tpu.memory_space<vmem>>, vector<128x512xf32>
    %cst_44 = arith.constant dense<0.000000e+00> : vector<8x512xf32>
    %101 = tpu.matmul %60, %100, %cst_44 {dimension_numbers = #tpu.dot_dimension_numbers<[1], [0], [0], [1], [0, 0, 1, 1], [], []>} : vector<8x128xf32>, vector<128x512xf32>, vector<8x512xf32> -> vector<8x512xf32>
    %102 = arith.addf %99, %101 : vector<8x512xf32>
    %103 = arith.index_cast %96 : i32 to index
    %c0_45 = arith.constant 0 : index
    %c0_46 = arith.constant 0 : index
    %104 = vector.load %arg14[%103, %c0_45, %c0_46] : memref<8x8x512xf32, #tpu.memory_space<vmem>>, vector<1x8x512xf32>
    %105 = vector.shape_cast %104 : vector<1x8x512xf32> to vector<8x512xf32>
    %c0_47 = arith.constant 0 : index
    %c0_48 = arith.constant 0 : index
    %106 = vector.load %arg5[%c0_47, %c0_48] : memref<128x512xf32, #tpu.memory_space<vmem>>, vector<128x512xf32>
    %cst_49 = arith.constant dense<0.000000e+00> : vector<8x512xf32>
    %107 = tpu.matmul %85, %106, %cst_49 {dimension_numbers = #tpu.dot_dimension_numbers<[1], [0], [0], [1], [0, 0, 1, 1], [], []>} : vector<8x128xf32>, vector<128x512xf32>, vector<8x512xf32> -> vector<8x512xf32>
    %108 = arith.addf %105, %107 : vector<8x512xf32>
    %109 = vector.extract_strided_slice %102 {offsets = [0, 0], sizes = [8, 128], strides = [1, 1]} : vector<8x512xf32> to vector<8x128xf32>
    %110 = arith.negf %109 : vector<8x128xf32>
    %111 = math.exp %110 : vector<8x128xf32>
    %cst_50 = arith.constant 1.000000e+00 : f32
    %112 = vector.broadcast %cst_50 : f32 to vector<8x128xf32>
    %113 = arith.addf %112, %111 : vector<8x128xf32>
    %114 = arith.divf %112, %113 : vector<8x128xf32>
    %115 = vector.extract_strided_slice %102 {offsets = [0, 128], sizes = [8, 128], strides = [1, 1]} : vector<8x512xf32> to vector<8x128xf32>
    %116 = arith.negf %115 : vector<8x128xf32>
    %117 = math.exp %116 : vector<8x128xf32>
    %cst_51 = arith.constant 1.000000e+00 : f32
    %118 = vector.broadcast %cst_51 : f32 to vector<8x128xf32>
    %119 = arith.addf %118, %117 : vector<8x128xf32>
    %120 = arith.divf %118, %119 : vector<8x128xf32>
    %121 = vector.extract_strided_slice %102 {offsets = [0, 256], sizes = [8, 128], strides = [1, 1]} : vector<8x512xf32> to vector<8x128xf32>
    %122 = math.tanh %121 : vector<8x128xf32>
    %123 = vector.extract_strided_slice %102 {offsets = [0, 384], sizes = [8, 128], strides = [1, 1]} : vector<8x512xf32> to vector<8x128xf32>
    %124 = arith.negf %123 : vector<8x128xf32>
    %125 = math.exp %124 : vector<8x128xf32>
    %cst_52 = arith.constant 1.000000e+00 : f32
    %126 = vector.broadcast %cst_52 : f32 to vector<8x128xf32>
    %127 = arith.addf %126, %125 : vector<8x128xf32>
    %128 = arith.divf %126, %127 : vector<8x128xf32>
    %129 = arith.mulf %120, %58 : vector<8x128xf32>
    %130 = arith.mulf %114, %122 : vector<8x128xf32>
    %131 = arith.addf %129, %130 : vector<8x128xf32>
    %132 = math.tanh %131 : vector<8x128xf32>
    %133 = arith.mulf %128, %132 : vector<8x128xf32>
    %134 = vector.extract_strided_slice %108 {offsets = [0, 0], sizes = [8, 128], strides = [1, 1]} : vector<8x512xf32> to vector<8x128xf32>
    %135 = arith.negf %134 : vector<8x128xf32>
    %136 = math.exp %135 : vector<8x128xf32>
    %cst_53 = arith.constant 1.000000e+00 : f32
    %137 = vector.broadcast %cst_53 : f32 to vector<8x128xf32>
    %138 = arith.addf %137, %136 : vector<8x128xf32>
    %139 = arith.divf %137, %138 : vector<8x128xf32>
    %140 = vector.extract_strided_slice %108 {offsets = [0, 128], sizes = [8, 128], strides = [1, 1]} : vector<8x512xf32> to vector<8x128xf32>
    %141 = arith.negf %140 : vector<8x128xf32>
    %142 = math.exp %141 : vector<8x128xf32>
    %cst_54 = arith.constant 1.000000e+00 : f32
    %143 = vector.broadcast %cst_54 : f32 to vector<8x128xf32>
    %144 = arith.addf %143, %142 : vector<8x128xf32>
    %145 = arith.divf %143, %144 : vector<8x128xf32>
    %146 = vector.extract_strided_slice %108 {offsets = [0, 256], sizes = [8, 128], strides = [1, 1]} : vector<8x512xf32> to vector<8x128xf32>
    %147 = math.tanh %146 : vector<8x128xf32>
    %148 = vector.extract_strided_slice %108 {offsets = [0, 384], sizes = [8, 128], strides = [1, 1]} : vector<8x512xf32> to vector<8x128xf32>
    %149 = arith.negf %148 : vector<8x128xf32>
    %150 = math.exp %149 : vector<8x128xf32>
    %cst_55 = arith.constant 1.000000e+00 : f32
    %151 = vector.broadcast %cst_55 : f32 to vector<8x128xf32>
    %152 = arith.addf %151, %150 : vector<8x128xf32>
    %153 = arith.divf %151, %152 : vector<8x128xf32>
    %154 = arith.mulf %145, %83 : vector<8x128xf32>
    %155 = arith.mulf %139, %147 : vector<8x128xf32>
    %156 = arith.addf %154, %155 : vector<8x128xf32>
    %157 = math.tanh %156 : vector<8x128xf32>
    %158 = arith.mulf %153, %157 : vector<8x128xf32>
    %159 = arith.index_cast %c1_i32_38 : i32 to index
    %c0_56 = arith.constant 0 : index
    %c0_57 = arith.constant 0 : index
    %160 = vector.load %arg15[%159, %c0_56, %c0_57] : memref<8x8x128xf32, #tpu.memory_space<vmem>>, vector<1x8x128xf32>
    %161 = vector.shape_cast %160 : vector<1x8x128xf32> to vector<8x128xf32>
    %162 = arith.mulf %161, %133 : vector<8x128xf32>
    %163 = arith.addf %90, %162 : vector<8x128xf32>
    %164 = arith.index_cast %96 : i32 to index
    %c0_58 = arith.constant 0 : index
    %c0_59 = arith.constant 0 : index
    %165 = vector.load %arg15[%164, %c0_58, %c0_59] : memref<8x8x128xf32, #tpu.memory_space<vmem>>, vector<1x8x128xf32>
    %166 = vector.shape_cast %165 : vector<1x8x128xf32> to vector<8x128xf32>
    %167 = arith.mulf %166, %158 : vector<8x128xf32>
    %168 = arith.addf %95, %167 : vector<8x128xf32>
    %c2_i32 = arith.constant 2 : i32
    %c7_i32_60 = arith.constant 7 : i32
    %169 = arith.subi %c7_i32_60, %c2_i32 : i32
    %170 = arith.index_cast %c2_i32 : i32 to index
    %c0_61 = arith.constant 0 : index
    %c0_62 = arith.constant 0 : index
    %171 = vector.load %arg13[%170, %c0_61, %c0_62] : memref<8x8x512xf32, #tpu.memory_space<vmem>>, vector<1x8x512xf32>
    %172 = vector.shape_cast %171 : vector<1x8x512xf32> to vector<8x512xf32>
    %c0_63 = arith.constant 0 : index
    %c0_64 = arith.constant 0 : index
    %173 = vector.load %arg4[%c0_63, %c0_64] : memref<128x512xf32, #tpu.memory_space<vmem>>, vector<128x512xf32>
    %cst_65 = arith.constant dense<0.000000e+00> : vector<8x512xf32>
    %174 = tpu.matmul %133, %173, %cst_65 {dimension_numbers = #tpu.dot_dimension_numbers<[1], [0], [0], [1], [0, 0, 1, 1], [], []>} : vector<8x128xf32>, vector<128x512xf32>, vector<8x512xf32> -> vector<8x512xf32>
    %175 = arith.addf %172, %174 : vector<8x512xf32>
    %176 = arith.index_cast %169 : i32 to index
    %c0_66 = arith.constant 0 : index
    %c0_67 = arith.constant 0 : index
    %177 = vector.load %arg14[%176, %c0_66, %c0_67] : memref<8x8x512xf32, #tpu.memory_space<vmem>>, vector<1x8x512xf32>
    %178 = vector.shape_cast %177 : vector<1x8x512xf32> to vector<8x512xf32>
    %c0_68 = arith.constant 0 : index
    %c0_69 = arith.constant 0 : index
    %179 = vector.load %arg5[%c0_68, %c0_69] : memref<128x512xf32, #tpu.memory_space<vmem>>, vector<128x512xf32>
    %cst_70 = arith.constant dense<0.000000e+00> : vector<8x512xf32>
    %180 = tpu.matmul %158, %179, %cst_70 {dimension_numbers = #tpu.dot_dimension_numbers<[1], [0], [0], [1], [0, 0, 1, 1], [], []>} : vector<8x128xf32>, vector<128x512xf32>, vector<8x512xf32> -> vector<8x512xf32>
    %181 = arith.addf %178, %180 : vector<8x512xf32>
    %182 = vector.extract_strided_slice %175 {offsets = [0, 0], sizes = [8, 128], strides = [1, 1]} : vector<8x512xf32> to vector<8x128xf32>
    %183 = arith.negf %182 : vector<8x128xf32>
    %184 = math.exp %183 : vector<8x128xf32>
    %cst_71 = arith.constant 1.000000e+00 : f32
    %185 = vector.broadcast %cst_71 : f32 to vector<8x128xf32>
    %186 = arith.addf %185, %184 : vector<8x128xf32>
    %187 = arith.divf %185, %186 : vector<8x128xf32>
    %188 = vector.extract_strided_slice %175 {offsets = [0, 128], sizes = [8, 128], strides = [1, 1]} : vector<8x512xf32> to vector<8x128xf32>
    %189 = arith.negf %188 : vector<8x128xf32>
    %190 = math.exp %189 : vector<8x128xf32>
    %cst_72 = arith.constant 1.000000e+00 : f32
    %191 = vector.broadcast %cst_72 : f32 to vector<8x128xf32>
    %192 = arith.addf %191, %190 : vector<8x128xf32>
    %193 = arith.divf %191, %192 : vector<8x128xf32>
    %194 = vector.extract_strided_slice %175 {offsets = [0, 256], sizes = [8, 128], strides = [1, 1]} : vector<8x512xf32> to vector<8x128xf32>
    %195 = math.tanh %194 : vector<8x128xf32>
    %196 = vector.extract_strided_slice %175 {offsets = [0, 384], sizes = [8, 128], strides = [1, 1]} : vector<8x512xf32> to vector<8x128xf32>
    %197 = arith.negf %196 : vector<8x128xf32>
    %198 = math.exp %197 : vector<8x128xf32>
    %cst_73 = arith.constant 1.000000e+00 : f32
    %199 = vector.broadcast %cst_73 : f32 to vector<8x128xf32>
    %200 = arith.addf %199, %198 : vector<8x128xf32>
    %201 = arith.divf %199, %200 : vector<8x128xf32>
    %202 = arith.mulf %193, %131 : vector<8x128xf32>
    %203 = arith.mulf %187, %195 : vector<8x128xf32>
    %204 = arith.addf %202, %203 : vector<8x128xf32>
    %205 = math.tanh %204 : vector<8x128xf32>
    %206 = arith.mulf %201, %205 : vector<8x128xf32>
    %207 = vector.extract_strided_slice %181 {offsets = [0, 0], sizes = [8, 128], strides = [1, 1]} : vector<8x512xf32> to vector<8x128xf32>
    %208 = arith.negf %207 : vector<8x128xf32>
    %209 = math.exp %208 : vector<8x128xf32>
    %cst_74 = arith.constant 1.000000e+00 : f32
    %210 = vector.broadcast %cst_74 : f32 to vector<8x128xf32>
    %211 = arith.addf %210, %209 : vector<8x128xf32>
    %212 = arith.divf %210, %211 : vector<8x128xf32>
    %213 = vector.extract_strided_slice %181 {offsets = [0, 128], sizes = [8, 128], strides = [1, 1]} : vector<8x512xf32> to vector<8x128xf32>
    %214 = arith.negf %213 : vector<8x128xf32>
    %215 = math.exp %214 : vector<8x128xf32>
    %cst_75 = arith.constant 1.000000e+00 : f32
    %216 = vector.broadcast %cst_75 : f32 to vector<8x128xf32>
    %217 = arith.addf %216, %215 : vector<8x128xf32>
    %218 = arith.divf %216, %217 : vector<8x128xf32>
    %219 = vector.extract_strided_slice %181 {offsets = [0, 256], sizes = [8, 128], strides = [1, 1]} : vector<8x512xf32> to vector<8x128xf32>
    %220 = math.tanh %219 : vector<8x128xf32>
    %221 = vector.extract_strided_slice %181 {offsets = [0, 384], sizes = [8, 128], strides = [1, 1]} : vector<8x512xf32> to vector<8x128xf32>
    %222 = arith.negf %221 : vector<8x128xf32>
    %223 = math.exp %222 : vector<8x128xf32>
    %cst_76 = arith.constant 1.000000e+00 : f32
    %224 = vector.broadcast %cst_76 : f32 to vector<8x128xf32>
    %225 = arith.addf %224, %223 : vector<8x128xf32>
    %226 = arith.divf %224, %225 : vector<8x128xf32>
    %227 = arith.mulf %218, %156 : vector<8x128xf32>
    %228 = arith.mulf %212, %220 : vector<8x128xf32>
    %229 = arith.addf %227, %228 : vector<8x128xf32>
    %230 = math.tanh %229 : vector<8x128xf32>
    %231 = arith.mulf %226, %230 : vector<8x128xf32>
    %232 = arith.index_cast %c2_i32 : i32 to index
    %c0_77 = arith.constant 0 : index
    %c0_78 = arith.constant 0 : index
    %233 = vector.load %arg15[%232, %c0_77, %c0_78] : memref<8x8x128xf32, #tpu.memory_space<vmem>>, vector<1x8x128xf32>
    %234 = vector.shape_cast %233 : vector<1x8x128xf32> to vector<8x128xf32>
    %235 = arith.mulf %234, %206 : vector<8x128xf32>
    %236 = arith.addf %163, %235 : vector<8x128xf32>
    %237 = arith.index_cast %169 : i32 to index
    %c0_79 = arith.constant 0 : index
    %c0_80 = arith.constant 0 : index
    %238 = vector.load %arg15[%237, %c0_79, %c0_80] : memref<8x8x128xf32, #tpu.memory_space<vmem>>, vector<1x8x128xf32>
    %239 = vector.shape_cast %238 : vector<1x8x128xf32> to vector<8x128xf32>
    %240 = arith.mulf %239, %231 : vector<8x128xf32>
    %241 = arith.addf %168, %240 : vector<8x128xf32>
    %c3_i32 = arith.constant 3 : i32
    %c7_i32_81 = arith.constant 7 : i32
    %242 = arith.subi %c7_i32_81, %c3_i32 : i32
    %243 = arith.index_cast %c3_i32 : i32 to index
    %c0_82 = arith.constant 0 : index
    %c0_83 = arith.constant 0 : index
    %244 = vector.load %arg13[%243, %c0_82, %c0_83] : memref<8x8x512xf32, #tpu.memory_space<vmem>>, vector<1x8x512xf32>
    %245 = vector.shape_cast %244 : vector<1x8x512xf32> to vector<8x512xf32>
    %c0_84 = arith.constant 0 : index
    %c0_85 = arith.constant 0 : index
    %246 = vector.load %arg4[%c0_84, %c0_85] : memref<128x512xf32, #tpu.memory_space<vmem>>, vector<128x512xf32>
    %cst_86 = arith.constant dense<0.000000e+00> : vector<8x512xf32>
    %247 = tpu.matmul %206, %246, %cst_86 {dimension_numbers = #tpu.dot_dimension_numbers<[1], [0], [0], [1], [0, 0, 1, 1], [], []>} : vector<8x128xf32>, vector<128x512xf32>, vector<8x512xf32> -> vector<8x512xf32>
    %248 = arith.addf %245, %247 : vector<8x512xf32>
    %249 = arith.index_cast %242 : i32 to index
    %c0_87 = arith.constant 0 : index
    %c0_88 = arith.constant 0 : index
    %250 = vector.load %arg14[%249, %c0_87, %c0_88] : memref<8x8x512xf32, #tpu.memory_space<vmem>>, vector<1x8x512xf32>
    %251 = vector.shape_cast %250 : vector<1x8x512xf32> to vector<8x512xf32>
    %c0_89 = arith.constant 0 : index
    %c0_90 = arith.constant 0 : index
    %252 = vector.load %arg5[%c0_89, %c0_90] : memref<128x512xf32, #tpu.memory_space<vmem>>, vector<128x512xf32>
    %cst_91 = arith.constant dense<0.000000e+00> : vector<8x512xf32>
    %253 = tpu.matmul %231, %252, %cst_91 {dimension_numbers = #tpu.dot_dimension_numbers<[1], [0], [0], [1], [0, 0, 1, 1], [], []>} : vector<8x128xf32>, vector<128x512xf32>, vector<8x512xf32> -> vector<8x512xf32>
    %254 = arith.addf %251, %253 : vector<8x512xf32>
    %255 = vector.extract_strided_slice %248 {offsets = [0, 0], sizes = [8, 128], strides = [1, 1]} : vector<8x512xf32> to vector<8x128xf32>
    %256 = arith.negf %255 : vector<8x128xf32>
    %257 = math.exp %256 : vector<8x128xf32>
    %cst_92 = arith.constant 1.000000e+00 : f32
    %258 = vector.broadcast %cst_92 : f32 to vector<8x128xf32>
    %259 = arith.addf %258, %257 : vector<8x128xf32>
    %260 = arith.divf %258, %259 : vector<8x128xf32>
    %261 = vector.extract_strided_slice %248 {offsets = [0, 128], sizes = [8, 128], strides = [1, 1]} : vector<8x512xf32> to vector<8x128xf32>
    %262 = arith.negf %261 : vector<8x128xf32>
    %263 = math.exp %262 : vector<8x128xf32>
    %cst_93 = arith.constant 1.000000e+00 : f32
    %264 = vector.broadcast %cst_93 : f32 to vector<8x128xf32>
    %265 = arith.addf %264, %263 : vector<8x128xf32>
    %266 = arith.divf %264, %265 : vector<8x128xf32>
    %267 = vector.extract_strided_slice %248 {offsets = [0, 256], sizes = [8, 128], strides = [1, 1]} : vector<8x512xf32> to vector<8x128xf32>
    %268 = math.tanh %267 : vector<8x128xf32>
    %269 = vector.extract_strided_slice %248 {offsets = [0, 384], sizes = [8, 128], strides = [1, 1]} : vector<8x512xf32> to vector<8x128xf32>
    %270 = arith.negf %269 : vector<8x128xf32>
    %271 = math.exp %270 : vector<8x128xf32>
    %cst_94 = arith.constant 1.000000e+00 : f32
    %272 = vector.broadcast %cst_94 : f32 to vector<8x128xf32>
    %273 = arith.addf %272, %271 : vector<8x128xf32>
    %274 = arith.divf %272, %273 : vector<8x128xf32>
    %275 = arith.mulf %266, %204 : vector<8x128xf32>
    %276 = arith.mulf %260, %268 : vector<8x128xf32>
    %277 = arith.addf %275, %276 : vector<8x128xf32>
    %278 = math.tanh %277 : vector<8x128xf32>
    %279 = arith.mulf %274, %278 : vector<8x128xf32>
    %280 = vector.extract_strided_slice %254 {offsets = [0, 0], sizes = [8, 128], strides = [1, 1]} : vector<8x512xf32> to vector<8x128xf32>
    %281 = arith.negf %280 : vector<8x128xf32>
    %282 = math.exp %281 : vector<8x128xf32>
    %cst_95 = arith.constant 1.000000e+00 : f32
    %283 = vector.broadcast %cst_95 : f32 to vector<8x128xf32>
    %284 = arith.addf %283, %282 : vector<8x128xf32>
    %285 = arith.divf %283, %284 : vector<8x128xf32>
    %286 = vector.extract_strided_slice %254 {offsets = [0, 128], sizes = [8, 128], strides = [1, 1]} : vector<8x512xf32> to vector<8x128xf32>
    %287 = arith.negf %286 : vector<8x128xf32>
    %288 = math.exp %287 : vector<8x128xf32>
    %cst_96 = arith.constant 1.000000e+00 : f32
    %289 = vector.broadcast %cst_96 : f32 to vector<8x128xf32>
    %290 = arith.addf %289, %288 : vector<8x128xf32>
    %291 = arith.divf %289, %290 : vector<8x128xf32>
    %292 = vector.extract_strided_slice %254 {offsets = [0, 256], sizes = [8, 128], strides = [1, 1]} : vector<8x512xf32> to vector<8x128xf32>
    %293 = math.tanh %292 : vector<8x128xf32>
    %294 = vector.extract_strided_slice %254 {offsets = [0, 384], sizes = [8, 128], strides = [1, 1]} : vector<8x512xf32> to vector<8x128xf32>
    %295 = arith.negf %294 : vector<8x128xf32>
    %296 = math.exp %295 : vector<8x128xf32>
    %cst_97 = arith.constant 1.000000e+00 : f32
    %297 = vector.broadcast %cst_97 : f32 to vector<8x128xf32>
    %298 = arith.addf %297, %296 : vector<8x128xf32>
    %299 = arith.divf %297, %298 : vector<8x128xf32>
    %300 = arith.mulf %291, %229 : vector<8x128xf32>
    %301 = arith.mulf %285, %293 : vector<8x128xf32>
    %302 = arith.addf %300, %301 : vector<8x128xf32>
    %303 = math.tanh %302 : vector<8x128xf32>
    %304 = arith.mulf %299, %303 : vector<8x128xf32>
    %305 = arith.index_cast %c3_i32 : i32 to index
    %c0_98 = arith.constant 0 : index
    %c0_99 = arith.constant 0 : index
    %306 = vector.load %arg15[%305, %c0_98, %c0_99] : memref<8x8x128xf32, #tpu.memory_space<vmem>>, vector<1x8x128xf32>
    %307 = vector.shape_cast %306 : vector<1x8x128xf32> to vector<8x128xf32>
    %308 = arith.mulf %307, %279 : vector<8x128xf32>
    %309 = arith.addf %236, %308 : vector<8x128xf32>
    %310 = arith.index_cast %242 : i32 to index
    %c0_100 = arith.constant 0 : index
    %c0_101 = arith.constant 0 : index
    %311 = vector.load %arg15[%310, %c0_100, %c0_101] : memref<8x8x128xf32, #tpu.memory_space<vmem>>, vector<1x8x128xf32>
    %312 = vector.shape_cast %311 : vector<1x8x128xf32> to vector<8x128xf32>
    %313 = arith.mulf %312, %304 : vector<8x128xf32>
    %314 = arith.addf %241, %313 : vector<8x128xf32>
    %c4_i32 = arith.constant 4 : i32
    %c7_i32_102 = arith.constant 7 : i32
    %315 = arith.subi %c7_i32_102, %c4_i32 : i32
    %316 = arith.index_cast %c4_i32 : i32 to index
    %c0_103 = arith.constant 0 : index
    %c0_104 = arith.constant 0 : index
    %317 = vector.load %arg13[%316, %c0_103, %c0_104] : memref<8x8x512xf32, #tpu.memory_space<vmem>>, vector<1x8x512xf32>
    %318 = vector.shape_cast %317 : vector<1x8x512xf32> to vector<8x512xf32>
    %c0_105 = arith.constant 0 : index
    %c0_106 = arith.constant 0 : index
    %319 = vector.load %arg4[%c0_105, %c0_106] : memref<128x512xf32, #tpu.memory_space<vmem>>, vector<128x512xf32>
    %cst_107 = arith.constant dense<0.000000e+00> : vector<8x512xf32>
    %320 = tpu.matmul %279, %319, %cst_107 {dimension_numbers = #tpu.dot_dimension_numbers<[1], [0], [0], [1], [0, 0, 1, 1], [], []>} : vector<8x128xf32>, vector<128x512xf32>, vector<8x512xf32> -> vector<8x512xf32>
    %321 = arith.addf %318, %320 : vector<8x512xf32>
    %322 = arith.index_cast %315 : i32 to index
    %c0_108 = arith.constant 0 : index
    %c0_109 = arith.constant 0 : index
    %323 = vector.load %arg14[%322, %c0_108, %c0_109] : memref<8x8x512xf32, #tpu.memory_space<vmem>>, vector<1x8x512xf32>
    %324 = vector.shape_cast %323 : vector<1x8x512xf32> to vector<8x512xf32>
    %c0_110 = arith.constant 0 : index
    %c0_111 = arith.constant 0 : index
    %325 = vector.load %arg5[%c0_110, %c0_111] : memref<128x512xf32, #tpu.memory_space<vmem>>, vector<128x512xf32>
    %cst_112 = arith.constant dense<0.000000e+00> : vector<8x512xf32>
    %326 = tpu.matmul %304, %325, %cst_112 {dimension_numbers = #tpu.dot_dimension_numbers<[1], [0], [0], [1], [0, 0, 1, 1], [], []>} : vector<8x128xf32>, vector<128x512xf32>, vector<8x512xf32> -> vector<8x512xf32>
    %327 = arith.addf %324, %326 : vector<8x512xf32>
    %328 = vector.extract_strided_slice %321 {offsets = [0, 0], sizes = [8, 128], strides = [1, 1]} : vector<8x512xf32> to vector<8x128xf32>
    %329 = arith.negf %328 : vector<8x128xf32>
    %330 = math.exp %329 : vector<8x128xf32>
    %cst_113 = arith.constant 1.000000e+00 : f32
    %331 = vector.broadcast %cst_113 : f32 to vector<8x128xf32>
    %332 = arith.addf %331, %330 : vector<8x128xf32>
    %333 = arith.divf %331, %332 : vector<8x128xf32>
    %334 = vector.extract_strided_slice %321 {offsets = [0, 128], sizes = [8, 128], strides = [1, 1]} : vector<8x512xf32> to vector<8x128xf32>
    %335 = arith.negf %334 : vector<8x128xf32>
    %336 = math.exp %335 : vector<8x128xf32>
    %cst_114 = arith.constant 1.000000e+00 : f32
    %337 = vector.broadcast %cst_114 : f32 to vector<8x128xf32>
    %338 = arith.addf %337, %336 : vector<8x128xf32>
    %339 = arith.divf %337, %338 : vector<8x128xf32>
    %340 = vector.extract_strided_slice %321 {offsets = [0, 256], sizes = [8, 128], strides = [1, 1]} : vector<8x512xf32> to vector<8x128xf32>
    %341 = math.tanh %340 : vector<8x128xf32>
    %342 = vector.extract_strided_slice %321 {offsets = [0, 384], sizes = [8, 128], strides = [1, 1]} : vector<8x512xf32> to vector<8x128xf32>
    %343 = arith.negf %342 : vector<8x128xf32>
    %344 = math.exp %343 : vector<8x128xf32>
    %cst_115 = arith.constant 1.000000e+00 : f32
    %345 = vector.broadcast %cst_115 : f32 to vector<8x128xf32>
    %346 = arith.addf %345, %344 : vector<8x128xf32>
    %347 = arith.divf %345, %346 : vector<8x128xf32>
    %348 = arith.mulf %339, %277 : vector<8x128xf32>
    %349 = arith.mulf %333, %341 : vector<8x128xf32>
    %350 = arith.addf %348, %349 : vector<8x128xf32>
    %351 = math.tanh %350 : vector<8x128xf32>
    %352 = arith.mulf %347, %351 : vector<8x128xf32>
    %353 = vector.extract_strided_slice %327 {offsets = [0, 0], sizes = [8, 128], strides = [1, 1]} : vector<8x512xf32> to vector<8x128xf32>
    %354 = arith.negf %353 : vector<8x128xf32>
    %355 = math.exp %354 : vector<8x128xf32>
    %cst_116 = arith.constant 1.000000e+00 : f32
    %356 = vector.broadcast %cst_116 : f32 to vector<8x128xf32>
    %357 = arith.addf %356, %355 : vector<8x128xf32>
    %358 = arith.divf %356, %357 : vector<8x128xf32>
    %359 = vector.extract_strided_slice %327 {offsets = [0, 128], sizes = [8, 128], strides = [1, 1]} : vector<8x512xf32> to vector<8x128xf32>
    %360 = arith.negf %359 : vector<8x128xf32>
    %361 = math.exp %360 : vector<8x128xf32>
    %cst_117 = arith.constant 1.000000e+00 : f32
    %362 = vector.broadcast %cst_117 : f32 to vector<8x128xf32>
    %363 = arith.addf %362, %361 : vector<8x128xf32>
    %364 = arith.divf %362, %363 : vector<8x128xf32>
    %365 = vector.extract_strided_slice %327 {offsets = [0, 256], sizes = [8, 128], strides = [1, 1]} : vector<8x512xf32> to vector<8x128xf32>
    %366 = math.tanh %365 : vector<8x128xf32>
    %367 = vector.extract_strided_slice %327 {offsets = [0, 384], sizes = [8, 128], strides = [1, 1]} : vector<8x512xf32> to vector<8x128xf32>
    %368 = arith.negf %367 : vector<8x128xf32>
    %369 = math.exp %368 : vector<8x128xf32>
    %cst_118 = arith.constant 1.000000e+00 : f32
    %370 = vector.broadcast %cst_118 : f32 to vector<8x128xf32>
    %371 = arith.addf %370, %369 : vector<8x128xf32>
    %372 = arith.divf %370, %371 : vector<8x128xf32>
    %373 = arith.mulf %364, %302 : vector<8x128xf32>
    %374 = arith.mulf %358, %366 : vector<8x128xf32>
    %375 = arith.addf %373, %374 : vector<8x128xf32>
    %376 = math.tanh %375 : vector<8x128xf32>
    %377 = arith.mulf %372, %376 : vector<8x128xf32>
    %378 = arith.index_cast %c4_i32 : i32 to index
    %c0_119 = arith.constant 0 : index
    %c0_120 = arith.constant 0 : index
    %379 = vector.load %arg15[%378, %c0_119, %c0_120] : memref<8x8x128xf32, #tpu.memory_space<vmem>>, vector<1x8x128xf32>
    %380 = vector.shape_cast %379 : vector<1x8x128xf32> to vector<8x128xf32>
    %381 = arith.mulf %380, %352 : vector<8x128xf32>
    %382 = arith.addf %309, %381 : vector<8x128xf32>
    %383 = arith.index_cast %315 : i32 to index
    %c0_121 = arith.constant 0 : index
    %c0_122 = arith.constant 0 : index
    %384 = vector.load %arg15[%383, %c0_121, %c0_122] : memref<8x8x128xf32, #tpu.memory_space<vmem>>, vector<1x8x128xf32>
    %385 = vector.shape_cast %384 : vector<1x8x128xf32> to vector<8x128xf32>
    %386 = arith.mulf %385, %377 : vector<8x128xf32>
    %387 = arith.addf %314, %386 : vector<8x128xf32>
    %c5_i32 = arith.constant 5 : i32
    %c7_i32_123 = arith.constant 7 : i32
    %388 = arith.subi %c7_i32_123, %c5_i32 : i32
    %389 = arith.index_cast %c5_i32 : i32 to index
    %c0_124 = arith.constant 0 : index
    %c0_125 = arith.constant 0 : index
    %390 = vector.load %arg13[%389, %c0_124, %c0_125] : memref<8x8x512xf32, #tpu.memory_space<vmem>>, vector<1x8x512xf32>
    %391 = vector.shape_cast %390 : vector<1x8x512xf32> to vector<8x512xf32>
    %c0_126 = arith.constant 0 : index
    %c0_127 = arith.constant 0 : index
    %392 = vector.load %arg4[%c0_126, %c0_127] : memref<128x512xf32, #tpu.memory_space<vmem>>, vector<128x512xf32>
    %cst_128 = arith.constant dense<0.000000e+00> : vector<8x512xf32>
    %393 = tpu.matmul %352, %392, %cst_128 {dimension_numbers = #tpu.dot_dimension_numbers<[1], [0], [0], [1], [0, 0, 1, 1], [], []>} : vector<8x128xf32>, vector<128x512xf32>, vector<8x512xf32> -> vector<8x512xf32>
    %394 = arith.addf %391, %393 : vector<8x512xf32>
    %395 = arith.index_cast %388 : i32 to index
    %c0_129 = arith.constant 0 : index
    %c0_130 = arith.constant 0 : index
    %396 = vector.load %arg14[%395, %c0_129, %c0_130] : memref<8x8x512xf32, #tpu.memory_space<vmem>>, vector<1x8x512xf32>
    %397 = vector.shape_cast %396 : vector<1x8x512xf32> to vector<8x512xf32>
    %c0_131 = arith.constant 0 : index
    %c0_132 = arith.constant 0 : index
    %398 = vector.load %arg5[%c0_131, %c0_132] : memref<128x512xf32, #tpu.memory_space<vmem>>, vector<128x512xf32>
    %cst_133 = arith.constant dense<0.000000e+00> : vector<8x512xf32>
    %399 = tpu.matmul %377, %398, %cst_133 {dimension_numbers = #tpu.dot_dimension_numbers<[1], [0], [0], [1], [0, 0, 1, 1], [], []>} : vector<8x128xf32>, vector<128x512xf32>, vector<8x512xf32> -> vector<8x512xf32>
    %400 = arith.addf %397, %399 : vector<8x512xf32>
    %401 = vector.extract_strided_slice %394 {offsets = [0, 0], sizes = [8, 128], strides = [1, 1]} : vector<8x512xf32> to vector<8x128xf32>
    %402 = arith.negf %401 : vector<8x128xf32>
    %403 = math.exp %402 : vector<8x128xf32>
    %cst_134 = arith.constant 1.000000e+00 : f32
    %404 = vector.broadcast %cst_134 : f32 to vector<8x128xf32>
    %405 = arith.addf %404, %403 : vector<8x128xf32>
    %406 = arith.divf %404, %405 : vector<8x128xf32>
    %407 = vector.extract_strided_slice %394 {offsets = [0, 128], sizes = [8, 128], strides = [1, 1]} : vector<8x512xf32> to vector<8x128xf32>
    %408 = arith.negf %407 : vector<8x128xf32>
    %409 = math.exp %408 : vector<8x128xf32>
    %cst_135 = arith.constant 1.000000e+00 : f32
    %410 = vector.broadcast %cst_135 : f32 to vector<8x128xf32>
    %411 = arith.addf %410, %409 : vector<8x128xf32>
    %412 = arith.divf %410, %411 : vector<8x128xf32>
    %413 = vector.extract_strided_slice %394 {offsets = [0, 256], sizes = [8, 128], strides = [1, 1]} : vector<8x512xf32> to vector<8x128xf32>
    %414 = math.tanh %413 : vector<8x128xf32>
    %415 = vector.extract_strided_slice %394 {offsets = [0, 384], sizes = [8, 128], strides = [1, 1]} : vector<8x512xf32> to vector<8x128xf32>
    %416 = arith.negf %415 : vector<8x128xf32>
    %417 = math.exp %416 : vector<8x128xf32>
    %cst_136 = arith.constant 1.000000e+00 : f32
    %418 = vector.broadcast %cst_136 : f32 to vector<8x128xf32>
    %419 = arith.addf %418, %417 : vector<8x128xf32>
    %420 = arith.divf %418, %419 : vector<8x128xf32>
    %421 = arith.mulf %412, %350 : vector<8x128xf32>
    %422 = arith.mulf %406, %414 : vector<8x128xf32>
    %423 = arith.addf %421, %422 : vector<8x128xf32>
    %424 = math.tanh %423 : vector<8x128xf32>
    %425 = arith.mulf %420, %424 : vector<8x128xf32>
    %426 = vector.extract_strided_slice %400 {offsets = [0, 0], sizes = [8, 128], strides = [1, 1]} : vector<8x512xf32> to vector<8x128xf32>
    %427 = arith.negf %426 : vector<8x128xf32>
    %428 = math.exp %427 : vector<8x128xf32>
    %cst_137 = arith.constant 1.000000e+00 : f32
    %429 = vector.broadcast %cst_137 : f32 to vector<8x128xf32>
    %430 = arith.addf %429, %428 : vector<8x128xf32>
    %431 = arith.divf %429, %430 : vector<8x128xf32>
    %432 = vector.extract_strided_slice %400 {offsets = [0, 128], sizes = [8, 128], strides = [1, 1]} : vector<8x512xf32> to vector<8x128xf32>
    %433 = arith.negf %432 : vector<8x128xf32>
    %434 = math.exp %433 : vector<8x128xf32>
    %cst_138 = arith.constant 1.000000e+00 : f32
    %435 = vector.broadcast %cst_138 : f32 to vector<8x128xf32>
    %436 = arith.addf %435, %434 : vector<8x128xf32>
    %437 = arith.divf %435, %436 : vector<8x128xf32>
    %438 = vector.extract_strided_slice %400 {offsets = [0, 256], sizes = [8, 128], strides = [1, 1]} : vector<8x512xf32> to vector<8x128xf32>
    %439 = math.tanh %438 : vector<8x128xf32>
    %440 = vector.extract_strided_slice %400 {offsets = [0, 384], sizes = [8, 128], strides = [1, 1]} : vector<8x512xf32> to vector<8x128xf32>
    %441 = arith.negf %440 : vector<8x128xf32>
    %442 = math.exp %441 : vector<8x128xf32>
    %cst_139 = arith.constant 1.000000e+00 : f32
    %443 = vector.broadcast %cst_139 : f32 to vector<8x128xf32>
    %444 = arith.addf %443, %442 : vector<8x128xf32>
    %445 = arith.divf %443, %444 : vector<8x128xf32>
    %446 = arith.mulf %437, %375 : vector<8x128xf32>
    %447 = arith.mulf %431, %439 : vector<8x128xf32>
    %448 = arith.addf %446, %447 : vector<8x128xf32>
    %449 = math.tanh %448 : vector<8x128xf32>
    %450 = arith.mulf %445, %449 : vector<8x128xf32>
    %451 = arith.index_cast %c5_i32 : i32 to index
    %c0_140 = arith.constant 0 : index
    %c0_141 = arith.constant 0 : index
    %452 = vector.load %arg15[%451, %c0_140, %c0_141] : memref<8x8x128xf32, #tpu.memory_space<vmem>>, vector<1x8x128xf32>
    %453 = vector.shape_cast %452 : vector<1x8x128xf32> to vector<8x128xf32>
    %454 = arith.mulf %453, %425 : vector<8x128xf32>
    %455 = arith.addf %382, %454 : vector<8x128xf32>
    %456 = arith.index_cast %388 : i32 to index
    %c0_142 = arith.constant 0 : index
    %c0_143 = arith.constant 0 : index
    %457 = vector.load %arg15[%456, %c0_142, %c0_143] : memref<8x8x128xf32, #tpu.memory_space<vmem>>, vector<1x8x128xf32>
    %458 = vector.shape_cast %457 : vector<1x8x128xf32> to vector<8x128xf32>
    %459 = arith.mulf %458, %450 : vector<8x128xf32>
    %460 = arith.addf %387, %459 : vector<8x128xf32>
    %c6_i32 = arith.constant 6 : i32
    %c7_i32_144 = arith.constant 7 : i32
    %461 = arith.subi %c7_i32_144, %c6_i32 : i32
    %462 = arith.index_cast %c6_i32 : i32 to index
    %c0_145 = arith.constant 0 : index
    %c0_146 = arith.constant 0 : index
    %463 = vector.load %arg13[%462, %c0_145, %c0_146] : memref<8x8x512xf32, #tpu.memory_space<vmem>>, vector<1x8x512xf32>
    %464 = vector.shape_cast %463 : vector<1x8x512xf32> to vector<8x512xf32>
    %c0_147 = arith.constant 0 : index
    %c0_148 = arith.constant 0 : index
    %465 = vector.load %arg4[%c0_147, %c0_148] : memref<128x512xf32, #tpu.memory_space<vmem>>, vector<128x512xf32>
    %cst_149 = arith.constant dense<0.000000e+00> : vector<8x512xf32>
    %466 = tpu.matmul %425, %465, %cst_149 {dimension_numbers = #tpu.dot_dimension_numbers<[1], [0], [0], [1], [0, 0, 1, 1], [], []>} : vector<8x128xf32>, vector<128x512xf32>, vector<8x512xf32> -> vector<8x512xf32>
    %467 = arith.addf %464, %466 : vector<8x512xf32>
    %468 = arith.index_cast %461 : i32 to index
    %c0_150 = arith.constant 0 : index
    %c0_151 = arith.constant 0 : index
    %469 = vector.load %arg14[%468, %c0_150, %c0_151] : memref<8x8x512xf32, #tpu.memory_space<vmem>>, vector<1x8x512xf32>
    %470 = vector.shape_cast %469 : vector<1x8x512xf32> to vector<8x512xf32>
    %c0_152 = arith.constant 0 : index
    %c0_153 = arith.constant 0 : index
    %471 = vector.load %arg5[%c0_152, %c0_153] : memref<128x512xf32, #tpu.memory_space<vmem>>, vector<128x512xf32>
    %cst_154 = arith.constant dense<0.000000e+00> : vector<8x512xf32>
    %472 = tpu.matmul %450, %471, %cst_154 {dimension_numbers = #tpu.dot_dimension_numbers<[1], [0], [0], [1], [0, 0, 1, 1], [], []>} : vector<8x128xf32>, vector<128x512xf32>, vector<8x512xf32> -> vector<8x512xf32>
    %473 = arith.addf %470, %472 : vector<8x512xf32>
    %474 = vector.extract_strided_slice %467 {offsets = [0, 0], sizes = [8, 128], strides = [1, 1]} : vector<8x512xf32> to vector<8x128xf32>
    %475 = arith.negf %474 : vector<8x128xf32>
    %476 = math.exp %475 : vector<8x128xf32>
    %cst_155 = arith.constant 1.000000e+00 : f32
    %477 = vector.broadcast %cst_155 : f32 to vector<8x128xf32>
    %478 = arith.addf %477, %476 : vector<8x128xf32>
    %479 = arith.divf %477, %478 : vector<8x128xf32>
    %480 = vector.extract_strided_slice %467 {offsets = [0, 128], sizes = [8, 128], strides = [1, 1]} : vector<8x512xf32> to vector<8x128xf32>
    %481 = arith.negf %480 : vector<8x128xf32>
    %482 = math.exp %481 : vector<8x128xf32>
    %cst_156 = arith.constant 1.000000e+00 : f32
    %483 = vector.broadcast %cst_156 : f32 to vector<8x128xf32>
    %484 = arith.addf %483, %482 : vector<8x128xf32>
    %485 = arith.divf %483, %484 : vector<8x128xf32>
    %486 = vector.extract_strided_slice %467 {offsets = [0, 256], sizes = [8, 128], strides = [1, 1]} : vector<8x512xf32> to vector<8x128xf32>
    %487 = math.tanh %486 : vector<8x128xf32>
    %488 = vector.extract_strided_slice %467 {offsets = [0, 384], sizes = [8, 128], strides = [1, 1]} : vector<8x512xf32> to vector<8x128xf32>
    %489 = arith.negf %488 : vector<8x128xf32>
    %490 = math.exp %489 : vector<8x128xf32>
    %cst_157 = arith.constant 1.000000e+00 : f32
    %491 = vector.broadcast %cst_157 : f32 to vector<8x128xf32>
    %492 = arith.addf %491, %490 : vector<8x128xf32>
    %493 = arith.divf %491, %492 : vector<8x128xf32>
    %494 = arith.mulf %485, %423 : vector<8x128xf32>
    %495 = arith.mulf %479, %487 : vector<8x128xf32>
    %496 = arith.addf %494, %495 : vector<8x128xf32>
    %497 = math.tanh %496 : vector<8x128xf32>
    %498 = arith.mulf %493, %497 : vector<8x128xf32>
    %499 = vector.extract_strided_slice %473 {offsets = [0, 0], sizes = [8, 128], strides = [1, 1]} : vector<8x512xf32> to vector<8x128xf32>
    %500 = arith.negf %499 : vector<8x128xf32>
    %501 = math.exp %500 : vector<8x128xf32>
    %cst_158 = arith.constant 1.000000e+00 : f32
    %502 = vector.broadcast %cst_158 : f32 to vector<8x128xf32>
    %503 = arith.addf %502, %501 : vector<8x128xf32>
    %504 = arith.divf %502, %503 : vector<8x128xf32>
    %505 = vector.extract_strided_slice %473 {offsets = [0, 128], sizes = [8, 128], strides = [1, 1]} : vector<8x512xf32> to vector<8x128xf32>
    %506 = arith.negf %505 : vector<8x128xf32>
    %507 = math.exp %506 : vector<8x128xf32>
    %cst_159 = arith.constant 1.000000e+00 : f32
    %508 = vector.broadcast %cst_159 : f32 to vector<8x128xf32>
    %509 = arith.addf %508, %507 : vector<8x128xf32>
    %510 = arith.divf %508, %509 : vector<8x128xf32>
    %511 = vector.extract_strided_slice %473 {offsets = [0, 256], sizes = [8, 128], strides = [1, 1]} : vector<8x512xf32> to vector<8x128xf32>
    %512 = math.tanh %511 : vector<8x128xf32>
    %513 = vector.extract_strided_slice %473 {offsets = [0, 384], sizes = [8, 128], strides = [1, 1]} : vector<8x512xf32> to vector<8x128xf32>
    %514 = arith.negf %513 : vector<8x128xf32>
    %515 = math.exp %514 : vector<8x128xf32>
    %cst_160 = arith.constant 1.000000e+00 : f32
    %516 = vector.broadcast %cst_160 : f32 to vector<8x128xf32>
    %517 = arith.addf %516, %515 : vector<8x128xf32>
    %518 = arith.divf %516, %517 : vector<8x128xf32>
    %519 = arith.mulf %510, %448 : vector<8x128xf32>
    %520 = arith.mulf %504, %512 : vector<8x128xf32>
    %521 = arith.addf %519, %520 : vector<8x128xf32>
    %522 = math.tanh %521 : vector<8x128xf32>
    %523 = arith.mulf %518, %522 : vector<8x128xf32>
    %524 = arith.index_cast %c6_i32 : i32 to index
    %c0_161 = arith.constant 0 : index
    %c0_162 = arith.constant 0 : index
    %525 = vector.load %arg15[%524, %c0_161, %c0_162] : memref<8x8x128xf32, #tpu.memory_space<vmem>>, vector<1x8x128xf32>
    %526 = vector.shape_cast %525 : vector<1x8x128xf32> to vector<8x128xf32>
    %527 = arith.mulf %526, %498 : vector<8x128xf32>
    %528 = arith.addf %455, %527 : vector<8x128xf32>
    %529 = arith.index_cast %461 : i32 to index
    %c0_163 = arith.constant 0 : index
    %c0_164 = arith.constant 0 : index
    %530 = vector.load %arg15[%529, %c0_163, %c0_164] : memref<8x8x128xf32, #tpu.memory_space<vmem>>, vector<1x8x128xf32>
    %531 = vector.shape_cast %530 : vector<1x8x128xf32> to vector<8x128xf32>
    %532 = arith.mulf %531, %523 : vector<8x128xf32>
    %533 = arith.addf %460, %532 : vector<8x128xf32>
    %c7_i32_165 = arith.constant 7 : i32
    %c7_i32_166 = arith.constant 7 : i32
    %534 = arith.subi %c7_i32_166, %c7_i32_165 : i32
    %535 = arith.index_cast %c7_i32_165 : i32 to index
    %c0_167 = arith.constant 0 : index
    %c0_168 = arith.constant 0 : index
    %536 = vector.load %arg13[%535, %c0_167, %c0_168] : memref<8x8x512xf32, #tpu.memory_space<vmem>>, vector<1x8x512xf32>
    %537 = vector.shape_cast %536 : vector<1x8x512xf32> to vector<8x512xf32>
    %c0_169 = arith.constant 0 : index
    %c0_170 = arith.constant 0 : index
    %538 = vector.load %arg4[%c0_169, %c0_170] : memref<128x512xf32, #tpu.memory_space<vmem>>, vector<128x512xf32>
    %cst_171 = arith.constant dense<0.000000e+00> : vector<8x512xf32>
    %539 = tpu.matmul %498, %538, %cst_171 {dimension_numbers = #tpu.dot_dimension_numbers<[1], [0], [0], [1], [0, 0, 1, 1], [], []>} : vector<8x128xf32>, vector<128x512xf32>, vector<8x512xf32> -> vector<8x512xf32>
    %540 = arith.addf %537, %539 : vector<8x512xf32>
    %541 = arith.index_cast %534 : i32 to index
    %c0_172 = arith.constant 0 : index
    %c0_173 = arith.constant 0 : index
    %542 = vector.load %arg14[%541, %c0_172, %c0_173] : memref<8x8x512xf32, #tpu.memory_space<vmem>>, vector<1x8x512xf32>
    %543 = vector.shape_cast %542 : vector<1x8x512xf32> to vector<8x512xf32>
    %c0_174 = arith.constant 0 : index
    %c0_175 = arith.constant 0 : index
    %544 = vector.load %arg5[%c0_174, %c0_175] : memref<128x512xf32, #tpu.memory_space<vmem>>, vector<128x512xf32>
    %cst_176 = arith.constant dense<0.000000e+00> : vector<8x512xf32>
    %545 = tpu.matmul %523, %544, %cst_176 {dimension_numbers = #tpu.dot_dimension_numbers<[1], [0], [0], [1], [0, 0, 1, 1], [], []>} : vector<8x128xf32>, vector<128x512xf32>, vector<8x512xf32> -> vector<8x512xf32>
    %546 = arith.addf %543, %545 : vector<8x512xf32>
    %547 = vector.extract_strided_slice %540 {offsets = [0, 0], sizes = [8, 128], strides = [1, 1]} : vector<8x512xf32> to vector<8x128xf32>
    %548 = arith.negf %547 : vector<8x128xf32>
    %549 = math.exp %548 : vector<8x128xf32>
    %cst_177 = arith.constant 1.000000e+00 : f32
    %550 = vector.broadcast %cst_177 : f32 to vector<8x128xf32>
    %551 = arith.addf %550, %549 : vector<8x128xf32>
    %552 = arith.divf %550, %551 : vector<8x128xf32>
    %553 = vector.extract_strided_slice %540 {offsets = [0, 128], sizes = [8, 128], strides = [1, 1]} : vector<8x512xf32> to vector<8x128xf32>
    %554 = arith.negf %553 : vector<8x128xf32>
    %555 = math.exp %554 : vector<8x128xf32>
    %cst_178 = arith.constant 1.000000e+00 : f32
    %556 = vector.broadcast %cst_178 : f32 to vector<8x128xf32>
    %557 = arith.addf %556, %555 : vector<8x128xf32>
    %558 = arith.divf %556, %557 : vector<8x128xf32>
    %559 = vector.extract_strided_slice %540 {offsets = [0, 256], sizes = [8, 128], strides = [1, 1]} : vector<8x512xf32> to vector<8x128xf32>
    %560 = math.tanh %559 : vector<8x128xf32>
    %561 = vector.extract_strided_slice %540 {offsets = [0, 384], sizes = [8, 128], strides = [1, 1]} : vector<8x512xf32> to vector<8x128xf32>
    %562 = arith.negf %561 : vector<8x128xf32>
    %563 = math.exp %562 : vector<8x128xf32>
    %cst_179 = arith.constant 1.000000e+00 : f32
    %564 = vector.broadcast %cst_179 : f32 to vector<8x128xf32>
    %565 = arith.addf %564, %563 : vector<8x128xf32>
    %566 = arith.divf %564, %565 : vector<8x128xf32>
    %567 = arith.mulf %558, %496 : vector<8x128xf32>
    %568 = arith.mulf %552, %560 : vector<8x128xf32>
    %569 = arith.addf %567, %568 : vector<8x128xf32>
    %570 = math.tanh %569 : vector<8x128xf32>
    %571 = arith.mulf %566, %570 : vector<8x128xf32>
    %572 = vector.extract_strided_slice %546 {offsets = [0, 0], sizes = [8, 128], strides = [1, 1]} : vector<8x512xf32> to vector<8x128xf32>
    %573 = arith.negf %572 : vector<8x128xf32>
    %574 = math.exp %573 : vector<8x128xf32>
    %cst_180 = arith.constant 1.000000e+00 : f32
    %575 = vector.broadcast %cst_180 : f32 to vector<8x128xf32>
    %576 = arith.addf %575, %574 : vector<8x128xf32>
    %577 = arith.divf %575, %576 : vector<8x128xf32>
    %578 = vector.extract_strided_slice %546 {offsets = [0, 128], sizes = [8, 128], strides = [1, 1]} : vector<8x512xf32> to vector<8x128xf32>
    %579 = arith.negf %578 : vector<8x128xf32>
    %580 = math.exp %579 : vector<8x128xf32>
    %cst_181 = arith.constant 1.000000e+00 : f32
    %581 = vector.broadcast %cst_181 : f32 to vector<8x128xf32>
    %582 = arith.addf %581, %580 : vector<8x128xf32>
    %583 = arith.divf %581, %582 : vector<8x128xf32>
    %584 = vector.extract_strided_slice %546 {offsets = [0, 256], sizes = [8, 128], strides = [1, 1]} : vector<8x512xf32> to vector<8x128xf32>
    %585 = math.tanh %584 : vector<8x128xf32>
    %586 = vector.extract_strided_slice %546 {offsets = [0, 384], sizes = [8, 128], strides = [1, 1]} : vector<8x512xf32> to vector<8x128xf32>
    %587 = arith.negf %586 : vector<8x128xf32>
    %588 = math.exp %587 : vector<8x128xf32>
    %cst_182 = arith.constant 1.000000e+00 : f32
    %589 = vector.broadcast %cst_182 : f32 to vector<8x128xf32>
    %590 = arith.addf %589, %588 : vector<8x128xf32>
    %591 = arith.divf %589, %590 : vector<8x128xf32>
    %592 = arith.mulf %583, %521 : vector<8x128xf32>
    %593 = arith.mulf %577, %585 : vector<8x128xf32>
    %594 = arith.addf %592, %593 : vector<8x128xf32>
    %595 = math.tanh %594 : vector<8x128xf32>
    %596 = arith.mulf %591, %595 : vector<8x128xf32>
    %597 = arith.index_cast %c7_i32_165 : i32 to index
    %c0_183 = arith.constant 0 : index
    %c0_184 = arith.constant 0 : index
    %598 = vector.load %arg15[%597, %c0_183, %c0_184] : memref<8x8x128xf32, #tpu.memory_space<vmem>>, vector<1x8x128xf32>
    %599 = vector.shape_cast %598 : vector<1x8x128xf32> to vector<8x128xf32>
    %600 = arith.mulf %599, %571 : vector<8x128xf32>
    %601 = arith.addf %528, %600 : vector<8x128xf32>
    %602 = arith.index_cast %534 : i32 to index
    %c0_185 = arith.constant 0 : index
    %c0_186 = arith.constant 0 : index
    %603 = vector.load %arg15[%602, %c0_185, %c0_186] : memref<8x8x128xf32, #tpu.memory_space<vmem>>, vector<1x8x128xf32>
    %604 = vector.shape_cast %603 : vector<1x8x128xf32> to vector<8x128xf32>
    %605 = arith.mulf %604, %596 : vector<8x128xf32>
    %606 = arith.addf %533, %605 : vector<8x128xf32>
    %c8_i32 = arith.constant 8 : i32
    %c0_187 = arith.constant 0 : index
    %c0_188 = arith.constant 0 : index
    %607 = vector.load %arg7[%c0_187, %c0_188] : memref<128x128xf32, #tpu.memory_space<vmem>>, vector<128x128xf32>
    %cst_189 = arith.constant dense<0.000000e+00> : vector<8x128xf32>
    %608 = tpu.matmul %601, %607, %cst_189 {dimension_numbers = #tpu.dot_dimension_numbers<[1], [0], [0], [1], [0, 0, 1, 1], [], []>} : vector<8x128xf32>, vector<128x128xf32>, vector<8x128xf32> -> vector<8x128xf32>
    %c0_190 = arith.constant 0 : index
    %c0_191 = arith.constant 0 : index
    %609 = vector.load %arg8[%c0_190, %c0_191] : memref<128x128xf32, #tpu.memory_space<vmem>>, vector<128x128xf32>
    %cst_192 = arith.constant dense<0.000000e+00> : vector<8x128xf32>
    %610 = tpu.matmul %606, %609, %cst_192 {dimension_numbers = #tpu.dot_dimension_numbers<[1], [0], [0], [1], [0, 0, 1, 1], [], []>} : vector<8x128xf32>, vector<128x128xf32>, vector<8x128xf32> -> vector<8x128xf32>
    %611 = arith.addf %608, %610 : vector<8x128xf32>
    %c0_193 = arith.constant 0 : index
    %c0_194 = arith.constant 0 : index
    %612 = vector.load %arg9[%c0_193, %c0_194] : memref<1x128xf32, #tpu.memory_space<vmem>>, vector<1x128xf32>
    %613 = vector.broadcast %612 : vector<1x128xf32> to vector<8x128xf32>
    %614 = arith.addf %611, %613 : vector<8x128xf32>
    %cst_195 = arith.constant 0.000000e+00 : f32
    %615 = vector.broadcast %cst_195 : f32 to vector<8x128xf32>
    %616 = arith.maximumf %614, %615 : vector<8x128xf32>
    %c0_196 = arith.constant 0 : index
    %c0_197 = arith.constant 0 : index
    %617 = vector.load %arg10[%c0_196, %c0_197] : memref<128x128xf32, #tpu.memory_space<vmem>>, vector<128x128xf32>
    %cst_198 = arith.constant dense<0.000000e+00> : vector<8x128xf32>
    %618 = tpu.matmul %616, %617, %cst_198 {dimension_numbers = #tpu.dot_dimension_numbers<[1], [0], [0], [1], [0, 0, 1, 1], [], []>} : vector<8x128xf32>, vector<128x128xf32>, vector<8x128xf32> -> vector<8x128xf32>
    %c0_199 = arith.constant 0 : index
    %c0_200 = arith.constant 0 : index
    %619 = vector.load %arg11[%c0_199, %c0_200] : memref<1x128xf32, #tpu.memory_space<vmem>>, vector<1x128xf32>
    %620 = vector.broadcast %619 : vector<1x128xf32> to vector<8x128xf32>
    %621 = arith.addf %618, %620 : vector<8x128xf32>
    %c0_201 = arith.constant 0 : index
    %c0_202 = arith.constant 0 : index
    %622 = vector.load %arg12[%c0_201, %c0_202] : memref<8x128xf32, #tpu.memory_space<vmem>>, vector<8x128xf32>
    tpu.vector_store %arg12[%c0_201, %c0_202], %621 {strides = array<i32>} : memref<8x128xf32, #tpu.memory_space<vmem>>, vector<8x128xf32>,
    return
  }
  func.func @transform_0(%arg0: i32) -> (i32, i32, i32) {
    %c0_i32 = arith.constant 0 : i32
    %c0_i32_0 = arith.constant 0 : i32
    %c0_i32_1 = arith.constant 0 : i32
    return %c0_i32, %arg0, %c0_i32_0 : i32, i32, i32
  }
  func.func @transform_1(%arg0: i32) -> (i32, i32) {
    %c0_i32 = arith.constant 0 : i32
    %c0_i32_0 = arith.constant 0 : i32
    return %arg0, %c0_i32 : i32, i32
  }
  func.func @transform_2(%arg0: i32) -> (i32, i32) {
    %c0_i32 = arith.constant 0 : i32
    %c0_i32_0 = arith.constant 0 : i32
    %c0_i32_1 = arith.constant 0 : i32
    return %c0_i32, %c0_i32_0 : i32, i32
  }
  func.func @transform_3(%arg0: i32) -> (i32, i32) {
    %c0_i32 = arith.constant 0 : i32
    %c0_i32_0 = arith.constant 0 : i32
    %c0_i32_1 = arith.constant 0 : i32
    return %c0_i32, %c0_i32_0 : i32, i32
  }
  func.func @transform_4(%arg0: i32) -> (i32, i32) {
    %c0_i32 = arith.constant 0 : i32
    %c0_i32_0 = arith.constant 0 : i32
    %c0_i32_1 = arith.constant 0 : i32
    return %c0_i32, %c0_i32_0 : i32, i32
  }
  func.func @transform_5(%arg0: i32) -> (i32, i32) {
    %c0_i32 = arith.constant 0 : i32
    %c0_i32_0 = arith.constant 0 : i32
    %c0_i32_1 = arith.constant 0 : i32
    return %c0_i32, %c0_i32_0 : i32, i32
  }
  func.func @transform_6(%arg0: i32) -> (i32, i32) {
    %c0_i32 = arith.constant 0 : i32
    %c0_i32_0 = arith.constant 0 : i32
    %c0_i32_1 = arith.constant 0 : i32
    return %c0_i32, %c0_i32_0 : i32, i32
  }
  func.func @transform_7(%arg0: i32) -> (i32, i32) {
    %c0_i32 = arith.constant 0 : i32
    %c0_i32_0 = arith.constant 0 : i32
    %c0_i32_1 = arith.constant 0 : i32
    return %c0_i32, %c0_i32_0 : i32, i32
  }
  func.func @transform_8(%arg0: i32) -> (i32, i32) {
    %c0_i32 = arith.constant 0 : i32
    %c0_i32_0 = arith.constant 0 : i32
    %c0_i32_1 = arith.constant 0 : i32
    return %c0_i32, %c0_i32_0 : i32, i32
  }
  func.func @transform_9(%arg0: i32) -> (i32, i32) {
    %c0_i32 = arith.constant 0 : i32
    %c0_i32_0 = arith.constant 0 : i32
    %c0_i32_1 = arith.constant 0 : i32
    return %c0_i32, %c0_i32_0 : i32, i32
  }
  func.func @transform_10(%arg0: i32) -> (i32, i32) {
    %c0_i32 = arith.constant 0 : i32
    %c0_i32_0 = arith.constant 0 : i32
    %c0_i32_1 = arith.constant 0 : i32
    return %c0_i32, %c0_i32_0 : i32, i32
  }
  func.func @transform_11(%arg0: i32) -> (i32, i32) {
    %c0_i32 = arith.constant 0 : i32
    %c0_i32_0 = arith.constant 0 : i32
    return %arg0, %c0_i32 : i32, i32
  }
}

</mosaic_0001>

<llo_original>
// kernel: tpu_custom_call.1
$region0: #{tpu_custom_call.1}
  #allocation0 [shape = 'u32[]', space=smem, size = 0x4, offset = 0x4, fixed_abs, tag = 'smem constant byte address 0x4 - core index']
  #allocation1 [shape = 'u32[72,128]{1,0:T(1,128)}', space=vmem, size = 0x9000, scoped, tag = 'internal scratch']
  #allocation2 [shape = 'f32[8,8,512]{2,1,0:T(8,128)}', space=vmem, size = 0x20000, scoped, tag = 'scratch operand']
  #allocation3 [shape = 'f32[8,8,512]{2,1,0:T(8,128)}', space=vmem, size = 0x20000, scoped, tag = 'scratch operand']
  #allocation4 [shape = 'f32[8,8,128]{2,1,0:T(8,128)}', space=vmem, size = 0x8000, scoped, tag = 'scratch operand']
  %s0 = inlined_call_operand.hbm [shape: f32[8,8,16], index: 0, kind: input, shape index: {}]
  %s1 = inlined_call_operand.vmem [shape: s32[8,1], index: 1, kind: input, shape index: {}]
  %s2 = inlined_call_operand.hbm [shape: f32[16,1024], index: 2, kind: input, shape index: {}]
  %s3 = inlined_call_operand.hbm [shape: f32[128,512], index: 3, kind: input, shape index: {}]
  %s4 = inlined_call_operand.hbm [shape: f32[128,512], index: 4, kind: input, shape index: {}]
  %s5 = inlined_call_operand.vmem [shape: f32[1,1024], index: 5, kind: input, shape index: {}]
  %s6 = inlined_call_operand.hbm [shape: f32[128,128], index: 6, kind: input, shape index: {}]
  %s7 = inlined_call_operand.hbm [shape: f32[128,128], index: 7, kind: input, shape index: {}]
  %s8 = inlined_call_operand.vmem [shape: f32[1,128], index: 8, kind: input, shape index: {}]
  %s9 = inlined_call_operand.hbm [shape: f32[128,128], index: 9, kind: input, shape index: {}]
  %s10 = inlined_call_operand.vmem [shape: f32[1,128], index: 10, kind: input, shape index: {}]
  %s11 = inlined_call_operand.hbm [shape: f32[8,128], index: 11, kind: output, shape index: {}]
  %s12 = sld [smem:[#allocation0]]
  $region82: #{tpu_custom_call.1} parent=0
    _
  %s14 = ssub.s32 1, %s12
  %s15 = scalar_select 0, %s14, %s12
  $region1: #{tpu_custom_call.1} parent=0
    #allocation5 [shape = 'u8[32768]{0}', space=vmem, size = 0x8000, scoped, tag = 'input window, operand 0, single buffered']
    #allocation6 [shape = 's32[1]{0}', space=sflag, size = 0x4, scoped, tag = 'scoped memory for tpu_custom_call.1']
    #allocation7 [shape = 's32[1]{0}', space=sflag, size = 0x4, scoped, tag = 'scoped memory for tpu_custom_call.1']
    #allocation8 [shape = 'u8[65536]{0}', space=vmem, size = 0x10000, scoped, tag = 'input window, operand 2, single buffered']
    #allocation9 [shape = 's32[1]{0}', space=sflag, size = 0x4, scoped, tag = 'scoped memory for tpu_custom_call.1']
    #allocation10 [shape = 'u8[262144]{0}', space=vmem, size = 0x40000, scoped, tag = 'input window, operand 3, single buffered']
    #allocation11 [shape = 'u8[262144]{0}', space=vmem, size = 0x40000, scoped, tag = 'input window, operand 4, single buffered']
    #allocation12 [shape = 's32[1]{0}', space=sflag, size = 0x4, scoped, tag = 'scoped memory for tpu_custom_call.1']
    #allocation13 [shape = 'u8[65536]{0}', space=vmem, size = 0x10000, scoped, tag = 'input window, operand 6, single buffered']
    #allocation14 [shape = 'u8[65536]{0}', space=vmem, size = 0x10000, scoped, tag = 'input window, operand 7, single buffered']
    #allocation15 [shape = 's32[1]{0}', space=sflag, size = 0x4, scoped, tag = 'scoped memory for tpu_custom_call.1']
    #allocation16 [shape = 'u8[65536]{0}', space=vmem, size = 0x10000, scoped, tag = 'input window, operand 9, single buffered']
    #allocation17 [shape = 'u8[4096]{0}', space=vmem, size = 0x1000, scoped, tag = 'output window, operand 0, single buffered']
    %16 = vsyncpa [#allocation6], 0
    %17 = vsyncpa [#allocation9], 0
    %18 = vsyncpa [#allocation12], 0
    %19 = vsyncpa [#allocation15], 0
    %20 = vsyncpa [#allocation7], 0
    // Predicated region
    $region2: #{tpu_custom_call.1} parent=1 // pred_check
      _
    $region3: #{tpu_custom_call.1} parent=1 // pred_check_branch
      %22 = sbr.rel (0) target = $region5
    $region4: #{tpu_custom_call.1} parent=1 // pred_region
      %24 = vsyncadd [#allocation6], 0
      %s25 = sshll.u32 %s0, 4
      %s26 = int_to_ptr.hbm [resolvable:$true] %s25
      %s27 = sshll.u32 [#allocation5], 4
      %s28 = int_to_ptr.vmem [resolvable:$true] %s27
      %33 = dma.hbm_to_vmem [thread:$0]  %s26, 1024, %s28, [#allocation6], 128, 128, 8
    $region5: #{tpu_custom_call.1} parent=1 // pred_fallthru
      _
    // Predicated region
    $region6: #{tpu_custom_call.1} parent=1 // pred_check
      _
    $region7: #{tpu_custom_call.1} parent=1 // pred_check_branch
      %35 = sbr.rel (0) target = $region9
    $region8: #{tpu_custom_call.1} parent=1 // pred_region
      _
    $region9: #{tpu_custom_call.1} parent=1 // pred_fallthru
      _
    // Predicated region
    $region10: #{tpu_custom_call.1} parent=1 // pred_check
      _
    $region11: #{tpu_custom_call.1} parent=1 // pred_check_branch
      %37 = sbr.rel (0) target = $region13
    $region12: #{tpu_custom_call.1} parent=1 // pred_region
      %39 = vsyncadd [#allocation9], 0
      %s40 = sshll.u32 %s2, 4
      %s41 = int_to_ptr.hbm [resolvable:$true] %s40
      %s42 = sshll.u32 [#allocation8], 4
      %s43 = int_to_ptr.vmem [resolvable:$true] %s42
      %48 = dma.hbm_to_vmem [thread:$0]  %s41, 2048, %s43, [#allocation9], 1024, 1024, 64
    $region13: #{tpu_custom_call.1} parent=1 // pred_fallthru
      _
    // Predicated region
    $region14: #{tpu_custom_call.1} parent=1 // pred_check
      _
    $region15: #{tpu_custom_call.1} parent=1 // pred_check_branch
      %50 = sbr.rel (0) target = $region17
    $region16: #{tpu_custom_call.1} parent=1 // pred_region
      %52 = vsyncadd [#allocation9], 0
      %s53 = sshll.u32 %s3, 4
      %s54 = int_to_ptr.hbm [resolvable:$true] %s53
      %s55 = sshll.u32 [#allocation10], 4
      %s56 = int_to_ptr.vmem [resolvable:$true] %s55
      %61 = dma.hbm_to_vmem [thread:$0]  %s54, 8192, %s56, [#allocation9], 512, 512, 32
    $region17: #{tpu_custom_call.1} parent=1 // pred_fallthru
      _
    // Predicated region
    $region18: #{tpu_custom_call.1} parent=1 // pred_check
      _
    $region19: #{tpu_custom_call.1} parent=1 // pred_check_branch
      %63 = sbr.rel (0) target = $region21
    $region20: #{tpu_custom_call.1} parent=1 // pred_region
      %65 = vsyncadd [#allocation12], 0
      %s66 = sshll.u32 %s4, 4
      %s67 = int_to_ptr.hbm [resolvable:$true] %s66
      %s68 = sshll.u32 [#allocation11], 4
      %s69 = int_to_ptr.vmem [resolvable:$true] %s68
      %74 = dma.hbm_to_vmem [thread:$0]  %s67, 8192, %s69, [#allocation12], 512, 512, 32
    $region21: #{tpu_custom_call.1} parent=1 // pred_fallthru
      _
    // Predicated region
    $region22: #{tpu_custom_call.1} parent=1 // pred_check
      _
    $region23: #{tpu_custom_call.1} parent=1 // pred_check_branch
      %76 = sbr.rel (0) target = $region25
    $region24: #{tpu_custom_call.1} parent=1 // pred_region
      _
    $region25: #{tpu_custom_call.1} parent=1 // pred_fallthru
      _
    // Predicated region
    $region26: #{tpu_custom_call.1} parent=1 // pred_check
      _
    $region27: #{tpu_custom_call.1} parent=1 // pred_check_branch
      %78 = sbr.rel (0) target = $region29
    $region28: #{tpu_custom_call.1} parent=1 // pred_region
      %80 = vsyncadd [#allocation12], 0
      %s81 = sshll.u32 %s6, 4
      %s82 = int_to_ptr.hbm [resolvable:$true] %s81
      %s83 = sshll.u32 [#allocation13], 4
      %s84 = int_to_ptr.vmem [resolvable:$true] %s83
      %89 = dma.hbm_to_vmem [thread:$0]  %s82, 2048, %s84, [#allocation12], 128, 128, 8
    $region29: #{tpu_custom_call.1} parent=1 // pred_fallthru
      _
    // Predicated region
    $region30: #{tpu_custom_call.1} parent=1 // pred_check
      _
    $region31: #{tpu_custom_call.1} parent=1 // pred_check_branch
      %91 = sbr.rel (0) target = $region33
    $region32: #{tpu_custom_call.1} parent=1 // pred_region
      %93 = vsyncadd [#allocation15], 0
      %s94 = sshll.u32 %s7, 4
      %s95 = int_to_ptr.hbm [resolvable:$true] %s94
      %s96 = sshll.u32 [#allocation14], 4
      %s97 = int_to_ptr.vmem [resolvable:$true] %s96
      %102 = dma.hbm_to_vmem [thread:$0]  %s95, 2048, %s97, [#allocation15], 128, 128, 8
    $region33: #{tpu_custom_call.1} parent=1 // pred_fallthru
      _
    // Predicated region
    $region34: #{tpu_custom_call.1} parent=1 // pred_check
      _
    $region35: #{tpu_custom_call.1} parent=1 // pred_check_branch
      %104 = sbr.rel (0) target = $region37
    $region36: #{tpu_custom_call.1} parent=1 // pred_region
      _
    $region37: #{tpu_custom_call.1} parent=1 // pred_fallthru
      _
    // Predicated region
    $region38: #{tpu_custom_call.1} parent=1 // pred_check
      _
    $region39: #{tpu_custom_call.1} parent=1 // pred_check_branch
      %106 = sbr.rel (0) target = $region41
    $region40: #{tpu_custom_call.1} parent=1 // pred_region
      %108 = vsyncadd [#allocation15], 0
      %s109 = sshll.u32 %s9, 4
      %s110 = int_to_ptr.hbm [resolvable:$true] %s109
      %s111 = sshll.u32 [#allocation16], 4
      %s112 = int_to_ptr.vmem [resolvable:$true] %s111
      %117 = dma.hbm_to_vmem [thread:$0]  %s110, 2048, %s112, [#allocation15], 128, 128, 8
    $region41: #{tpu_custom_call.1} parent=1 // pred_fallthru
      _
    // Predicated region
    $region42: #{tpu_custom_call.1} parent=1 // pred_check
      _
    $region43: #{tpu_custom_call.1} parent=1 // pred_check_branch
      %119 = sbr.rel (0) target = $region45
    $region44: #{tpu_custom_call.1} parent=1 // pred_region
      _
    $region45: #{tpu_custom_call.1} parent=1 // pred_fallthru
      _
    // Predicated region
    $region46: #{tpu_custom_call.1} parent=1 // pred_check
      _
    $region47: #{tpu_custom_call.1} parent=1 // pred_check_branch
      %121 = sbr.rel (0) target = $region49
    $region48: #{tpu_custom_call.1} parent=1 // pred_region
      %123 = dma.done [#allocation6], 1024
    $region49: #{tpu_custom_call.1} parent=1 // pred_fallthru
      _
    // Predicated region
    $region50: #{tpu_custom_call.1} parent=1 // pred_check
      _
    $region51: #{tpu_custom_call.1} parent=1 // pred_check_branch
      %125 = sbr.rel (0) target = $region53
    $region52: #{tpu_custom_call.1} parent=1 // pred_region
      %127 = dma.done [#allocation9], 2048
    $region53: #{tpu_custom_call.1} parent=1 // pred_fallthru
      _
    // Predicated region
    $region54: #{tpu_custom_call.1} parent=1 // pred_check
      _
    $region55: #{tpu_custom_call.1} parent=1 // pred_check_branch
      %129 = sbr.rel (0) target = $region57
    $region56: #{tpu_custom_call.1} parent=1 // pred_region
      %131 = dma.done [#allocation9], 8192
    $region57: #{tpu_custom_call.1} parent=1 // pred_fallthru
      _
    // Predicated region
    $region58: #{tpu_custom_call.1} parent=1 // pred_check
      _
    $region59: #{tpu_custom_call.1} parent=1 // pred_check_branch
      %133 = sbr.rel (0) target = $region61
    $region60: #{tpu_custom_call.1} parent=1 // pred_region
      %135 = dma.done [#allocation12], 8192
    $region61: #{tpu_custom_call.1} parent=1 // pred_fallthru
      _
    // Predicated region
    $region62: #{tpu_custom_call.1} parent=1 // pred_check
      _
    $region63: #{tpu_custom_call.1} parent=1 // pred_check_branch
      %137 = sbr.rel (0) target = $region65
    $region64: #{tpu_custom_call.1} parent=1 // pred_region
      %139 = dma.done [#allocation12], 2048
    $region65: #{tpu_custom_call.1} parent=1 // pred_fallthru
      _
    // Predicated region
    $region66: #{tpu_custom_call.1} parent=1 // pred_check
      _
    $region67: #{tpu_custom_call.1} parent=1 // pred_check_branch
      %141 = sbr.rel (0) target = $region69
    $region68: #{tpu_custom_call.1} parent=1 // pred_region
      %143 = dma.done [#allocation15], 2048
    $region69: #{tpu_custom_call.1} parent=1 // pred_fallthru
      _
    // Predicated region
    $region70: #{tpu_custom_call.1} parent=1 // pred_check
      _
    $region71: #{tpu_custom_call.1} parent=1 // pred_check_branch
      %145 = sbr.rel (0) target = $region73
    $region72: #{tpu_custom_call.1} parent=1 // pred_region
      %147 = dma.done [#allocation15], 2048
    $region73: #{tpu_custom_call.1} parent=1 // pred_fallthru
      _
    %v148 = vld [vmem:[#allocation5] sm:$0xff]
    %v149 = vld [vmem:[#allocation5 + $0x8] sm:$0xff]
    %v150 = vld [vmem:[#allocation5 + $0x10] sm:$0xff]
    %v151 = vld [vmem:[#allocation5 + $0x18] sm:$0xff]
    %v152 = vld [vmem:[#allocation5 + $0x20] sm:$0xff]
    %v153 = vld [vmem:[#allocation5 + $0x28] sm:$0xff]
    %v154 = vld [vmem:[#allocation5 + $0x30] sm:$0xff]
    %v155 = vld [vmem:[#allocation5 + $0x38] sm:$0xff]
    %v156 = vld [vmem:[#allocation8] sm:$0xff]
    %v157 = vld [vmem:[#allocation8 + $0x8] sm:$0xff]
    %v158 = vld [vmem:[#allocation8 + $0x10] sm:$0xff]
    %v159 = vld [vmem:[#allocation8 + $0x18] sm:$0xff]
    %v160 = vld [vmem:[#allocation8 + $0x20] sm:$0xff]
    %v161 = vld [vmem:[#allocation8 + $0x28] sm:$0xff]
    %v162 = vld [vmem:[#allocation8 + $0x30] sm:$0xff]
    %v163 = vld [vmem:[#allocation8 + $0x38] sm:$0xff]
    %v164 = vld [vmem:[#allocation8 + $0x40] sm:$0xff]
    %v165 = vld [vmem:[#allocation8 + $0x48] sm:$0xff]
    %v166 = vld [vmem:[#allocation8 + $0x50] sm:$0xff]
    %v167 = vld [vmem:[#allocation8 + $0x58] sm:$0xff]
    %v168 = vld [vmem:[#allocation8 + $0x60] sm:$0xff]
    %v169 = vld [vmem:[#allocation8 + $0x68] sm:$0xff]
    %v170 = vld [vmem:[#allocation8 + $0x70] sm:$0xff]
    %v171 = vld [vmem:[#allocation8 + $0x78] sm:$0xff]
    %v172 = vld [vmem:[%s5] sm:$0xff]
    %v174 = vperm.slane %v172, 0
    %v175 = vperm.slane %v172, 1
    %v176 = vperm.slane %v172, 2
    %v177 = vperm.slane %v172, 3
    %v178 = vperm.slane %v172, 4
    %v179 = vperm.slane %v172, 5
    %v180 = vperm.slane %v172, 6
    %v181 = vperm.slane %v172, 7
    %vm190 = vcmask 130048
    %v192 = vsel %vm190, %v148, 0
    %v195 = vsel %vm190, %v149, 0
    %v198 = vsel %vm190, %v150, 0
    %v201 = vsel %vm190, %v151, 0
    %v204 = vsel %vm190, %v152, 0
    %v207 = vsel %vm190, %v153, 0
    %v210 = vsel %vm190, %v154, 0
    %v213 = vsel %vm190, %v155, 0
    %215 = vmatpush.msra.mxu0 0.0
    %216 = vmatpush.msra.mxu0 0.0
    %217 = vmatpush.msra.mxu0 0.0
    %218 = vmatpush.msra.mxu0 0.0
    %219 = vmatpush.msra.mxu0 0.0
    %220 = vmatpush.msra.mxu0 0.0
    %221 = vmatpush.msra.mxu0 0.0
    %222 = vmatpush.msra.mxu0 0.0
    %223 = vmatpush.msra.mxu0 0.0
    %224 = vmatpush.msra.mxu0 0.0
    %225 = vmatpush.msra.mxu0 0.0
    %226 = vmatpush.msra.mxu0 0.0
    %227 = vmatpush.msra.mxu0 0.0
    %228 = vmatpush.msra.mxu0 0.0
    %229 = vmatpush.msra.mxu0 %v164
    %230 = vmatpush.msra.mxu0 %v156
    %231 = vmatmul.f32.gmra.mxu0 %v192
    %v232 = vpop.f32.mrf.mxu0
    %v233 = vadd.f32 %v174, %v232
    %234 = vmatmul.f32.gmra.mxu0 %v195
    %v235 = vpop.f32.mrf.mxu0
    %v236 = vadd.f32 %v174, %v235
    %237 = vmatmul.f32.gmra.mxu0 %v198
    %v238 = vpop.f32.mrf.mxu0
    %v239 = vadd.f32 %v174, %v238
    %240 = vmatmul.f32.gmra.mxu0 %v201
    %v241 = vpop.f32.mrf.mxu0
    %v242 = vadd.f32 %v174, %v241
    %243 = vmatmul.f32.gmra.mxu0 %v204
    %v244 = vpop.f32.mrf.mxu0
    %v245 = vadd.f32 %v174, %v244
    %246 = vmatmul.f32.gmra.mxu0 %v207
    %v247 = vpop.f32.mrf.mxu0
    %v248 = vadd.f32 %v174, %v247
    %249 = vmatmul.f32.gmra.mxu0 %v210
    %v250 = vpop.f32.mrf.mxu0
    %v251 = vadd.f32 %v174, %v250
    %252 = vmatmul.f32.gmra.mxu0 %v213
    %v253 = vpop.f32.mrf.mxu0
    %v254 = vadd.f32 %v174, %v253
    %255 = vdwg.mxu0
    %256 = vmatpush.msra.mxu0 0.0
    %257 = vmatpush.msra.mxu0 0.0
    %258 = vmatpush.msra.mxu0 0.0
    %259 = vmatpush.msra.mxu0 0.0
    %260 = vmatpush.msra.mxu0 0.0
    %261 = vmatpush.msra.mxu0 0.0
    %262 = vmatpush.msra.mxu0 0.0
    %263 = vmatpush.msra.mxu0 0.0
    %264 = vmatpush.msra.mxu0 0.0
    %265 = vmatpush.msra.mxu0 0.0
    %266 = vmatpush.msra.mxu0 0.0
    %267 = vmatpush.msra.mxu0 0.0
    %268 = vmatpush.msra.mxu0 0.0
    %269 = vmatpush.msra.mxu0 0.0
    %270 = vmatpush.msra.mxu0 %v165
    %271 = vmatpush.msra.mxu0 %v157
    %272 = vmatmul.f32.gmra.mxu0 %v192
    %v273 = vpop.f32.mrf.mxu0
    %v274 = vadd.f32 %v175, %v273
    %275 = vmatmul.f32.gmra.mxu0 %v195
    %v276 = vpop.f32.mrf.mxu0
    %v277 = vadd.f32 %v175, %v276
    %278 = vmatmul.f32.gmra.mxu0 %v198
    %v279 = vpop.f32.mrf.mxu0
    %v280 = vadd.f32 %v175, %v279
    %281 = vmatmul.f32.gmra.mxu0 %v201
    %v282 = vpop.f32.mrf.mxu0
    %v283 = vadd.f32 %v175, %v282
    %284 = vmatmul.f32.gmra.mxu0 %v204
    %v285 = vpop.f32.mrf.mxu0
    %v286 = vadd.f32 %v175, %v285
    %287 = vmatmul.f32.gmra.mxu0 %v207
    %v288 = vpop.f32.mrf.mxu0
    %v289 = vadd.f32 %v175, %v288
    %290 = vmatmul.f32.gmra.mxu0 %v210
    %v291 = vpop.f32.mrf.mxu0
    %v292 = vadd.f32 %v175, %v291
    %293 = vmatmul.f32.gmra.mxu0 %v213
    %v294 = vpop.f32.mrf.mxu0
    %v295 = vadd.f32 %v175, %v294
    %296 = vdwg.mxu0
    %297 = vmatpush.msra.mxu0 0.0
    %298 = vmatpush.msra.mxu0 0.0
    %299 = vmatpush.msra.mxu0 0.0
    %300 = vmatpush.msra.mxu0 0.0
    %301 = vmatpush.msra.mxu0 0.0
    %302 = vmatpush.msra.mxu0 0.0
    %303 = vmatpush.msra.mxu0 0.0
    %304 = vmatpush.msra.mxu0 0.0
    %305 = vmatpush.msra.mxu0 0.0
    %306 = vmatpush.msra.mxu0 0.0
    %307 = vmatpush.msra.mxu0 0.0
    %308 = vmatpush.msra.mxu0 0.0
    %309 = vmatpush.msra.mxu0 0.0
    %310 = vmatpush.msra.mxu0 0.0
    %311 = vmatpush.msra.mxu0 %v166
    %312 = vmatpush.msra.mxu0 %v158
    %313 = vmatmul.f32.gmra.mxu0 %v192
    %v314 = vpop.f32.mrf.mxu0
    %v315 = vadd.f32 %v176, %v314
    %316 = vmatmul.f32.gmra.mxu0 %v195
    %v317 = vpop.f32.mrf.mxu0
    %v318 = vadd.f32 %v176, %v317
    %319 = vmatmul.f32.gmra.mxu0 %v198
    %v320 = vpop.f32.mrf.mxu0
    %v321 = vadd.f32 %v176, %v320
    %322 = vmatmul.f32.gmra.mxu0 %v201
    %v323 = vpop.f32.mrf.mxu0
    %v324 = vadd.f32 %v176, %v323
    %325 = vmatmul.f32.gmra.mxu0 %v204
    %v326 = vpop.f32.mrf.mxu0
    %v327 = vadd.f32 %v176, %v326
    %328 = vmatmul.f32.gmra.mxu0 %v207
    %v329 = vpop.f32.mrf.mxu0
    %v330 = vadd.f32 %v176, %v329
    %331 = vmatmul.f32.gmra.mxu0 %v210
    %v332 = vpop.f32.mrf.mxu0
    %v333 = vadd.f32 %v176, %v332
    %334 = vmatmul.f32.gmra.mxu0 %v213
    %v335 = vpop.f32.mrf.mxu0
    %v336 = vadd.f32 %v176, %v335
    %337 = vdwg.mxu0
    %338 = vmatpush.msra.mxu0 0.0
    %339 = vmatpush.msra.mxu0 0.0
    %340 = vmatpush.msra.mxu0 0.0
    %341 = vmatpush.msra.mxu0 0.0
    %342 = vmatpush.msra.mxu0 0.0
    %343 = vmatpush.msra.mxu0 0.0
    %344 = vmatpush.msra.mxu0 0.0
    %345 = vmatpush.msra.mxu0 0.0
    %346 = vmatpush.msra.mxu0 0.0
    %347 = vmatpush.msra.mxu0 0.0
    %348 = vmatpush.msra.mxu0 0.0
    %349 = vmatpush.msra.mxu0 0.0
    %350 = vmatpush.msra.mxu0 0.0
    %351 = vmatpush.msra.mxu0 0.0
    %352 = vmatpush.msra.mxu0 %v167
    %353 = vmatpush.msra.mxu0 %v159
    %354 = vmatmul.f32.gmra.mxu0 %v192
    %v355 = vpop.f32.mrf.mxu0
    %v356 = vadd.f32 %v177, %v355
    %357 = vmatmul.f32.gmra.mxu0 %v195
    %v358 = vpop.f32.mrf.mxu0
    %v359 = vadd.f32 %v177, %v358
    %360 = vmatmul.f32.gmra.mxu0 %v198
    %v361 = vpop.f32.mrf.mxu0
    %v362 = vadd.f32 %v177, %v361
    %363 = vmatmul.f32.gmra.mxu0 %v201
    %v364 = vpop.f32.mrf.mxu0
    %v365 = vadd.f32 %v177, %v364
    %366 = vmatmul.f32.gmra.mxu0 %v204
    %v367 = vpop.f32.mrf.mxu0
    %v368 = vadd.f32 %v177, %v367
    %369 = vmatmul.f32.gmra.mxu0 %v207
    %v370 = vpop.f32.mrf.mxu0
    %v371 = vadd.f32 %v177, %v370
    %372 = vmatmul.f32.gmra.mxu0 %v210
    %v373 = vpop.f32.mrf.mxu0
    %v374 = vadd.f32 %v177, %v373
    %375 = vmatmul.f32.gmra.mxu0 %v213
    %v376 = vpop.f32.mrf.mxu0
    %v377 = vadd.f32 %v177, %v376
    %378 = vdwg.mxu0
    %379 = vmatpush.msra.mxu0 0.0
    %380 = vmatpush.msra.mxu0 0.0
    %381 = vmatpush.msra.mxu0 0.0
    %382 = vmatpush.msra.mxu0 0.0
    %383 = vmatpush.msra.mxu0 0.0
    %384 = vmatpush.msra.mxu0 0.0
    %385 = vmatpush.msra.mxu0 0.0
    %386 = vmatpush.msra.mxu0 0.0
    %387 = vmatpush.msra.mxu0 0.0
    %388 = vmatpush.msra.mxu0 0.0
    %389 = vmatpush.msra.mxu0 0.0
    %390 = vmatpush.msra.mxu0 0.0
    %391 = vmatpush.msra.mxu0 0.0
    %392 = vmatpush.msra.mxu0 0.0
    %393 = vmatpush.msra.mxu0 %v168
    %394 = vmatpush.msra.mxu0 %v160
    %395 = vmatmul.f32.gmra.mxu0 %v192
    %v396 = vpop.f32.mrf.mxu0
    %v397 = vadd.f32 %v178, %v396
    %398 = vmatmul.f32.gmra.mxu0 %v195
    %v399 = vpop.f32.mrf.mxu0
    %v400 = vadd.f32 %v178, %v399
    %401 = vmatmul.f32.gmra.mxu0 %v198
    %v402 = vpop.f32.mrf.mxu0
    %v403 = vadd.f32 %v178, %v402
    %404 = vmatmul.f32.gmra.mxu0 %v201
    %v405 = vpop.f32.mrf.mxu0
    %v406 = vadd.f32 %v178, %v405
    %407 = vmatmul.f32.gmra.mxu0 %v204
    %v408 = vpop.f32.mrf.mxu0
    %v409 = vadd.f32 %v178, %v408
    %410 = vmatmul.f32.gmra.mxu0 %v207
    %v411 = vpop.f32.mrf.mxu0
    %v412 = vadd.f32 %v178, %v411
    %413 = vmatmul.f32.gmra.mxu0 %v210
    %v414 = vpop.f32.mrf.mxu0
    %v415 = vadd.f32 %v178, %v414
    %416 = vmatmul.f32.gmra.mxu0 %v213
    %v417 = vpop.f32.mrf.mxu0
    %v418 = vadd.f32 %v178, %v417
    %419 = vdwg.mxu0
    %420 = vmatpush.msra.mxu0 0.0
    %421 = vmatpush.msra.mxu0 0.0
    %422 = vmatpush.msra.mxu0 0.0
    %423 = vmatpush.msra.mxu0 0.0
    %424 = vmatpush.msra.mxu0 0.0
    %425 = vmatpush.msra.mxu0 0.0
    %426 = vmatpush.msra.mxu0 0.0
    %427 = vmatpush.msra.mxu0 0.0
    %428 = vmatpush.msra.mxu0 0.0
    %429 = vmatpush.msra.mxu0 0.0
    %430 = vmatpush.msra.mxu0 0.0
    %431 = vmatpush.msra.mxu0 0.0
    %432 = vmatpush.msra.mxu0 0.0
    %433 = vmatpush.msra.mxu0 0.0
    %434 = vmatpush.msra.mxu0 %v169
    %435 = vmatpush.msra.mxu0 %v161
    %436 = vmatmul.f32.gmra.mxu0 %v192
    %v437 = vpop.f32.mrf.mxu0
    %v438 = vadd.f32 %v179, %v437
    %439 = vmatmul.f32.gmra.mxu0 %v195
    %v440 = vpop.f32.mrf.mxu0
    %v441 = vadd.f32 %v179, %v440
    %442 = vmatmul.f32.gmra.mxu0 %v198
    %v443 = vpop.f32.mrf.mxu0
    %v444 = vadd.f32 %v179, %v443
    %445 = vmatmul.f32.gmra.mxu0 %v201
    %v446 = vpop.f32.mrf.mxu0
    %v447 = vadd.f32 %v179, %v446
    %448 = vmatmul.f32.gmra.mxu0 %v204
    %v449 = vpop.f32.mrf.mxu0
    %v450 = vadd.f32 %v179, %v449
    %451 = vmatmul.f32.gmra.mxu0 %v207
    %v452 = vpop.f32.mrf.mxu0
    %v453 = vadd.f32 %v179, %v452
    %454 = vmatmul.f32.gmra.mxu0 %v210
    %v455 = vpop.f32.mrf.mxu0
    %v456 = vadd.f32 %v179, %v455
    %457 = vmatmul.f32.gmra.mxu0 %v213
    %v458 = vpop.f32.mrf.mxu0
    %v459 = vadd.f32 %v179, %v458
    %460 = vdwg.mxu0
    %461 = vmatpush.msra.mxu0 0.0
    %462 = vmatpush.msra.mxu0 0.0
    %463 = vmatpush.msra.mxu0 0.0
    %464 = vmatpush.msra.mxu0 0.0
    %465 = vmatpush.msra.mxu0 0.0
    %466 = vmatpush.msra.mxu0 0.0
    %467 = vmatpush.msra.mxu0 0.0
    %468 = vmatpush.msra.mxu0 0.0
    %469 = vmatpush.msra.mxu0 0.0
    %470 = vmatpush.msra.mxu0 0.0
    %471 = vmatpush.msra.mxu0 0.0
    %472 = vmatpush.msra.mxu0 0.0
    %473 = vmatpush.msra.mxu0 0.0
    %474 = vmatpush.msra.mxu0 0.0
    %475 = vmatpush.msra.mxu0 %v170
    %476 = vmatpush.msra.mxu0 %v162
    %477 = vmatmul.f32.gmra.mxu0 %v192
    %v478 = vpop.f32.mrf.mxu0
    %v479 = vadd.f32 %v180, %v478
    %480 = vmatmul.f32.gmra.mxu0 %v195
    %v481 = vpop.f32.mrf.mxu0
    %v482 = vadd.f32 %v180, %v481
    %483 = vmatmul.f32.gmra.mxu0 %v198
    %v484 = vpop.f32.mrf.mxu0
    %v485 = vadd.f32 %v180, %v484
    %486 = vmatmul.f32.gmra.mxu0 %v201
    %v487 = vpop.f32.mrf.mxu0
    %v488 = vadd.f32 %v180, %v487
    %489 = vmatmul.f32.gmra.mxu0 %v204
    %v490 = vpop.f32.mrf.mxu0
    %v491 = vadd.f32 %v180, %v490
    %492 = vmatmul.f32.gmra.mxu0 %v207
    %v493 = vpop.f32.mrf.mxu0
    %v494 = vadd.f32 %v180, %v493
    %495 = vmatmul.f32.gmra.mxu0 %v210
    %v496 = vpop.f32.mrf.mxu0
    %v497 = vadd.f32 %v180, %v496
    %498 = vmatmul.f32.gmra.mxu0 %v213
    %v499 = vpop.f32.mrf.mxu0
    %v500 = vadd.f32 %v180, %v499
    %501 = vdwg.mxu0
    %502 = vmatpush.msra.mxu0 0.0
    %503 = vmatpush.msra.mxu0 0.0
    %504 = vmatpush.msra.mxu0 0.0
    %505 = vmatpush.msra.mxu0 0.0
    %506 = vmatpush.msra.mxu0 0.0
    %507 = vmatpush.msra.mxu0 0.0
    %508 = vmatpush.msra.mxu0 0.0
    %509 = vmatpush.msra.mxu0 0.0
    %510 = vmatpush.msra.mxu0 0.0
    %511 = vmatpush.msra.mxu0 0.0
    %512 = vmatpush.msra.mxu0 0.0
    %513 = vmatpush.msra.mxu0 0.0
    %514 = vmatpush.msra.mxu0 0.0
    %515 = vmatpush.msra.mxu0 0.0
    %516 = vmatpush.msra.mxu0 %v171
    %517 = vmatpush.msra.mxu0 %v163
    %518 = vmatmul.f32.gmra.mxu0 %v192
    %v519 = vpop.f32.mrf.mxu0
    %v520 = vadd.f32 %v181, %v519
    %521 = vmatmul.f32.gmra.mxu0 %v195
    %v522 = vpop.f32.mrf.mxu0
    %v523 = vadd.f32 %v181, %v522
    %524 = vmatmul.f32.gmra.mxu0 %v198
    %v525 = vpop.f32.mrf.mxu0
    %v526 = vadd.f32 %v181, %v525
    %527 = vmatmul.f32.gmra.mxu0 %v201
    %v528 = vpop.f32.mrf.mxu0
    %v529 = vadd.f32 %v181, %v528
    %530 = vmatmul.f32.gmra.mxu0 %v204
    %v531 = vpop.f32.mrf.mxu0
    %v532 = vadd.f32 %v181, %v531
    %533 = vmatmul.f32.gmra.mxu0 %v207
    %v534 = vpop.f32.mrf.mxu0
    %v535 = vadd.f32 %v181, %v534
    %536 = vmatmul.f32.gmra.mxu0 %v210
    %v537 = vpop.f32.mrf.mxu0
    %v538 = vadd.f32 %v181, %v537
    %539 = vmatmul.f32.gmra.mxu0 %v213
    %v540 = vpop.f32.mrf.mxu0
    %v541 = vadd.f32 %v181, %v540
    %542 = vdwg.mxu0
    %543 = vst [vmem:[#allocation2] sm:$0xff] %v233
    %544 = vst [vmem:[#allocation2 + $0x8] sm:$0xff] %v274
    %545 = vst [vmem:[#allocation2 + $0x10] sm:$0xff] %v315
    %546 = vst [vmem:[#allocation2 + $0x18] sm:$0xff] %v356
    %547 = vst [vmem:[#allocation2 + $0x20] sm:$0xff] %v236
    %548 = vst [vmem:[#allocation2 + $0x28] sm:$0xff] %v277
    %549 = vst [vmem:[#allocation2 + $0x30] sm:$0xff] %v318
    %550 = vst [vmem:[#allocation2 + $0x38] sm:$0xff] %v359
    %551 = vst [vmem:[#allocation2 + $0x40] sm:$0xff] %v239
    %552 = vst [vmem:[#allocation2 + $0x48] sm:$0xff] %v280
    %553 = vst [vmem:[#allocation2 + $0x50] sm:$0xff] %v321
    %554 = vst [vmem:[#allocation2 + $0x58] sm:$0xff] %v362
    %555 = vst [vmem:[#allocation2 + $0x60] sm:$0xff] %v242
    %556 = vst [vmem:[#allocation2 + $0x68] sm:$0xff] %v283
    %557 = vst [vmem:[#allocation2 + $0x70] sm:$0xff] %v324
    %558 = vst [vmem:[#allocation2 + $0x78] sm:$0xff] %v365
    %559 = vst [vmem:[#allocation2 + $0x80] sm:$0xff] %v245
    %560 = vst [vmem:[#allocation2 + $0x88] sm:$0xff] %v286
    %561 = vst [vmem:[#allocation2 + $0x90] sm:$0xff] %v327
    %562 = vst [vmem:[#allocation2 + $0x98] sm:$0xff] %v368
    %563 = vst [vmem:[#allocation2 + $0xa0] sm:$0xff] %v248
    %564 = vst [vmem:[#allocation2 + $0xa8] sm:$0xff] %v289
    %565 = vst [vmem:[#allocation2 + $0xb0] sm:$0xff] %v330
    %566 = vst [vmem:[#allocation2 + $0xb8] sm:$0xff] %v371
    %567 = vst [vmem:[#allocation2 + $0xc0] sm:$0xff] %v251
    %568 = vst [vmem:[#allocation2 + $0xc8] sm:$0xff] %v292
    %569 = vst [vmem:[#allocation2 + $0xd0] sm:$0xff] %v333
    %570 = vst [vmem:[#allocation2 + $0xd8] sm:$0xff] %v374
    %571 = vst [vmem:[#allocation2 + $0xe0] sm:$0xff] %v254
    %572 = vst [vmem:[#allocation2 + $0xe8] sm:$0xff] %v295
    %573 = vst [vmem:[#allocation2 + $0xf0] sm:$0xff] %v336
    %574 = vst [vmem:[#allocation2 + $0xf8] sm:$0xff] %v377
    %575 = vst [vmem:[#allocation3] sm:$0xff] %v397
    %576 = vst [vmem:[#allocation3 + $0x8] sm:$0xff] %v438
    %577 = vst [vmem:[#allocation3 + $0x10] sm:$0xff] %v479
    %578 = vst [vmem:[#allocation3 + $0x18] sm:$0xff] %v520
    %579 = vst [vmem:[#allocation3 + $0x20] sm:$0xff] %v400
    %580 = vst [vmem:[#allocation3 + $0x28] sm:$0xff] %v441
    %581 = vst [vmem:[#allocation3 + $0x30] sm:$0xff] %v482
    %582 = vst [vmem:[#allocation3 + $0x38] sm:$0xff] %v523
    %583 = vst [vmem:[#allocation3 + $0x40] sm:$0xff] %v403
    %584 = vst [vmem:[#allocation3 + $0x48] sm:$0xff] %v444
    %585 = vst [vmem:[#allocation3 + $0x50] sm:$0xff] %v485
    %586 = vst [vmem:[#allocation3 + $0x58] sm:$0xff] %v526
    %587 = vst [vmem:[#allocation3 + $0x60] sm:$0xff] %v406
    %588 = vst [vmem:[#allocation3 + $0x68] sm:$0xff] %v447
    %589 = vst [vmem:[#allocation3 + $0x70] sm:$0xff] %v488
    %590 = vst [vmem:[#allocation3 + $0x78] sm:$0xff] %v529
    %591 = vst [vmem:[#allocation3 + $0x80] sm:$0xff] %v409
    %592 = vst [vmem:[#allocation3 + $0x88] sm:$0xff] %v450
    %593 = vst [vmem:[#allocation3 + $0x90] sm:$0xff] %v491
    %594 = vst [vmem:[#allocation3 + $0x98] sm:$0xff] %v532
    %595 = vst [vmem:[#allocation3 + $0xa0] sm:$0xff] %v412
    %596 = vst [vmem:[#allocation3 + $0xa8] sm:$0xff] %v453
    %597 = vst [vmem:[#allocation3 + $0xb0] sm:$0xff] %v494
    %598 = vst [vmem:[#allocation3 + $0xb8] sm:$0xff] %v535
    %599 = vst [vmem:[#allocation3 + $0xc0] sm:$0xff] %v415
    %600 = vst [vmem:[#allocation3 + $0xc8] sm:$0xff] %v456
    %601 = vst [vmem:[#allocation3 + $0xd0] sm:$0xff] %v497
    %602 = vst [vmem:[#allocation3 + $0xd8] sm:$0xff] %v538
    %603 = vst [vmem:[#allocation3 + $0xe0] sm:$0xff] %v418
    %604 = vst [vmem:[#allocation3 + $0xe8] sm:$0xff] %v459
    %605 = vst [vmem:[#allocation3 + $0xf0] sm:$0xff] %v500
    %606 = vst [vmem:[#allocation3 + $0xf8] sm:$0xff] %v541
    %v607 = vld [vmem:[%s1] sm:$0xff]
    %v608 = vsub.s32 %v607, 1
    %609 = vset.pattern.permute.xlu0 0
    %610 = vperm.xlu0 %609, %v608
    %v611 = vpop.permute.xlu0 %610
    %vm612 = vcmp.eq.s32.totalorder %v611, 0
    %vm613 = vcmp.eq.s32.totalorder %v611, 1
    %vm614 = vcmp.eq.s32.totalorder %v611, 2
    %vm615 = vcmp.eq.s32.totalorder %v611, 3
    %vm616 = vcmp.eq.s32.totalorder %v611, 4
    %vm617 = vcmp.eq.s32.totalorder %v611, 5
    %vm618 = vcmp.eq.s32.totalorder %v611, 6
    %vm619 = vcmp.eq.s32.totalorder %v611, 7
    %v620 = vsel %vm612, 1, 0
    %v621 = vsel %vm613, 1, 0
    %v622 = vsel %vm614, 1, 0
    %v623 = vsel %vm615, 1, 0
    %v624 = vsel %vm616, 1, 0
    %v625 = vsel %vm617, 1, 0
    %v626 = vsel %vm618, 1, 0
    %v627 = vsel %vm619, 1, 0
    %v628 = vcvt.s32.f32 %v620
    %v629 = vcvt.s32.f32 %v621
    %v630 = vcvt.s32.f32 %v622
    %v631 = vcvt.s32.f32 %v623
    %v632 = vcvt.s32.f32 %v624
    %v633 = vcvt.s32.f32 %v625
    %v634 = vcvt.s32.f32 %v626
    %v635 = vcvt.s32.f32 %v627
    %636 = vst [vmem:[#allocation4] sm:$0xff] %v628
    %637 = vst [vmem:[#allocation4 + $0x8] sm:$0xff] %v629
    %638 = vst [vmem:[#allocation4 + $0x10] sm:$0xff] %v630
    %639 = vst [vmem:[#allocation4 + $0x18] sm:$0xff] %v631
    %640 = vst [vmem:[#allocation4 + $0x20] sm:$0xff] %v632
    %641 = vst [vmem:[#allocation4 + $0x28] sm:$0xff] %v633
    %642 = vst [vmem:[#allocation4 + $0x30] sm:$0xff] %v634
    %643 = vst [vmem:[#allocation4 + $0x38] sm:$0xff] %v635
    %v644 = vld [vmem:[#allocation2] sm:$0xff]
    %v645 = vld [vmem:[#allocation2 + $0x8] sm:$0xff]
    %v646 = vld [vmem:[#allocation2 + $0x10] sm:$0xff]
    %v647 = vld [vmem:[#allocation2 + $0x18] sm:$0xff]
    %v648 = vld [vmem:[#allocation10] sm:$0xff]
    %v649 = vld [vmem:[#allocation10 + $0x8] sm:$0xff]
    %v650 = vld [vmem:[#allocation10 + $0x10] sm:$0xff]
    %v651 = vld [vmem:[#allocation10 + $0x18] sm:$0xff]
    %v652 = vld [vmem:[#allocation10 + $0x20] sm:$0xff]
    %v653 = vld [vmem:[#allocation10 + $0x28] sm:$0xff]
    %v654 = vld [vmem:[#allocation10 + $0x30] sm:$0xff]
    %v655 = vld [vmem:[#allocation10 + $0x38] sm:$0xff]
    %v656 = vld [vmem:[#allocation10 + $0x40] sm:$0xff]
    %v657 = vld [vmem:[#allocation10 + $0x48] sm:$0xff]
    %v658 = vld [vmem:[#allocation10 + $0x50] sm:$0xff]
    %v659 = vld [vmem:[#allocation10 + $0x58] sm:$0xff]
    %v660 = vld [vmem:[#allocation10 + $0x60] sm:$0xff]
    %v661 = vld [vmem:[#allocation10 + $0x68] sm:$0xff]
    %v662 = vld [vmem:[#allocation10 + $0x70] sm:$0xff]
    %v663 = vld [vmem:[#allocation10 + $0x78] sm:$0xff]
    %v664 = vld [vmem:[#allocation10 + $0x80] sm:$0xff]
    %v665 = vld [vmem:[#allocation10 + $0x88] sm:$0xff]
    %v666 = vld [vmem:[#allocation10 + $0x90] sm:$0xff]
    %v667 = vld [vmem:[#allocation10 + $0x98] sm:$0xff]
    %v668 = vld [vmem:[#allocation10 + $0xa0] sm:$0xff]
    %v669 = vld [vmem:[#allocation10 + $0xa8] sm:$0xff]
    %v670 = vld [vmem:[#allocation10 + $0xb0] sm:$0xff]
    %v671 = vld [vmem:[#allocation10 + $0xb8] sm:$0xff]
    %v672 = vld [vmem:[#allocation10 + $0xc0] sm:$0xff]
    %v673 = vld [vmem:[#allocation10 + $0xc8] sm:$0xff]
    %v674 = vld [vmem:[#allocation10 + $0xd0] sm:$0xff]
    %v675 = vld [vmem:[#allocation10 + $0xd8] sm:$0xff]
    %v676 = vld [vmem:[#allocation10 + $0xe0] sm:$0xff]
    %v677 = vld [vmem:[#allocation10 + $0xe8] sm:$0xff]
    %v678 = vld [vmem:[#allocation10 + $0xf0] sm:$0xff]
    %v679 = vld [vmem:[#allocation10 + $0xf8] sm:$0xff]
    %v680 = vld [vmem:[#allocation10 + $0x100] sm:$0xff]
    %v681 = vld [vmem:[#allocation10 + $0x108] sm:$0xff]
    %v682 = vld [vmem:[#allocation10 + $0x110] sm:$0xff]
    %v683 = vld [vmem:[#allocation10 + $0x118] sm:$0xff]
    %v684 = vld [vmem:[#allocation10 + $0x120] sm:$0xff]
    %v685 = vld [vmem:[#allocation10 + $0x128] sm:$0xff]
    %v686 = vld [vmem:[#allocation10 + $0x130] sm:$0xff]
    %v687 = vld [vmem:[#allocation10 + $0x138] sm:$0xff]
    %v688 = vld [vmem:[#allocation10 + $0x140] sm:$0xff]
    %v689 = vld [vmem:[#allocation10 + $0x148] sm:$0xff]
    %v690 = vld [vmem:[#allocation10 + $0x150] sm:$0xff]
    %v691 = vld [vmem:[#allocation10 + $0x158] sm:$0xff]
    %v692 = vld [vmem:[#allocation10 + $0x160] sm:$0xff]
    %v693 = vld [vmem:[#allocation10 + $0x168] sm:$0xff]
    %v694 = vld [vmem:[#allocation10 + $0x170] sm:$0xff]
    %v695 = vld [vmem:[#allocation10 + $0x178] sm:$0xff]
    %v696 = vld [vmem:[#allocation10 + $0x180] sm:$0xff]
    %v697 = vld [vmem:[#allocation10 + $0x188] sm:$0xff]
    %v698 = vld [vmem:[#allocation10 + $0x190] sm:$0xff]
    %v699 = vld [vmem:[#allocation10 + $0x198] sm:$0xff]
    %v700 = vld [vmem:[#allocation10 + $0x1a0] sm:$0xff]
    %v701 = vld [vmem:[#allocation10 + $0x1a8] sm:$0xff]
    %v702 = vld [vmem:[#allocation10 + $0x1b0] sm:$0xff]
    %v703 = vld [vmem:[#allocation10 + $0x1b8] sm:$0xff]
    %v704 = vld [vmem:[#allocation10 + $0x1c0] sm:$0xff]
    %v705 = vld [vmem:[#allocation10 + $0x1c8] sm:$0xff]
    %v706 = vld [vmem:[#allocation10 + $0x1d0] sm:$0xff]
    %v707 = vld [vmem:[#allocation10 + $0x1d8] sm:$0xff]
    %v708 = vld [vmem:[#allocation10 + $0x1e0] sm:$0xff]
    %v709 = vld [vmem:[#allocation10 + $0x1e8] sm:$0xff]
    %v710 = vld [vmem:[#allocation10 + $0x1f0] sm:$0xff]
    %v711 = vld [vmem:[#allocation10 + $0x1f8] sm:$0xff]
    %712 = vmatpush.msra.mxu0 %v708
    %713 = vmatpush.msra.mxu0 %v704
    %714 = vmatpush.msra.mxu0 %v700
    %715 = vmatpush.msra.mxu0 %v696
    %716 = vmatpush.msra.mxu0 %v692
    %717 = vmatpush.msra.mxu0 %v688
    %718 = vmatpush.msra.mxu0 %v684
    %719 = vmatpush.msra.mxu0 %v680
    %720 = vmatpush.msra.mxu0 %v676
    %721 = vmatpush.msra.mxu0 %v672
    %722 = vmatpush.msra.mxu0 %v668
    %723 = vmatpush.msra.mxu0 %v664
    %724 = vmatpush.msra.mxu0 %v660
    %725 = vmatpush.msra.mxu0 %v656
    %726 = vmatpush.msra.mxu0 %v652
    %727 = vmatpush.msra.mxu0 %v648
    %728 = vmatmul.f32.gmra.mxu0 0.0
    %v729 = vpop.f32.mrf.mxu0
    %v730 = vadd.f32 0.0, %v729
    %731 = vdwg.mxu0
    %732 = vmatpush.msra.mxu0 %v709
    %733 = vmatpush.msra.mxu0 %v705
    %734 = vmatpush.msra.mxu0 %v701
    %735 = vmatpush.msra.mxu0 %v697
    %736 = vmatpush.msra.mxu0 %v693
    %737 = vmatpush.msra.mxu0 %v689
    %738 = vmatpush.msra.mxu0 %v685
    %739 = vmatpush.msra.mxu0 %v681
    %740 = vmatpush.msra.mxu0 %v677
    %741 = vmatpush.msra.mxu0 %v673
    %742 = vmatpush.msra.mxu0 %v669
    %743 = vmatpush.msra.mxu0 %v665
    %744 = vmatpush.msra.mxu0 %v661
    %745 = vmatpush.msra.mxu0 %v657
    %746 = vmatpush.msra.mxu0 %v653
    %747 = vmatpush.msra.mxu0 %v649
    %748 = vmatmul.f32.gmra.mxu0 0.0
    %v749 = vpop.f32.mrf.mxu0
    %v750 = vadd.f32 0.0, %v749
    %751 = vdwg.mxu0
    %752 = vmatpush.msra.mxu0 %v710
    %753 = vmatpush.msra.mxu0 %v706
    %754 = vmatpush.msra.mxu0 %v702
    %755 = vmatpush.msra.mxu0 %v698
    %756 = vmatpush.msra.mxu0 %v694
    %757 = vmatpush.msra.mxu0 %v690
    %758 = vmatpush.msra.mxu0 %v686
    %759 = vmatpush.msra.mxu0 %v682
    %760 = vmatpush.msra.mxu0 %v678
    %761 = vmatpush.msra.mxu0 %v674
    %762 = vmatpush.msra.mxu0 %v670
    %763 = vmatpush.msra.mxu0 %v666
    %764 = vmatpush.msra.mxu0 %v662
    %765 = vmatpush.msra.mxu0 %v658
    %766 = vmatpush.msra.mxu0 %v654
    %767 = vmatpush.msra.mxu0 %v650
    %768 = vmatmul.f32.gmra.mxu0 0.0
    %v769 = vpop.f32.mrf.mxu0
    %v770 = vadd.f32 0.0, %v769
    %771 = vdwg.mxu0
    %772 = vmatpush.msra.mxu0 %v711
    %773 = vmatpush.msra.mxu0 %v707
    %774 = vmatpush.msra.mxu0 %v703
    %775 = vmatpush.msra.mxu0 %v699
    %776 = vmatpush.msra.mxu0 %v695
    %777 = vmatpush.msra.mxu0 %v691
    %778 = vmatpush.msra.mxu0 %v687
    %779 = vmatpush.msra.mxu0 %v683
    %780 = vmatpush.msra.mxu0 %v679
    %781 = vmatpush.msra.mxu0 %v675
    %782 = vmatpush.msra.mxu0 %v671
    %783 = vmatpush.msra.mxu0 %v667
    %784 = vmatpush.msra.mxu0 %v663
    %785 = vmatpush.msra.mxu0 %v659
    %786 = vmatpush.msra.mxu0 %v655
    %787 = vmatpush.msra.mxu0 %v651
    %788 = vmatmul.f32.gmra.mxu0 0.0
    %v789 = vpop.f32.mrf.mxu0
    %v790 = vadd.f32 0.0, %v789
    %791 = vdwg.mxu0
    %v792 = vadd.f32 %v644, %v730
    %v793 = vadd.f32 %v645, %v750
    %v794 = vadd.f32 %v646, %v770
    %v795 = vadd.f32 %v647, %v790
    %s796 = scalar_lea.vmem [#allocation3], 224
    %v797 = vld [vmem:[%s796] sm:$0xff]
    %v798 = vld [vmem:[%s796 + $0x8] sm:$0xff]
    %v799 = vld [vmem:[%s796 + $0x10] sm:$0xff]
    %v800 = vld [vmem:[%s796 + $0x18] sm:$0xff]
    %v801 = vld [vmem:[#allocation11] sm:$0xff]
    %v802 = vld [vmem:[#allocation11 + $0x8] sm:$0xff]
    %v803 = vld [vmem:[#allocation11 + $0x10] sm:$0xff]
    %v804 = vld [vmem:[#allocation11 + $0x18] sm:$0xff]
    %v805 = vld [vmem:[#allocation11 + $0x20] sm:$0xff]
    %v806 = vld [vmem:[#allocation11 + $0x28] sm:$0xff]
    %v807 = vld [vmem:[#allocation11 + $0x30] sm:$0xff]
    %v808 = vld [vmem:[#allocation11 + $0x38] sm:$0xff]
    %v809 = vld [vmem:[#allocation11 + $0x40] sm:$0xff]
    %v810 = vld [vmem:[#allocation11 + $0x48] sm:$0xff]
    %v811 = vld [vmem:[#allocation11 + $0x50] sm:$0xff]
    %v812 = vld [vmem:[#allocation11 + $0x58] sm:$0xff]
    %v813 = vld [vmem:[#allocation11 + $0x60] sm:$0xff]
    %v814 = vld [vmem:[#allocation11 + $0x68] sm:$0xff]
    %v815 = vld [vmem:[#allocation11 + $0x70] sm:$0xff]
    %v816 = vld [vmem:[#allocation11 + $0x78] sm:$0xff]
    %v817 = vld [vmem:[#allocation11 + $0x80] sm:$0xff]
    %v818 = vld [vmem:[#allocation11 + $0x88] sm:$0xff]
    %v819 = vld [vmem:[#allocation11 + $0x90] sm:$0xff]
    %v820 = vld [vmem:[#allocation11 + $0x98] sm:$0xff]
    %v821 = vld [vmem:[#allocation11 + $0xa0] sm:$0xff]
    %v822 = vld [vmem:[#allocation11 + $0xa8] sm:$0xff]
    %v823 = vld [vmem:[#allocation11 + $0xb0] sm:$0xff]
    %v824 = vld [vmem:[#allocation11 + $0xb8] sm:$0xff]
    %v825 = vld [vmem:[#allocation11 + $0xc0] sm:$0xff]
    %v826 = vld [vmem:[#allocation11 + $0xc8] sm:$0xff]
    %v827 = vld [vmem:[#allocation11 + $0xd0] sm:$0xff]
    %v828 = vld [vmem:[#allocation11 + $0xd8] sm:$0xff]
    %v829 = vld [vmem:[#allocation11 + $0xe0] sm:$0xff]
    %v830 = vld [vmem:[#allocation11 + $0xe8] sm:$0xff]
    %v831 = vld [vmem:[#allocation11 + $0xf0] sm:$0xff]
    %v832 = vld [vmem:[#allocation11 + $0xf8] sm:$0xff]
    %v833 = vld [vmem:[#allocation11 + $0x100] sm:$0xff]
    %v834 = vld [vmem:[#allocation11 + $0x108] sm:$0xff]
    %v835 = vld [vmem:[#allocation11 + $0x110] sm:$0xff]
    %v836 = vld [vmem:[#allocation11 + $0x118] sm:$0xff]
    %v837 = vld [vmem:[#allocation11 + $0x120] sm:$0xff]
    %v838 = vld [vmem:[#allocation11 + $0x128] sm:$0xff]
    %v839 = vld [vmem:[#allocation11 + $0x130] sm:$0xff]
    %v840 = vld [vmem:[#allocation11 + $0x138] sm:$0xff]
    %v841 = vld [vmem:[#allocation11 + $0x140] sm:$0xff]
    %v842 = vld [vmem:[#allocation11 + $0x148] sm:$0xff]
    %v843 = vld [vmem:[#allocation11 + $0x150] sm:$0xff]
    %v844 = vld [vmem:[#allocation11 + $0x158] sm:$0xff]
    %v845 = vld [vmem:[#allocation11 + $0x160] sm:$0xff]
    %v846 = vld [vmem:[#allocation11 + $0x168] sm:$0xff]
    %v847 = vld [vmem:[#allocation11 + $0x170] sm:$0xff]
    %v848 = vld [vmem:[#allocation11 + $0x178] sm:$0xff]
    %v849 = vld [vmem:[#allocation11 + $0x180] sm:$0xff]
    %v850 = vld [vmem:[#allocation11 + $0x188] sm:$0xff]
    %v851 = vld [vmem:[#allocation11 + $0x190] sm:$0xff]
    %v852 = vld [vmem:[#allocation11 + $0x198] sm:$0xff]
    %v853 = vld [vmem:[#allocation11 + $0x1a0] sm:$0xff]
    %v854 = vld [vmem:[#allocation11 + $0x1a8] sm:$0xff]
    %v855 = vld [vmem:[#allocation11 + $0x1b0] sm:$0xff]
    %v856 = vld [vmem:[#allocation11 + $0x1b8] sm:$0xff]
    %v857 = vld [vmem:[#allocation11 + $0x1c0] sm:$0xff]
    %v858 = vld [vmem:[#allocation11 + $0x1c8] sm:$0xff]
    %v859 = vld [vmem:[#allocation11 + $0x1d0] sm:$0xff]
    %v860 = vld [vmem:[#allocation11 + $0x1d8] sm:$0xff]
    %v861 = vld [vmem:[#allocation11 + $0x1e0] sm:$0xff]
    %v862 = vld [vmem:[#allocation11 + $0x1e8] sm:$0xff]
    %v863 = vld [vmem:[#allocation11 + $0x1f0] sm:$0xff]
    %v864 = vld [vmem:[#allocation11 + $0x1f8] sm:$0xff]
    %865 = vmatpush.msra.mxu0 %v861
    %866 = vmatpush.msra.mxu0 %v857
    %867 = vmatpush.msra.mxu0 %v853
    %868 = vmatpush.msra.mxu0 %v849
    %869 = vmatpush.msra.mxu0 %v845
    %870 = vmatpush.msra.mxu0 %v841
    %871 = vmatpush.msra.mxu0 %v837
    %872 = vmatpush.msra.mxu0 %v833
    %873 = vmatpush.msra.mxu0 %v829
    %874 = vmatpush.msra.mxu0 %v825
    %875 = vmatpush.msra.mxu0 %v821
    %876 = vmatpush.msra.mxu0 %v817
    %877 = vmatpush.msra.mxu0 %v813
    %878 = vmatpush.msra.mxu0 %v809
    %879 = vmatpush.msra.mxu0 %v805
    %880 = vmatpush.msra.mxu0 %v801
    %881 = vmatmul.f32.gmra.mxu0 0.0
    %v882 = vpop.f32.mrf.mxu0
    %v883 = vadd.f32 0.0, %v882
    %884 = vdwg.mxu0
    %885 = vmatpush.msra.mxu0 %v862
    %886 = vmatpush.msra.mxu0 %v858
    %887 = vmatpush.msra.mxu0 %v854
    %888 = vmatpush.msra.mxu0 %v850
    %889 = vmatpush.msra.mxu0 %v846
    %890 = vmatpush.msra.mxu0 %v842
    %891 = vmatpush.msra.mxu0 %v838
    %892 = vmatpush.msra.mxu0 %v834
    %893 = vmatpush.msra.mxu0 %v830
    %894 = vmatpush.msra.mxu0 %v826
    %895 = vmatpush.msra.mxu0 %v822
    %896 = vmatpush.msra.mxu0 %v818
    %897 = vmatpush.msra.mxu0 %v814
    %898 = vmatpush.msra.mxu0 %v810
    %899 = vmatpush.msra.mxu0 %v806
    %900 = vmatpush.msra.mxu0 %v802
    %901 = vmatmul.f32.gmra.mxu0 0.0
    %v902 = vpop.f32.mrf.mxu0
    %v903 = vadd.f32 0.0, %v902
    %904 = vdwg.mxu0
    %905 = vmatpush.msra.mxu0 %v863
    %906 = vmatpush.msra.mxu0 %v859
    %907 = vmatpush.msra.mxu0 %v855
    %908 = vmatpush.msra.mxu0 %v851
    %909 = vmatpush.msra.mxu0 %v847
    %910 = vmatpush.msra.mxu0 %v843
    %911 = vmatpush.msra.mxu0 %v839
    %912 = vmatpush.msra.mxu0 %v835
    %913 = vmatpush.msra.mxu0 %v831
    %914 = vmatpush.msra.mxu0 %v827
    %915 = vmatpush.msra.mxu0 %v823
    %916 = vmatpush.msra.mxu0 %v819
    %917 = vmatpush.msra.mxu0 %v815
    %918 = vmatpush.msra.mxu0 %v811
    %919 = vmatpush.msra.mxu0 %v807
    %920 = vmatpush.msra.mxu0 %v803
    %921 = vmatmul.f32.gmra.mxu0 0.0
    %v922 = vpop.f32.mrf.mxu0
    %v923 = vadd.f32 0.0, %v922
    %924 = vdwg.mxu0
    %925 = vmatpush.msra.mxu0 %v864
    %926 = vmatpush.msra.mxu0 %v860
    %927 = vmatpush.msra.mxu0 %v856
    %928 = vmatpush.msra.mxu0 %v852
    %929 = vmatpush.msra.mxu0 %v848
    %930 = vmatpush.msra.mxu0 %v844
    %931 = vmatpush.msra.mxu0 %v840
    %932 = vmatpush.msra.mxu0 %v836
    %933 = vmatpush.msra.mxu0 %v832
    %934 = vmatpush.msra.mxu0 %v828
    %935 = vmatpush.msra.mxu0 %v824
    %936 = vmatpush.msra.mxu0 %v820
    %937 = vmatpush.msra.mxu0 %v816
    %938 = vmatpush.msra.mxu0 %v812
    %939 = vmatpush.msra.mxu0 %v808
    %940 = vmatpush.msra.mxu0 %v804
    %941 = vmatmul.f32.gmra.mxu0 0.0
    %v942 = vpop.f32.mrf.mxu0
    %v943 = vadd.f32 0.0, %v942
    %944 = vdwg.mxu0
    %v945 = vadd.f32 %v797, %v883
    %v946 = vadd.f32 %v798, %v903
    %v947 = vadd.f32 %v799, %v923
    %v948 = vadd.f32 %v800, %v943
    %v949 = vxor.u32 %v792, 2147483648
    %v950 = vmul.f32 %v949, 1.442695
    %v951 = vpow.pop %v950
    %v952 = vadd.f32 %v951, 1.0
    %v953 = vrcp.pop %v952
    %v954 = vmul.f32 %v952, %v953
    %v955 = vsub.f32 1.0, %v954
    %v956 = vmul.f32 %v953, %v955
    %v957 = vadd.f32 %v953, %v956
    %vm958 = vweird.f32 %v952
    %vm959 = vweird.f32 %v953
    %vm960 = vmor %vm958, %vm959
    %v961 = vsel %vm960, %v953, %v957
    %v962 = vand.u32 2147483647, %v952
    %vm963 = vcmp.eq.f32.partialorder %v962, 8.507059e+37
    %v964 = vand.u32 %v952, 2147483648
    %v965 = vor.u32 1.1754944e-38, %v964
    %v966 = vsel %vm963, %v965, %v961
    %v967 = vmul.f32 1.0, %v966
    %v968 = vxor.u32 %v793, 2147483648
    %v969 = vmul.f32 %v968, 1.442695
    %v970 = vpow.pop %v969
    %v971 = vadd.f32 %v970, 1.0
    %v972 = vrcp.pop %v971
    %v973 = vmul.f32 %v971, %v972
    %v974 = vsub.f32 1.0, %v973
    %v975 = vmul.f32 %v972, %v974
    %v976 = vadd.f32 %v972, %v975
    %vm977 = vweird.f32 %v971
    %vm978 = vweird.f32 %v972
    %vm979 = vmor %vm977, %vm978
    %v980 = vsel %vm979, %v972, %v976
    %v981 = vand.u32 2147483647, %v971
    %vm982 = vcmp.eq.f32.partialorder %v981, 8.507059e+37
    %v983 = vand.u32 %v971, 2147483648
    %v984 = vor.u32 1.1754944e-38, %v983
    %v985 = vsel %vm982, %v984, %v980
    %v986 = vmul.f32 1.0, %v985
    %v987 = vtanh.pop %v794
    %v988 = vxor.u32 %v795, 2147483648
    %v989 = vmul.f32 %v988, 1.442695
    %v990 = vpow.pop %v989
    %v991 = vadd.f32 %v990, 1.0
    %v992 = vrcp.pop %v991
    %v993 = vmul.f32 %v991, %v992
    %v994 = vsub.f32 1.0, %v993
    %v995 = vmul.f32 %v992, %v994
    %v996 = vadd.f32 %v992, %v995
    %vm997 = vweird.f32 %v991
    %vm998 = vweird.f32 %v992
    %vm999 = vmor %vm997, %vm998
    %v1000 = vsel %vm999, %v992, %v996
    %v1001 = vand.u32 2147483647, %v991
    %vm1002 = vcmp.eq.f32.partialorder %v1001, 8.507059e+37
    %v1003 = vand.u32 %v991, 2147483648
    %v1004 = vor.u32 1.1754944e-38, %v1003
    %v1005 = vsel %vm1002, %v1004, %v1000
    %v1006 = vmul.f32 1.0, %v1005
    %v1007 = vmul.f32 %v986, 0.0
    %v1008 = vmul.f32 %v967, %v987
    %v1009 = vadd.f32 %v1007, %v1008
    %v1010 = vtanh.pop %v1009
    %v1011 = vmul.f32 %v1006, %v1010
    %v1012 = vxor.u32 %v945, 2147483648
    %v1013 = vmul.f32 %v1012, 1.442695
    %v1014 = vpow.pop %v1013
    %v1015 = vadd.f32 %v1014, 1.0
    %v1016 = vrcp.pop %v1015
    %v1017 = vmul.f32 %v1015, %v1016
    %v1018 = vsub.f32 1.0, %v1017
    %v1019 = vmul.f32 %v1016, %v1018
    %v1020 = vadd.f32 %v1016, %v1019
    %vm1021 = vweird.f32 %v1015
    %vm1022 = vweird.f32 %v1016
    %vm1023 = vmor %vm1021, %vm1022
    %v1024 = vsel %vm1023, %v1016, %v1020
    %v1025 = vand.u32 2147483647, %v1015
    %vm1026 = vcmp.eq.f32.partialorder %v1025, 8.507059e+37
    %v1027 = vand.u32 %v1015, 2147483648
    %v1028 = vor.u32 1.1754944e-38, %v1027
    %v1029 = vsel %vm1026, %v1028, %v1024
    %v1030 = vmul.f32 1.0, %v1029
    %v1031 = vxor.u32 %v946, 2147483648
    %v1032 = vmul.f32 %v1031, 1.442695
    %v1033 = vpow.pop %v1032
    %v1034 = vadd.f32 %v1033, 1.0
    %v1035 = vrcp.pop %v1034
    %v1036 = vmul.f32 %v1034, %v1035
    %v1037 = vsub.f32 1.0, %v1036
    %v1038 = vmul.f32 %v1035, %v1037
    %v1039 = vadd.f32 %v1035, %v1038
    %vm1040 = vweird.f32 %v1034
    %vm1041 = vweird.f32 %v1035
    %vm1042 = vmor %vm1040, %vm1041
    %v1043 = vsel %vm1042, %v1035, %v1039
    %v1044 = vand.u32 2147483647, %v1034
    %vm1045 = vcmp.eq.f32.partialorder %v1044, 8.507059e+37
    %v1046 = vand.u32 %v1034, 2147483648
    %v1047 = vor.u32 1.1754944e-38, %v1046
    %v1048 = vsel %vm1045, %v1047, %v1043
    %v1049 = vmul.f32 1.0, %v1048
    %v1050 = vtanh.pop %v947
    %v1051 = vxor.u32 %v948, 2147483648
    %v1052 = vmul.f32 %v1051, 1.442695
    %v1053 = vpow.pop %v1052
    %v1054 = vadd.f32 %v1053, 1.0
    %v1055 = vrcp.pop %v1054
    %v1056 = vmul.f32 %v1054, %v1055
    %v1057 = vsub.f32 1.0, %v1056
    %v1058 = vmul.f32 %v1055, %v1057
    %v1059 = vadd.f32 %v1055, %v1058
    %vm1060 = vweird.f32 %v1054
    %vm1061 = vweird.f32 %v1055
    %vm1062 = vmor %vm1060, %vm1061
    %v1063 = vsel %vm1062, %v1055, %v1059
    %v1064 = vand.u32 2147483647, %v1054
    %vm1065 = vcmp.eq.f32.partialorder %v1064, 8.507059e+37
    %v1066 = vand.u32 %v1054, 2147483648
    %v1067 = vor.u32 1.1754944e-38, %v1066
    %v1068 = vsel %vm1065, %v1067, %v1063
    %v1069 = vmul.f32 1.0, %v1068
    %v1070 = vmul.f32 %v1049, 0.0
    %v1071 = vmul.f32 %v1030, %v1050
    %v1072 = vadd.f32 %v1070, %v1071
    %v1073 = vtanh.pop %v1072
    %v1074 = vmul.f32 %v1069, %v1073
    %v1075 = vld [vmem:[#allocation4] sm:$0xff]
    %v1076 = vmul.f32 %v1075, %v1011
    %v1077 = vadd.f32 %v1076, 0.0
    %s1078 = scalar_lea.vmem [#allocation4], 56
    %v1079 = vld [vmem:[%s1078] sm:$0xff]
    %v1080 = vmul.f32 %v1079, %v1074
    %v1081 = vadd.f32 %v1080, 0.0
    %s1082 = scalar_lea.vmem [#allocation2], 32
    %v1083 = vld [vmem:[%s1082] sm:$0xff]
    %v1084 = vld [vmem:[%s1082 + $0x8] sm:$0xff]
    %v1085 = vld [vmem:[%s1082 + $0x10] sm:$0xff]
    %v1086 = vld [vmem:[%s1082 + $0x18] sm:$0xff]
    %1087 = vmatpush.msra.mxu0 %v708
    %1088 = vmatpush.msra.mxu0 %v704
    %1089 = vmatpush.msra.mxu0 %v700
    %1090 = vmatpush.msra.mxu0 %v696
    %1091 = vmatpush.msra.mxu0 %v692
    %1092 = vmatpush.msra.mxu0 %v688
    %1093 = vmatpush.msra.mxu0 %v684
    %1094 = vmatpush.msra.mxu0 %v680
    %1095 = vmatpush.msra.mxu0 %v676
    %1096 = vmatpush.msra.mxu0 %v672
    %1097 = vmatpush.msra.mxu0 %v668
    %1098 = vmatpush.msra.mxu0 %v664
    %1099 = vmatpush.msra.mxu0 %v660
    %1100 = vmatpush.msra.mxu0 %v656
    %1101 = vmatpush.msra.mxu0 %v652
    %1102 = vmatpush.msra.mxu0 %v648
    %1103 = vmatmul.f32.gmra.mxu0 %v1011
    %v1104 = vpop.f32.mrf.mxu0
    %v1105 = vadd.f32 0.0, %v1104
    %1106 = vdwg.mxu0
    %1107 = vmatpush.msra.mxu0 %v709
    %1108 = vmatpush.msra.mxu0 %v705
    %1109 = vmatpush.msra.mxu0 %v701
    %1110 = vmatpush.msra.mxu0 %v697
    %1111 = vmatpush.msra.mxu0 %v693
    %1112 = vmatpush.msra.mxu0 %v689
    %1113 = vmatpush.msra.mxu0 %v685
    %1114 = vmatpush.msra.mxu0 %v681
    %1115 = vmatpush.msra.mxu0 %v677
    %1116 = vmatpush.msra.mxu0 %v673
    %1117 = vmatpush.msra.mxu0 %v669
    %1118 = vmatpush.msra.mxu0 %v665
    %1119 = vmatpush.msra.mxu0 %v661
    %1120 = vmatpush.msra.mxu0 %v657
    %1121 = vmatpush.msra.mxu0 %v653
    %1122 = vmatpush.msra.mxu0 %v649
    %1123 = vmatmul.f32.gmra.mxu0 %v1011
    %v1124 = vpop.f32.mrf.mxu0
    %v1125 = vadd.f32 0.0, %v1124
    %1126 = vdwg.mxu0
    %1127 = vmatpush.msra.mxu0 %v710
    %1128 = vmatpush.msra.mxu0 %v706
    %1129 = vmatpush.msra.mxu0 %v702
    %1130 = vmatpush.msra.mxu0 %v698
    %1131 = vmatpush.msra.mxu0 %v694
    %1132 = vmatpush.msra.mxu0 %v690
    %1133 = vmatpush.msra.mxu0 %v686
    %1134 = vmatpush.msra.mxu0 %v682
    %1135 = vmatpush.msra.mxu0 %v678
    %1136 = vmatpush.msra.mxu0 %v674
    %1137 = vmatpush.msra.mxu0 %v670
    %1138 = vmatpush.msra.mxu0 %v666
    %1139 = vmatpush.msra.mxu0 %v662
    %1140 = vmatpush.msra.mxu0 %v658
    %1141 = vmatpush.msra.mxu0 %v654
    %1142 = vmatpush.msra.mxu0 %v650
    %1143 = vmatmul.f32.gmra.mxu0 %v1011
    %v1144 = vpop.f32.mrf.mxu0
    %v1145 = vadd.f32 0.0, %v1144
    %1146 = vdwg.mxu0
    %1147 = vmatpush.msra.mxu0 %v711
    %1148 = vmatpush.msra.mxu0 %v707
    %1149 = vmatpush.msra.mxu0 %v703
    %1150 = vmatpush.msra.mxu0 %v699
    %1151 = vmatpush.msra.mxu0 %v695
    %1152 = vmatpush.msra.mxu0 %v691
    %1153 = vmatpush.msra.mxu0 %v687
    %1154 = vmatpush.msra.mxu0 %v683
    %1155 = vmatpush.msra.mxu0 %v679
    %1156 = vmatpush.msra.mxu0 %v675
    %1157 = vmatpush.msra.mxu0 %v671
    %1158 = vmatpush.msra.mxu0 %v667
    %1159 = vmatpush.msra.mxu0 %v663
    %1160 = vmatpush.msra.mxu0 %v659
    %1161 = vmatpush.msra.mxu0 %v655
    %1162 = vmatpush.msra.mxu0 %v651
    %1163 = vmatmul.f32.gmra.mxu0 %v1011
    %v1164 = vpop.f32.mrf.mxu0
    %v1165 = vadd.f32 0.0, %v1164
    %1166 = vdwg.mxu0
    %v1167 = vadd.f32 %v1083, %v1105
    %v1168 = vadd.f32 %v1084, %v1125
    %v1169 = vadd.f32 %v1085, %v1145
    %v1170 = vadd.f32 %v1086, %v1165
    %s1171 = scalar_lea.vmem [#allocation3], 192
    %v1172 = vld [vmem:[%s1171] sm:$0xff]
    %v1173 = vld [vmem:[%s1171 + $0x8] sm:$0xff]
    %v1174 = vld [vmem:[%s1171 + $0x10] sm:$0xff]
    %v1175 = vld [vmem:[%s1171 + $0x18] sm:$0xff]
    %1176 = vmatpush.msra.mxu0 %v861
    %1177 = vmatpush.msra.mxu0 %v857
    %1178 = vmatpush.msra.mxu0 %v853
    %1179 = vmatpush.msra.mxu0 %v849
    %1180 = vmatpush.msra.mxu0 %v845
    %1181 = vmatpush.msra.mxu0 %v841
    %1182 = vmatpush.msra.mxu0 %v837
    %1183 = vmatpush.msra.mxu0 %v833
    %1184 = vmatpush.msra.mxu0 %v829
    %1185 = vmatpush.msra.mxu0 %v825
    %1186 = vmatpush.msra.mxu0 %v821
    %1187 = vmatpush.msra.mxu0 %v817
    %1188 = vmatpush.msra.mxu0 %v813
    %1189 = vmatpush.msra.mxu0 %v809
    %1190 = vmatpush.msra.mxu0 %v805
    %1191 = vmatpush.msra.mxu0 %v801
    %1192 = vmatmul.f32.gmra.mxu0 %v1074
    %v1193 = vpop.f32.mrf.mxu0
    %v1194 = vadd.f32 0.0, %v1193
    %1195 = vdwg.mxu0
    %1196 = vmatpush.msra.mxu0 %v862
    %1197 = vmatpush.msra.mxu0 %v858
    %1198 = vmatpush.msra.mxu0 %v854
    %1199 = vmatpush.msra.mxu0 %v850
    %1200 = vmatpush.msra.mxu0 %v846
    %1201 = vmatpush.msra.mxu0 %v842
    %1202 = vmatpush.msra.mxu0 %v838
    %1203 = vmatpush.msra.mxu0 %v834
    %1204 = vmatpush.msra.mxu0 %v830
    %1205 = vmatpush.msra.mxu0 %v826
    %1206 = vmatpush.msra.mxu0 %v822
    %1207 = vmatpush.msra.mxu0 %v818
    %1208 = vmatpush.msra.mxu0 %v814
    %1209 = vmatpush.msra.mxu0 %v810
    %1210 = vmatpush.msra.mxu0 %v806
    %1211 = vmatpush.msra.mxu0 %v802
    %1212 = vmatmul.f32.gmra.mxu0 %v1074
    %v1213 = vpop.f32.mrf.mxu0
    %v1214 = vadd.f32 0.0, %v1213
    %1215 = vdwg.mxu0
    %1216 = vmatpush.msra.mxu0 %v863
    %1217 = vmatpush.msra.mxu0 %v859
    %1218 = vmatpush.msra.mxu0 %v855
    %1219 = vmatpush.msra.mxu0 %v851
    %1220 = vmatpush.msra.mxu0 %v847
    %1221 = vmatpush.msra.mxu0 %v843
    %1222 = vmatpush.msra.mxu0 %v839
    %1223 = vmatpush.msra.mxu0 %v835
    %1224 = vmatpush.msra.mxu0 %v831
    %1225 = vmatpush.msra.mxu0 %v827
    %1226 = vmatpush.msra.mxu0 %v823
    %1227 = vmatpush.msra.mxu0 %v819
    %1228 = vmatpush.msra.mxu0 %v815
    %1229 = vmatpush.msra.mxu0 %v811
    %1230 = vmatpush.msra.mxu0 %v807
    %1231 = vmatpush.msra.mxu0 %v803
    %1232 = vmatmul.f32.gmra.mxu0 %v1074
    %v1233 = vpop.f32.mrf.mxu0
    %v1234 = vadd.f32 0.0, %v1233
    %1235 = vdwg.mxu0
    %1236 = vmatpush.msra.mxu0 %v864
    %1237 = vmatpush.msra.mxu0 %v860
    %1238 = vmatpush.msra.mxu0 %v856
    %1239 = vmatpush.msra.mxu0 %v852
    %1240 = vmatpush.msra.mxu0 %v848
    %1241 = vmatpush.msra.mxu0 %v844
    %1242 = vmatpush.msra.mxu0 %v840
    %1243 = vmatpush.msra.mxu0 %v836
    %1244 = vmatpush.msra.mxu0 %v832
    %1245 = vmatpush.msra.mxu0 %v828
    %1246 = vmatpush.msra.mxu0 %v824
    %1247 = vmatpush.msra.mxu0 %v820
    %1248 = vmatpush.msra.mxu0 %v816
    %1249 = vmatpush.msra.mxu0 %v812
    %1250 = vmatpush.msra.mxu0 %v808
    %1251 = vmatpush.msra.mxu0 %v804
    %1252 = vmatmul.f32.gmra.mxu0 %v1074
    %v1253 = vpop.f32.mrf.mxu0
    %v1254 = vadd.f32 0.0, %v1253
    %1255 = vdwg.mxu0
    %v1256 = vadd.f32 %v1172, %v1194
    %v1257 = vadd.f32 %v1173, %v1214
    %v1258 = vadd.f32 %v1174, %v1234
    %v1259 = vadd.f32 %v1175, %v1254
    %v1260 = vxor.u32 %v1167, 2147483648
    %v1261 = vmul.f32 %v1260, 1.442695
    %v1262 = vpow.pop %v1261
    %v1263 = vadd.f32 %v1262, 1.0
    %v1264 = vrcp.pop %v1263
    %v1265 = vmul.f32 %v1263, %v1264
    %v1266 = vsub.f32 1.0, %v1265
    %v1267 = vmul.f32 %v1264, %v1266
    %v1268 = vadd.f32 %v1264, %v1267
    %vm1269 = vweird.f32 %v1263
    %vm1270 = vweird.f32 %v1264
    %vm1271 = vmor %vm1269, %vm1270
    %v1272 = vsel %vm1271, %v1264, %v1268
    %v1273 = vand.u32 2147483647, %v1263
    %vm1274 = vcmp.eq.f32.partialorder %v1273, 8.507059e+37
    %v1275 = vand.u32 %v1263, 2147483648
    %v1276 = vor.u32 1.1754944e-38, %v1275
    %v1277 = vsel %vm1274, %v1276, %v1272
    %v1278 = vmul.f32 1.0, %v1277
    %v1279 = vxor.u32 %v1168, 2147483648
    %v1280 = vmul.f32 %v1279, 1.442695
    %v1281 = vpow.pop %v1280
    %v1282 = vadd.f32 %v1281, 1.0
    %v1283 = vrcp.pop %v1282
    %v1284 = vmul.f32 %v1282, %v1283
    %v1285 = vsub.f32 1.0, %v1284
    %v1286 = vmul.f32 %v1283, %v1285
    %v1287 = vadd.f32 %v1283, %v1286
    %vm1288 = vweird.f32 %v1282
    %vm1289 = vweird.f32 %v1283
    %vm1290 = vmor %vm1288, %vm1289
    %v1291 = vsel %vm1290, %v1283, %v1287
    %v1292 = vand.u32 2147483647, %v1282
    %vm1293 = vcmp.eq.f32.partialorder %v1292, 8.507059e+37
    %v1294 = vand.u32 %v1282, 2147483648
    %v1295 = vor.u32 1.1754944e-38, %v1294
    %v1296 = vsel %vm1293, %v1295, %v1291
    %v1297 = vmul.f32 1.0, %v1296
    %v1298 = vtanh.pop %v1169
    %v1299 = vxor.u32 %v1170, 2147483648
    %v1300 = vmul.f32 %v1299, 1.442695
    %v1301 = vpow.pop %v1300
    %v1302 = vadd.f32 %v1301, 1.0
    %v1303 = vrcp.pop %v1302
    %v1304 = vmul.f32 %v1302, %v1303
    %v1305 = vsub.f32 1.0, %v1304
    %v1306 = vmul.f32 %v1303, %v1305
    %v1307 = vadd.f32 %v1303, %v1306
    %vm1308 = vweird.f32 %v1302
    %vm1309 = vweird.f32 %v1303
    %vm1310 = vmor %vm1308, %vm1309
    %v1311 = vsel %vm1310, %v1303, %v1307
    %v1312 = vand.u32 2147483647, %v1302
    %vm1313 = vcmp.eq.f32.partialorder %v1312, 8.507059e+37
    %v1314 = vand.u32 %v1302, 2147483648
    %v1315 = vor.u32 1.1754944e-38, %v1314
    %v1316 = vsel %vm1313, %v1315, %v1311
    %v1317 = vmul.f32 1.0, %v1316
    %v1318 = vmul.f32 %v1297, %v1009
    %v1319 = vmul.f32 %v1278, %v1298
    %v1320 = vadd.f32 %v1318, %v1319
    %v1321 = vtanh.pop %v1320
    %v1322 = vmul.f32 %v1317, %v1321
    %v1323 = vxor.u32 %v1256, 2147483648
    %v1324 = vmul.f32 %v1323, 1.442695
    %v1325 = vpow.pop %v1324
    %v1326 = vadd.f32 %v1325, 1.0
    %v1327 = vrcp.pop %v1326
    %v1328 = vmul.f32 %v1326, %v1327
    %v1329 = vsub.f32 1.0, %v1328
    %v1330 = vmul.f32 %v1327, %v1329
    %v1331 = vadd.f32 %v1327, %v1330
    %vm1332 = vweird.f32 %v1326
    %vm1333 = vweird.f32 %v1327
    %vm1334 = vmor %vm1332, %vm1333
    %v1335 = vsel %vm1334, %v1327, %v1331
    %v1336 = vand.u32 2147483647, %v1326
    %vm1337 = vcmp.eq.f32.partialorder %v1336, 8.507059e+37
    %v1338 = vand.u32 %v1326, 2147483648
    %v1339 = vor.u32 1.1754944e-38, %v1338
    %v1340 = vsel %vm1337, %v1339, %v1335
    %v1341 = vmul.f32 1.0, %v1340
    %v1342 = vxor.u32 %v1257, 2147483648
    %v1343 = vmul.f32 %v1342, 1.442695
    %v1344 = vpow.pop %v1343
    %v1345 = vadd.f32 %v1344, 1.0
    %v1346 = vrcp.pop %v1345
    %v1347 = vmul.f32 %v1345, %v1346
    %v1348 = vsub.f32 1.0, %v1347
    %v1349 = vmul.f32 %v1346, %v1348
    %v1350 = vadd.f32 %v1346, %v1349
    %vm1351 = vweird.f32 %v1345
    %vm1352 = vweird.f32 %v1346
    %vm1353 = vmor %vm1351, %vm1352
    %v1354 = vsel %vm1353, %v1346, %v1350
    %v1355 = vand.u32 2147483647, %v1345
    %vm1356 = vcmp.eq.f32.partialorder %v1355, 8.507059e+37
    %v1357 = vand.u32 %v1345, 2147483648
    %v1358 = vor.u32 1.1754944e-38, %v1357
    %v1359 = vsel %vm1356, %v1358, %v1354
    %v1360 = vmul.f32 1.0, %v1359
    %v1361 = vtanh.pop %v1258
    %v1362 = vxor.u32 %v1259, 2147483648
    %v1363 = vmul.f32 %v1362, 1.442695
    %v1364 = vpow.pop %v1363
    %v1365 = vadd.f32 %v1364, 1.0
    %v1366 = vrcp.pop %v1365
    %v1367 = vmul.f32 %v1365, %v1366
    %v1368 = vsub.f32 1.0, %v1367
    %v1369 = vmul.f32 %v1366, %v1368
    %v1370 = vadd.f32 %v1366, %v1369
    %vm1371 = vweird.f32 %v1365
    %vm1372 = vweird.f32 %v1366
    %vm1373 = vmor %vm1371, %vm1372
    %v1374 = vsel %vm1373, %v1366, %v1370
    %v1375 = vand.u32 2147483647, %v1365
    %vm1376 = vcmp.eq.f32.partialorder %v1375, 8.507059e+37
    %v1377 = vand.u32 %v1365, 2147483648
    %v1378 = vor.u32 1.1754944e-38, %v1377
    %v1379 = vsel %vm1376, %v1378, %v1374
    %v1380 = vmul.f32 1.0, %v1379
    %v1381 = vmul.f32 %v1360, %v1072
    %v1382 = vmul.f32 %v1341, %v1361
    %v1383 = vadd.f32 %v1381, %v1382
    %v1384 = vtanh.pop %v1383
    %v1385 = vmul.f32 %v1380, %v1384
    %s1386 = scalar_lea.vmem [#allocation4], 8
    %v1387 = vld [vmem:[%s1386] sm:$0xff]
    %v1388 = vmul.f32 %v1387, %v1322
    %v1389 = vadd.f32 %v1077, %v1388
    %s1390 = scalar_lea.vmem [#allocation4], 48
    %v1391 = vld [vmem:[%s1390] sm:$0xff]
    %v1392 = vmul.f32 %v1391, %v1385
    %v1393 = vadd.f32 %v1081, %v1392
    %s1394 = scalar_lea.vmem [#allocation2], 64
    %v1395 = vld [vmem:[%s1394] sm:$0xff]
    %v1396 = vld [vmem:[%s1394 + $0x8] sm:$0xff]
    %v1397 = vld [vmem:[%s1394 + $0x10] sm:$0xff]
    %v1398 = vld [vmem:[%s1394 + $0x18] sm:$0xff]
    %1399 = vmatpush.msra.mxu0 %v708
    %1400 = vmatpush.msra.mxu0 %v704
    %1401 = vmatpush.msra.mxu0 %v700
    %1402 = vmatpush.msra.mxu0 %v696
    %1403 = vmatpush.msra.mxu0 %v692
    %1404 = vmatpush.msra.mxu0 %v688
    %1405 = vmatpush.msra.mxu0 %v684
    %1406 = vmatpush.msra.mxu0 %v680
    %1407 = vmatpush.msra.mxu0 %v676
    %1408 = vmatpush.msra.mxu0 %v672
    %1409 = vmatpush.msra.mxu0 %v668
    %1410 = vmatpush.msra.mxu0 %v664
    %1411 = vmatpush.msra.mxu0 %v660
    %1412 = vmatpush.msra.mxu0 %v656
    %1413 = vmatpush.msra.mxu0 %v652
    %1414 = vmatpush.msra.mxu0 %v648
    %1415 = vmatmul.f32.gmra.mxu0 %v1322
    %v1416 = vpop.f32.mrf.mxu0
    %v1417 = vadd.f32 0.0, %v1416
    %1418 = vdwg.mxu0
    %1419 = vmatpush.msra.mxu0 %v709
    %1420 = vmatpush.msra.mxu0 %v705
    %1421 = vmatpush.msra.mxu0 %v701
    %1422 = vmatpush.msra.mxu0 %v697
    %1423 = vmatpush.msra.mxu0 %v693
    %1424 = vmatpush.msra.mxu0 %v689
    %1425 = vmatpush.msra.mxu0 %v685
    %1426 = vmatpush.msra.mxu0 %v681
    %1427 = vmatpush.msra.mxu0 %v677
    %1428 = vmatpush.msra.mxu0 %v673
    %1429 = vmatpush.msra.mxu0 %v669
    %1430 = vmatpush.msra.mxu0 %v665
    %1431 = vmatpush.msra.mxu0 %v661
    %1432 = vmatpush.msra.mxu0 %v657
    %1433 = vmatpush.msra.mxu0 %v653
    %1434 = vmatpush.msra.mxu0 %v649
    %1435 = vmatmul.f32.gmra.mxu0 %v1322
    %v1436 = vpop.f32.mrf.mxu0
    %v1437 = vadd.f32 0.0, %v1436
    %1438 = vdwg.mxu0
    %1439 = vmatpush.msra.mxu0 %v710
    %1440 = vmatpush.msra.mxu0 %v706
    %1441 = vmatpush.msra.mxu0 %v702
    %1442 = vmatpush.msra.mxu0 %v698
    %1443 = vmatpush.msra.mxu0 %v694
    %1444 = vmatpush.msra.mxu0 %v690
    %1445 = vmatpush.msra.mxu0 %v686
    %1446 = vmatpush.msra.mxu0 %v682
    %1447 = vmatpush.msra.mxu0 %v678
    %1448 = vmatpush.msra.mxu0 %v674
    %1449 = vmatpush.msra.mxu0 %v670
    %1450 = vmatpush.msra.mxu0 %v666
    %1451 = vmatpush.msra.mxu0 %v662
    %1452 = vmatpush.msra.mxu0 %v658
    %1453 = vmatpush.msra.mxu0 %v654
    %1454 = vmatpush.msra.mxu0 %v650
    %1455 = vmatmul.f32.gmra.mxu0 %v1322
    %v1456 = vpop.f32.mrf.mxu0
    %v1457 = vadd.f32 0.0, %v1456
    %1458 = vdwg.mxu0
    %1459 = vmatpush.msra.mxu0 %v711
    %1460 = vmatpush.msra.mxu0 %v707
    %1461 = vmatpush.msra.mxu0 %v703
    %1462 = vmatpush.msra.mxu0 %v699
    %1463 = vmatpush.msra.mxu0 %v695
    %1464 = vmatpush.msra.mxu0 %v691
    %1465 = vmatpush.msra.mxu0 %v687
    %1466 = vmatpush.msra.mxu0 %v683
    %1467 = vmatpush.msra.mxu0 %v679
    %1468 = vmatpush.msra.mxu0 %v675
    %1469 = vmatpush.msra.mxu0 %v671
    %1470 = vmatpush.msra.mxu0 %v667
    %1471 = vmatpush.msra.mxu0 %v663
    %1472 = vmatpush.msra.mxu0 %v659
    %1473 = vmatpush.msra.mxu0 %v655
    %1474 = vmatpush.msra.mxu0 %v651
    %1475 = vmatmul.f32.gmra.mxu0 %v1322
    %v1476 = vpop.f32.mrf.mxu0
    %v1477 = vadd.f32 0.0, %v1476
    %1478 = vdwg.mxu0
    %v1479 = vadd.f32 %v1395, %v1417
    %v1480 = vadd.f32 %v1396, %v1437
    %v1481 = vadd.f32 %v1397, %v1457
    %v1482 = vadd.f32 %v1398, %v1477
    %s1483 = scalar_lea.vmem [#allocation3], 160
    %v1484 = vld [vmem:[%s1483] sm:$0xff]
    %v1485 = vld [vmem:[%s1483 + $0x8] sm:$0xff]
    %v1486 = vld [vmem:[%s1483 + $0x10] sm:$0xff]
    %v1487 = vld [vmem:[%s1483 + $0x18] sm:$0xff]
    %1488 = vmatpush.msra.mxu0 %v861
    %1489 = vmatpush.msra.mxu0 %v857
    %1490 = vmatpush.msra.mxu0 %v853
    %1491 = vmatpush.msra.mxu0 %v849
    %1492 = vmatpush.msra.mxu0 %v845
    %1493 = vmatpush.msra.mxu0 %v841
    %1494 = vmatpush.msra.mxu0 %v837
    %1495 = vmatpush.msra.mxu0 %v833
    %1496 = vmatpush.msra.mxu0 %v829
    %1497 = vmatpush.msra.mxu0 %v825
    %1498 = vmatpush.msra.mxu0 %v821
    %1499 = vmatpush.msra.mxu0 %v817
    %1500 = vmatpush.msra.mxu0 %v813
    %1501 = vmatpush.msra.mxu0 %v809
    %1502 = vmatpush.msra.mxu0 %v805
    %1503 = vmatpush.msra.mxu0 %v801
    %1504 = vmatmul.f32.gmra.mxu0 %v1385
    %v1505 = vpop.f32.mrf.mxu0
    %v1506 = vadd.f32 0.0, %v1505
    %1507 = vdwg.mxu0
    %1508 = vmatpush.msra.mxu0 %v862
    %1509 = vmatpush.msra.mxu0 %v858
    %1510 = vmatpush.msra.mxu0 %v854
    %1511 = vmatpush.msra.mxu0 %v850
    %1512 = vmatpush.msra.mxu0 %v846
    %1513 = vmatpush.msra.mxu0 %v842
    %1514 = vmatpush.msra.mxu0 %v838
    %1515 = vmatpush.msra.mxu0 %v834
    %1516 = vmatpush.msra.mxu0 %v830
    %1517 = vmatpush.msra.mxu0 %v826
    %1518 = vmatpush.msra.mxu0 %v822
    %1519 = vmatpush.msra.mxu0 %v818
    %1520 = vmatpush.msra.mxu0 %v814
    %1521 = vmatpush.msra.mxu0 %v810
    %1522 = vmatpush.msra.mxu0 %v806
    %1523 = vmatpush.msra.mxu0 %v802
    %1524 = vmatmul.f32.gmra.mxu0 %v1385
    %v1525 = vpop.f32.mrf.mxu0
    %v1526 = vadd.f32 0.0, %v1525
    %1527 = vdwg.mxu0
    %1528 = vmatpush.msra.mxu0 %v863
    %1529 = vmatpush.msra.mxu0 %v859
    %1530 = vmatpush.msra.mxu0 %v855
    %1531 = vmatpush.msra.mxu0 %v851
    %1532 = vmatpush.msra.mxu0 %v847
    %1533 = vmatpush.msra.mxu0 %v843
    %1534 = vmatpush.msra.mxu0 %v839
    %1535 = vmatpush.msra.mxu0 %v835
    %1536 = vmatpush.msra.mxu0 %v831
    %1537 = vmatpush.msra.mxu0 %v827
    %1538 = vmatpush.msra.mxu0 %v823
    %1539 = vmatpush.msra.mxu0 %v819
    %1540 = vmatpush.msra.mxu0 %v815
    %1541 = vmatpush.msra.mxu0 %v811
    %1542 = vmatpush.msra.mxu0 %v807
    %1543 = vmatpush.msra.mxu0 %v803
    %1544 = vmatmul.f32.gmra.mxu0 %v1385
    %v1545 = vpop.f32.mrf.mxu0
    %v1546 = vadd.f32 0.0, %v1545
    %1547 = vdwg.mxu0
    %1548 = vmatpush.msra.mxu0 %v864
    %1549 = vmatpush.msra.mxu0 %v860
    %1550 = vmatpush.msra.mxu0 %v856
    %1551 = vmatpush.msra.mxu0 %v852
    %1552 = vmatpush.msra.mxu0 %v848
    %1553 = vmatpush.msra.mxu0 %v844
    %1554 = vmatpush.msra.mxu0 %v840
    %1555 = vmatpush.msra.mxu0 %v836
    %1556 = vmatpush.msra.mxu0 %v832
    %1557 = vmatpush.msra.mxu0 %v828
    %1558 = vmatpush.msra.mxu0 %v824
    %1559 = vmatpush.msra.mxu0 %v820
    %1560 = vmatpush.msra.mxu0 %v816
    %1561 = vmatpush.msra.mxu0 %v812
    %1562 = vmatpush.msra.mxu0 %v808
    %1563 = vmatpush.msra.mxu0 %v804
    %1564 = vmatmul.f32.gmra.mxu0 %v1385
    %v1565 = vpop.f32.mrf.mxu0
    %v1566 = vadd.f32 0.0, %v1565
    %1567 = vdwg.mxu0
    %v1568 = vadd.f32 %v1484, %v1506
    %v1569 = vadd.f32 %v1485, %v1526
    %v1570 = vadd.f32 %v1486, %v1546
    %v1571 = vadd.f32 %v1487, %v1566
    %v1572 = vxor.u32 %v1479, 2147483648
    %v1573 = vmul.f32 %v1572, 1.442695
    %v1574 = vpow.pop %v1573
    %v1575 = vadd.f32 %v1574, 1.0
    %v1576 = vrcp.pop %v1575
    %v1577 = vmul.f32 %v1575, %v1576
    %v1578 = vsub.f32 1.0, %v1577
    %v1579 = vmul.f32 %v1576, %v1578
    %v1580 = vadd.f32 %v1576, %v1579
    %vm1581 = vweird.f32 %v1575
    %vm1582 = vweird.f32 %v1576
    %vm1583 = vmor %vm1581, %vm1582
    %v1584 = vsel %vm1583, %v1576, %v1580
    %v1585 = vand.u32 2147483647, %v1575
    %vm1586 = vcmp.eq.f32.partialorder %v1585, 8.507059e+37
    %v1587 = vand.u32 %v1575, 2147483648
    %v1588 = vor.u32 1.1754944e-38, %v1587
    %v1589 = vsel %vm1586, %v1588, %v1584
    %v1590 = vmul.f32 1.0, %v1589
    %v1591 = vxor.u32 %v1480, 2147483648
    %v1592 = vmul.f32 %v1591, 1.442695
    %v1593 = vpow.pop %v1592
    %v1594 = vadd.f32 %v1593, 1.0
    %v1595 = vrcp.pop %v1594
    %v1596 = vmul.f32 %v1594, %v1595
    %v1597 = vsub.f32 1.0, %v1596
    %v1598 = vmul.f32 %v1595, %v1597
    %v1599 = vadd.f32 %v1595, %v1598
    %vm1600 = vweird.f32 %v1594
    %vm1601 = vweird.f32 %v1595
    %vm1602 = vmor %vm1600, %vm1601
    %v1603 = vsel %vm1602, %v1595, %v1599
    %v1604 = vand.u32 2147483647, %v1594
    %vm1605 = vcmp.eq.f32.partialorder %v1604, 8.507059e+37
    %v1606 = vand.u32 %v1594, 2147483648
    %v1607 = vor.u32 1.1754944e-38, %v1606
    %v1608 = vsel %vm1605, %v1607, %v1603
    %v1609 = vmul.f32 1.0, %v1608
    %v1610 = vtanh.pop %v1481
    %v1611 = vxor.u32 %v1482, 2147483648
    %v1612 = vmul.f32 %v1611, 1.442695
    %v1613 = vpow.pop %v1612
    %v1614 = vadd.f32 %v1613, 1.0
    %v1615 = vrcp.pop %v1614
    %v1616 = vmul.f32 %v1614, %v1615
    %v1617 = vsub.f32 1.0, %v1616
    %v1618 = vmul.f32 %v1615, %v1617
    %v1619 = vadd.f32 %v1615, %v1618
    %vm1620 = vweird.f32 %v1614
    %vm1621 = vweird.f32 %v1615
    %vm1622 = vmor %vm1620, %vm1621
    %v1623 = vsel %vm1622, %v1615, %v1619
    %v1624 = vand.u32 2147483647, %v1614
    %vm1625 = vcmp.eq.f32.partialorder %v1624, 8.507059e+37
    %v1626 = vand.u32 %v1614, 2147483648
    %v1627 = vor.u32 1.1754944e-38, %v1626
    %v1628 = vsel %vm1625, %v1627, %v1623
    %v1629 = vmul.f32 1.0, %v1628
    %v1630 = vmul.f32 %v1609, %v1320
    %v1631 = vmul.f32 %v1590, %v1610
    %v1632 = vadd.f32 %v1630, %v1631
    %v1633 = vtanh.pop %v1632
    %v1634 = vmul.f32 %v1629, %v1633
    %v1635 = vxor.u32 %v1568, 2147483648
    %v1636 = vmul.f32 %v1635, 1.442695
    %v1637 = vpow.pop %v1636
    %v1638 = vadd.f32 %v1637, 1.0
    %v1639 = vrcp.pop %v1638
    %v1640 = vmul.f32 %v1638, %v1639
    %v1641 = vsub.f32 1.0, %v1640
    %v1642 = vmul.f32 %v1639, %v1641
    %v1643 = vadd.f32 %v1639, %v1642
    %vm1644 = vweird.f32 %v1638
    %vm1645 = vweird.f32 %v1639
    %vm1646 = vmor %vm1644, %vm1645
    %v1647 = vsel %vm1646, %v1639, %v1643
    %v1648 = vand.u32 2147483647, %v1638
    %vm1649 = vcmp.eq.f32.partialorder %v1648, 8.507059e+37
    %v1650 = vand.u32 %v1638, 2147483648
    %v1651 = vor.u32 1.1754944e-38, %v1650
    %v1652 = vsel %vm1649, %v1651, %v1647
    %v1653 = vmul.f32 1.0, %v1652
    %v1654 = vxor.u32 %v1569, 2147483648
    %v1655 = vmul.f32 %v1654, 1.442695
    %v1656 = vpow.pop %v1655
    %v1657 = vadd.f32 %v1656, 1.0
    %v1658 = vrcp.pop %v1657
    %v1659 = vmul.f32 %v1657, %v1658
    %v1660 = vsub.f32 1.0, %v1659
    %v1661 = vmul.f32 %v1658, %v1660
    %v1662 = vadd.f32 %v1658, %v1661
    %vm1663 = vweird.f32 %v1657
    %vm1664 = vweird.f32 %v1658
    %vm1665 = vmor %vm1663, %vm1664
    %v1666 = vsel %vm1665, %v1658, %v1662
    %v1667 = vand.u32 2147483647, %v1657
    %vm1668 = vcmp.eq.f32.partialorder %v1667, 8.507059e+37
    %v1669 = vand.u32 %v1657, 2147483648
    %v1670 = vor.u32 1.1754944e-38, %v1669
    %v1671 = vsel %vm1668, %v1670, %v1666
    %v1672 = vmul.f32 1.0, %v1671
    %v1673 = vtanh.pop %v1570
    %v1674 = vxor.u32 %v1571, 2147483648
    %v1675 = vmul.f32 %v1674, 1.442695
    %v1676 = vpow.pop %v1675
    %v1677 = vadd.f32 %v1676, 1.0
    %v1678 = vrcp.pop %v1677
    %v1679 = vmul.f32 %v1677, %v1678
    %v1680 = vsub.f32 1.0, %v1679
    %v1681 = vmul.f32 %v1678, %v1680
    %v1682 = vadd.f32 %v1678, %v1681
    %vm1683 = vweird.f32 %v1677
    %vm1684 = vweird.f32 %v1678
    %vm1685 = vmor %vm1683, %vm1684
    %v1686 = vsel %vm1685, %v1678, %v1682
    %v1687 = vand.u32 2147483647, %v1677
    %vm1688 = vcmp.eq.f32.partialorder %v1687, 8.507059e+37
    %v1689 = vand.u32 %v1677, 2147483648
    %v1690 = vor.u32 1.1754944e-38, %v1689
    %v1691 = vsel %vm1688, %v1690, %v1686
    %v1692 = vmul.f32 1.0, %v1691
    %v1693 = vmul.f32 %v1672, %v1383
    %v1694 = vmul.f32 %v1653, %v1673
    %v1695 = vadd.f32 %v1693, %v1694
    %v1696 = vtanh.pop %v1695
    %v1697 = vmul.f32 %v1692, %v1696
    %s1698 = scalar_lea.vmem [#allocation4], 16
    %v1699 = vld [vmem:[%s1698] sm:$0xff]
    %v1700 = vmul.f32 %v1699, %v1634
    %v1701 = vadd.f32 %v1389, %v1700
    %s1702 = scalar_lea.vmem [#allocation4], 40
    %v1703 = vld [vmem:[%s1702] sm:$0xff]
    %v1704 = vmul.f32 %v1703, %v1697
    %v1705 = vadd.f32 %v1393, %v1704
    %s1706 = scalar_lea.vmem [#allocation2], 96
    %v1707 = vld [vmem:[%s1706] sm:$0xff]
    %v1708 = vld [vmem:[%s1706 + $0x8] sm:$0xff]
    %v1709 = vld [vmem:[%s1706 + $0x10] sm:$0xff]
    %v1710 = vld [vmem:[%s1706 + $0x18] sm:$0xff]
    %1711 = vmatpush.msra.mxu0 %v708
    %1712 = vmatpush.msra.mxu0 %v704
    %1713 = vmatpush.msra.mxu0 %v700
    %1714 = vmatpush.msra.mxu0 %v696
    %1715 = vmatpush.msra.mxu0 %v692
    %1716 = vmatpush.msra.mxu0 %v688
    %1717 = vmatpush.msra.mxu0 %v684
    %1718 = vmatpush.msra.mxu0 %v680
    %1719 = vmatpush.msra.mxu0 %v676
    %1720 = vmatpush.msra.mxu0 %v672
    %1721 = vmatpush.msra.mxu0 %v668
    %1722 = vmatpush.msra.mxu0 %v664
    %1723 = vmatpush.msra.mxu0 %v660
    %1724 = vmatpush.msra.mxu0 %v656
    %1725 = vmatpush.msra.mxu0 %v652
    %1726 = vmatpush.msra.mxu0 %v648
    %1727 = vmatmul.f32.gmra.mxu0 %v1634
    %v1728 = vpop.f32.mrf.mxu0
    %v1729 = vadd.f32 0.0, %v1728
    %1730 = vdwg.mxu0
    %1731 = vmatpush.msra.mxu0 %v709
    %1732 = vmatpush.msra.mxu0 %v705
    %1733 = vmatpush.msra.mxu0 %v701
    %1734 = vmatpush.msra.mxu0 %v697
    %1735 = vmatpush.msra.mxu0 %v693
    %1736 = vmatpush.msra.mxu0 %v689
    %1737 = vmatpush.msra.mxu0 %v685
    %1738 = vmatpush.msra.mxu0 %v681
    %1739 = vmatpush.msra.mxu0 %v677
    %1740 = vmatpush.msra.mxu0 %v673
    %1741 = vmatpush.msra.mxu0 %v669
    %1742 = vmatpush.msra.mxu0 %v665
    %1743 = vmatpush.msra.mxu0 %v661
    %1744 = vmatpush.msra.mxu0 %v657
    %1745 = vmatpush.msra.mxu0 %v653
    %1746 = vmatpush.msra.mxu0 %v649
    %1747 = vmatmul.f32.gmra.mxu0 %v1634
    %v1748 = vpop.f32.mrf.mxu0
    %v1749 = vadd.f32 0.0, %v1748
    %1750 = vdwg.mxu0
    %1751 = vmatpush.msra.mxu0 %v710
    %1752 = vmatpush.msra.mxu0 %v706
    %1753 = vmatpush.msra.mxu0 %v702
    %1754 = vmatpush.msra.mxu0 %v698
    %1755 = vmatpush.msra.mxu0 %v694
    %1756 = vmatpush.msra.mxu0 %v690
    %1757 = vmatpush.msra.mxu0 %v686
    %1758 = vmatpush.msra.mxu0 %v682
    %1759 = vmatpush.msra.mxu0 %v678
    %1760 = vmatpush.msra.mxu0 %v674
    %1761 = vmatpush.msra.mxu0 %v670
    %1762 = vmatpush.msra.mxu0 %v666
    %1763 = vmatpush.msra.mxu0 %v662
    %1764 = vmatpush.msra.mxu0 %v658
    %1765 = vmatpush.msra.mxu0 %v654
    %1766 = vmatpush.msra.mxu0 %v650
    %1767 = vmatmul.f32.gmra.mxu0 %v1634
    %v1768 = vpop.f32.mrf.mxu0
    %v1769 = vadd.f32 0.0, %v1768
    %1770 = vdwg.mxu0
    %1771 = vmatpush.msra.mxu0 %v711
    %1772 = vmatpush.msra.mxu0 %v707
    %1773 = vmatpush.msra.mxu0 %v703
    %1774 = vmatpush.msra.mxu0 %v699
    %1775 = vmatpush.msra.mxu0 %v695
    %1776 = vmatpush.msra.mxu0 %v691
    %1777 = vmatpush.msra.mxu0 %v687
    %1778 = vmatpush.msra.mxu0 %v683
    %1779 = vmatpush.msra.mxu0 %v679
    %1780 = vmatpush.msra.mxu0 %v675
    %1781 = vmatpush.msra.mxu0 %v671
    %1782 = vmatpush.msra.mxu0 %v667
    %1783 = vmatpush.msra.mxu0 %v663
    %1784 = vmatpush.msra.mxu0 %v659
    %1785 = vmatpush.msra.mxu0 %v655
    %1786 = vmatpush.msra.mxu0 %v651
    %1787 = vmatmul.f32.gmra.mxu0 %v1634
    %v1788 = vpop.f32.mrf.mxu0
    %v1789 = vadd.f32 0.0, %v1788
    %1790 = vdwg.mxu0
    %v1791 = vadd.f32 %v1707, %v1729
    %v1792 = vadd.f32 %v1708, %v1749
    %v1793 = vadd.f32 %v1709, %v1769
    %v1794 = vadd.f32 %v1710, %v1789
    %s1795 = scalar_lea.vmem [#allocation3], 128
    %v1796 = vld [vmem:[%s1795] sm:$0xff]
    %v1797 = vld [vmem:[%s1795 + $0x8] sm:$0xff]
    %v1798 = vld [vmem:[%s1795 + $0x10] sm:$0xff]
    %v1799 = vld [vmem:[%s1795 + $0x18] sm:$0xff]
    %1800 = vmatpush.msra.mxu0 %v861
    %1801 = vmatpush.msra.mxu0 %v857
    %1802 = vmatpush.msra.mxu0 %v853
    %1803 = vmatpush.msra.mxu0 %v849
    %1804 = vmatpush.msra.mxu0 %v845
    %1805 = vmatpush.msra.mxu0 %v841
    %1806 = vmatpush.msra.mxu0 %v837
    %1807 = vmatpush.msra.mxu0 %v833
    %1808 = vmatpush.msra.mxu0 %v829
    %1809 = vmatpush.msra.mxu0 %v825
    %1810 = vmatpush.msra.mxu0 %v821
    %1811 = vmatpush.msra.mxu0 %v817
    %1812 = vmatpush.msra.mxu0 %v813
    %1813 = vmatpush.msra.mxu0 %v809
    %1814 = vmatpush.msra.mxu0 %v805
    %1815 = vmatpush.msra.mxu0 %v801
    %1816 = vmatmul.f32.gmra.mxu0 %v1697
    %v1817 = vpop.f32.mrf.mxu0
    %v1818 = vadd.f32 0.0, %v1817
    %1819 = vdwg.mxu0
    %1820 = vmatpush.msra.mxu0 %v862
    %1821 = vmatpush.msra.mxu0 %v858
    %1822 = vmatpush.msra.mxu0 %v854
    %1823 = vmatpush.msra.mxu0 %v850
    %1824 = vmatpush.msra.mxu0 %v846
    %1825 = vmatpush.msra.mxu0 %v842
    %1826 = vmatpush.msra.mxu0 %v838
    %1827 = vmatpush.msra.mxu0 %v834
    %1828 = vmatpush.msra.mxu0 %v830
    %1829 = vmatpush.msra.mxu0 %v826
    %1830 = vmatpush.msra.mxu0 %v822
    %1831 = vmatpush.msra.mxu0 %v818
    %1832 = vmatpush.msra.mxu0 %v814
    %1833 = vmatpush.msra.mxu0 %v810
    %1834 = vmatpush.msra.mxu0 %v806
    %1835 = vmatpush.msra.mxu0 %v802
    %1836 = vmatmul.f32.gmra.mxu0 %v1697
    %v1837 = vpop.f32.mrf.mxu0
    %v1838 = vadd.f32 0.0, %v1837
    %1839 = vdwg.mxu0
    %1840 = vmatpush.msra.mxu0 %v863
    %1841 = vmatpush.msra.mxu0 %v859
    %1842 = vmatpush.msra.mxu0 %v855
    %1843 = vmatpush.msra.mxu0 %v851
    %1844 = vmatpush.msra.mxu0 %v847
    %1845 = vmatpush.msra.mxu0 %v843
    %1846 = vmatpush.msra.mxu0 %v839
    %1847 = vmatpush.msra.mxu0 %v835
    %1848 = vmatpush.msra.mxu0 %v831
    %1849 = vmatpush.msra.mxu0 %v827
    %1850 = vmatpush.msra.mxu0 %v823
    %1851 = vmatpush.msra.mxu0 %v819
    %1852 = vmatpush.msra.mxu0 %v815
    %1853 = vmatpush.msra.mxu0 %v811
    %1854 = vmatpush.msra.mxu0 %v807
    %1855 = vmatpush.msra.mxu0 %v803
    %1856 = vmatmul.f32.gmra.mxu0 %v1697
    %v1857 = vpop.f32.mrf.mxu0
    %v1858 = vadd.f32 0.0, %v1857
    %1859 = vdwg.mxu0
    %1860 = vmatpush.msra.mxu0 %v864
    %1861 = vmatpush.msra.mxu0 %v860
    %1862 = vmatpush.msra.mxu0 %v856
    %1863 = vmatpush.msra.mxu0 %v852
    %1864 = vmatpush.msra.mxu0 %v848
    %1865 = vmatpush.msra.mxu0 %v844
    %1866 = vmatpush.msra.mxu0 %v840
    %1867 = vmatpush.msra.mxu0 %v836
    %1868 = vmatpush.msra.mxu0 %v832
    %1869 = vmatpush.msra.mxu0 %v828
    %1870 = vmatpush.msra.mxu0 %v824
    %1871 = vmatpush.msra.mxu0 %v820
    %1872 = vmatpush.msra.mxu0 %v816
    %1873 = vmatpush.msra.mxu0 %v812
    %1874 = vmatpush.msra.mxu0 %v808
    %1875 = vmatpush.msra.mxu0 %v804
    %1876 = vmatmul.f32.gmra.mxu0 %v1697
    %v1877 = vpop.f32.mrf.mxu0
    %v1878 = vadd.f32 0.0, %v1877
    %1879 = vdwg.mxu0
    %v1880 = vadd.f32 %v1796, %v1818
    %v1881 = vadd.f32 %v1797, %v1838
    %v1882 = vadd.f32 %v1798, %v1858
    %v1883 = vadd.f32 %v1799, %v1878
    %v1884 = vxor.u32 %v1791, 2147483648
    %v1885 = vmul.f32 %v1884, 1.442695
    %v1886 = vpow.pop %v1885
    %v1887 = vadd.f32 %v1886, 1.0
    %v1888 = vrcp.pop %v1887
    %v1889 = vmul.f32 %v1887, %v1888
    %v1890 = vsub.f32 1.0, %v1889
    %v1891 = vmul.f32 %v1888, %v1890
    %v1892 = vadd.f32 %v1888, %v1891
    %vm1893 = vweird.f32 %v1887
    %vm1894 = vweird.f32 %v1888
    %vm1895 = vmor %vm1893, %vm1894
    %v1896 = vsel %vm1895, %v1888, %v1892
    %v1897 = vand.u32 2147483647, %v1887
    %vm1898 = vcmp.eq.f32.partialorder %v1897, 8.507059e+37
    %v1899 = vand.u32 %v1887, 2147483648
    %v1900 = vor.u32 1.1754944e-38, %v1899
    %v1901 = vsel %vm1898, %v1900, %v1896
    %v1902 = vmul.f32 1.0, %v1901
    %v1903 = vxor.u32 %v1792, 2147483648
    %v1904 = vmul.f32 %v1903, 1.442695
    %v1905 = vpow.pop %v1904
    %v1906 = vadd.f32 %v1905, 1.0
    %v1907 = vrcp.pop %v1906
    %v1908 = vmul.f32 %v1906, %v1907
    %v1909 = vsub.f32 1.0, %v1908
    %v1910 = vmul.f32 %v1907, %v1909
    %v1911 = vadd.f32 %v1907, %v1910
    %vm1912 = vweird.f32 %v1906
    %vm1913 = vweird.f32 %v1907
    %vm1914 = vmor %vm1912, %vm1913
    %v1915 = vsel %vm1914, %v1907, %v1911
    %v1916 = vand.u32 2147483647, %v1906
    %vm1917 = vcmp.eq.f32.partialorder %v1916, 8.507059e+37
    %v1918 = vand.u32 %v1906, 2147483648
    %v1919 = vor.u32 1.1754944e-38, %v1918
    %v1920 = vsel %vm1917, %v1919, %v1915
    %v1921 = vmul.f32 1.0, %v1920
    %v1922 = vtanh.pop %v1793
    %v1923 = vxor.u32 %v1794, 2147483648
    %v1924 = vmul.f32 %v1923, 1.442695
    %v1925 = vpow.pop %v1924
    %v1926 = vadd.f32 %v1925, 1.0
    %v1927 = vrcp.pop %v1926
    %v1928 = vmul.f32 %v1926, %v1927
    %v1929 = vsub.f32 1.0, %v1928
    %v1930 = vmul.f32 %v1927, %v1929
    %v1931 = vadd.f32 %v1927, %v1930
    %vm1932 = vweird.f32 %v1926
    %vm1933 = vweird.f32 %v1927
    %vm1934 = vmor %vm1932, %vm1933
    %v1935 = vsel %vm1934, %v1927, %v1931
    %v1936 = vand.u32 2147483647, %v1926
    %vm1937 = vcmp.eq.f32.partialorder %v1936, 8.507059e+37
    %v1938 = vand.u32 %v1926, 2147483648
    %v1939 = vor.u32 1.1754944e-38, %v1938
    %v1940 = vsel %vm1937, %v1939, %v1935
    %v1941 = vmul.f32 1.0, %v1940
    %v1942 = vmul.f32 %v1921, %v1632
    %v1943 = vmul.f32 %v1902, %v1922
    %v1944 = vadd.f32 %v1942, %v1943
    %v1945 = vtanh.pop %v1944
    %v1946 = vmul.f32 %v1941, %v1945
    %v1947 = vxor.u32 %v1880, 2147483648
    %v1948 = vmul.f32 %v1947, 1.442695
    %v1949 = vpow.pop %v1948
    %v1950 = vadd.f32 %v1949, 1.0
    %v1951 = vrcp.pop %v1950
    %v1952 = vmul.f32 %v1950, %v1951
    %v1953 = vsub.f32 1.0, %v1952
    %v1954 = vmul.f32 %v1951, %v1953
    %v1955 = vadd.f32 %v1951, %v1954
    %vm1956 = vweird.f32 %v1950
    %vm1957 = vweird.f32 %v1951
    %vm1958 = vmor %vm1956, %vm1957
    %v1959 = vsel %vm1958, %v1951, %v1955
    %v1960 = vand.u32 2147483647, %v1950
    %vm1961 = vcmp.eq.f32.partialorder %v1960, 8.507059e+37
    %v1962 = vand.u32 %v1950, 2147483648
    %v1963 = vor.u32 1.1754944e-38, %v1962
    %v1964 = vsel %vm1961, %v1963, %v1959
    %v1965 = vmul.f32 1.0, %v1964
    %v1966 = vxor.u32 %v1881, 2147483648
    %v1967 = vmul.f32 %v1966, 1.442695
    %v1968 = vpow.pop %v1967
    %v1969 = vadd.f32 %v1968, 1.0
    %v1970 = vrcp.pop %v1969
    %v1971 = vmul.f32 %v1969, %v1970
    %v1972 = vsub.f32 1.0, %v1971
    %v1973 = vmul.f32 %v1970, %v1972
    %v1974 = vadd.f32 %v1970, %v1973
    %vm1975 = vweird.f32 %v1969
    %vm1976 = vweird.f32 %v1970
    %vm1977 = vmor %vm1975, %vm1976
    %v1978 = vsel %vm1977, %v1970, %v1974
    %v1979 = vand.u32 2147483647, %v1969
    %vm1980 = vcmp.eq.f32.partialorder %v1979, 8.507059e+37
    %v1981 = vand.u32 %v1969, 2147483648
    %v1982 = vor.u32 1.1754944e-38, %v1981
    %v1983 = vsel %vm1980, %v1982, %v1978
    %v1984 = vmul.f32 1.0, %v1983
    %v1985 = vtanh.pop %v1882
    %v1986 = vxor.u32 %v1883, 2147483648
    %v1987 = vmul.f32 %v1986, 1.442695
    %v1988 = vpow.pop %v1987
    %v1989 = vadd.f32 %v1988, 1.0
    %v1990 = vrcp.pop %v1989
    %v1991 = vmul.f32 %v1989, %v1990
    %v1992 = vsub.f32 1.0, %v1991
    %v1993 = vmul.f32 %v1990, %v1992
    %v1994 = vadd.f32 %v1990, %v1993
    %vm1995 = vweird.f32 %v1989
    %vm1996 = vweird.f32 %v1990
    %vm1997 = vmor %vm1995, %vm1996
    %v1998 = vsel %vm1997, %v1990, %v1994
    %v1999 = vand.u32 2147483647, %v1989
    %vm2000 = vcmp.eq.f32.partialorder %v1999, 8.507059e+37
    %v2001 = vand.u32 %v1989, 2147483648
    %v2002 = vor.u32 1.1754944e-38, %v2001
    %v2003 = vsel %vm2000, %v2002, %v1998
    %v2004 = vmul.f32 1.0, %v2003
    %v2005 = vmul.f32 %v1984, %v1695
    %v2006 = vmul.f32 %v1965, %v1985
    %v2007 = vadd.f32 %v2005, %v2006
    %v2008 = vtanh.pop %v2007
    %v2009 = vmul.f32 %v2004, %v2008
    %s2010 = scalar_lea.vmem [#allocation4], 24
    %v2011 = vld [vmem:[%s2010] sm:$0xff]
    %v2012 = vmul.f32 %v2011, %v1946
    %v2013 = vadd.f32 %v1701, %v2012
    %s2014 = scalar_lea.vmem [#allocation4], 32
    %v2015 = vld [vmem:[%s2014] sm:$0xff]
    %v2016 = vmul.f32 %v2015, %v2009
    %v2017 = vadd.f32 %v1705, %v2016
    %s2018 = scalar_lea.vmem [#allocation2], 128
    %v2019 = vld [vmem:[%s2018] sm:$0xff]
    %v2020 = vld [vmem:[%s2018 + $0x8] sm:$0xff]
    %v2021 = vld [vmem:[%s2018 + $0x10] sm:$0xff]
    %v2022 = vld [vmem:[%s2018 + $0x18] sm:$0xff]
    %2023 = vmatpush.msra.mxu0 %v708
    %2024 = vmatpush.msra.mxu0 %v704
    %2025 = vmatpush.msra.mxu0 %v700
    %2026 = vmatpush.msra.mxu0 %v696
    %2027 = vmatpush.msra.mxu0 %v692
    %2028 = vmatpush.msra.mxu0 %v688
    %2029 = vmatpush.msra.mxu0 %v684
    %2030 = vmatpush.msra.mxu0 %v680
    %2031 = vmatpush.msra.mxu0 %v676
    %2032 = vmatpush.msra.mxu0 %v672
    %2033 = vmatpush.msra.mxu0 %v668
    %2034 = vmatpush.msra.mxu0 %v664
    %2035 = vmatpush.msra.mxu0 %v660
    %2036 = vmatpush.msra.mxu0 %v656
    %2037 = vmatpush.msra.mxu0 %v652
    %2038 = vmatpush.msra.mxu0 %v648
    %2039 = vmatmul.f32.gmra.mxu0 %v1946
    %v2040 = vpop.f32.mrf.mxu0
    %v2041 = vadd.f32 0.0, %v2040
    %2042 = vdwg.mxu0
    %2043 = vmatpush.msra.mxu0 %v709
    %2044 = vmatpush.msra.mxu0 %v705
    %2045 = vmatpush.msra.mxu0 %v701
    %2046 = vmatpush.msra.mxu0 %v697
    %2047 = vmatpush.msra.mxu0 %v693
    %2048 = vmatpush.msra.mxu0 %v689
    %2049 = vmatpush.msra.mxu0 %v685
    %2050 = vmatpush.msra.mxu0 %v681
    %2051 = vmatpush.msra.mxu0 %v677
    %2052 = vmatpush.msra.mxu0 %v673
    %2053 = vmatpush.msra.mxu0 %v669
    %2054 = vmatpush.msra.mxu0 %v665
    %2055 = vmatpush.msra.mxu0 %v661
    %2056 = vmatpush.msra.mxu0 %v657
    %2057 = vmatpush.msra.mxu0 %v653
    %2058 = vmatpush.msra.mxu0 %v649
    %2059 = vmatmul.f32.gmra.mxu0 %v1946
    %v2060 = vpop.f32.mrf.mxu0
    %v2061 = vadd.f32 0.0, %v2060
    %2062 = vdwg.mxu0
    %2063 = vmatpush.msra.mxu0 %v710
    %2064 = vmatpush.msra.mxu0 %v706
    %2065 = vmatpush.msra.mxu0 %v702
    %2066 = vmatpush.msra.mxu0 %v698
    %2067 = vmatpush.msra.mxu0 %v694
    %2068 = vmatpush.msra.mxu0 %v690
    %2069 = vmatpush.msra.mxu0 %v686
    %2070 = vmatpush.msra.mxu0 %v682
    %2071 = vmatpush.msra.mxu0 %v678
    %2072 = vmatpush.msra.mxu0 %v674
    %2073 = vmatpush.msra.mxu0 %v670
    %2074 = vmatpush.msra.mxu0 %v666
    %2075 = vmatpush.msra.mxu0 %v662
    %2076 = vmatpush.msra.mxu0 %v658
    %2077 = vmatpush.msra.mxu0 %v654
    %2078 = vmatpush.msra.mxu0 %v650
    %2079 = vmatmul.f32.gmra.mxu0 %v1946
    %v2080 = vpop.f32.mrf.mxu0
    %v2081 = vadd.f32 0.0, %v2080
    %2082 = vdwg.mxu0
    %2083 = vmatpush.msra.mxu0 %v711
    %2084 = vmatpush.msra.mxu0 %v707
    %2085 = vmatpush.msra.mxu0 %v703
    %2086 = vmatpush.msra.mxu0 %v699
    %2087 = vmatpush.msra.mxu0 %v695
    %2088 = vmatpush.msra.mxu0 %v691
    %2089 = vmatpush.msra.mxu0 %v687
    %2090 = vmatpush.msra.mxu0 %v683
    %2091 = vmatpush.msra.mxu0 %v679
    %2092 = vmatpush.msra.mxu0 %v675
    %2093 = vmatpush.msra.mxu0 %v671
    %2094 = vmatpush.msra.mxu0 %v667
    %2095 = vmatpush.msra.mxu0 %v663
    %2096 = vmatpush.msra.mxu0 %v659
    %2097 = vmatpush.msra.mxu0 %v655
    %2098 = vmatpush.msra.mxu0 %v651
    %2099 = vmatmul.f32.gmra.mxu0 %v1946
    %v2100 = vpop.f32.mrf.mxu0
    %v2101 = vadd.f32 0.0, %v2100
    %2102 = vdwg.mxu0
    %v2103 = vadd.f32 %v2019, %v2041
    %v2104 = vadd.f32 %v2020, %v2061
    %v2105 = vadd.f32 %v2021, %v2081
    %v2106 = vadd.f32 %v2022, %v2101
    %s2107 = scalar_lea.vmem [#allocation3], 96
    %v2108 = vld [vmem:[%s2107] sm:$0xff]
    %v2109 = vld [vmem:[%s2107 + $0x8] sm:$0xff]
    %v2110 = vld [vmem:[%s2107 + $0x10] sm:$0xff]
    %v2111 = vld [vmem:[%s2107 + $0x18] sm:$0xff]
    %2112 = vmatpush.msra.mxu0 %v861
    %2113 = vmatpush.msra.mxu0 %v857
    %2114 = vmatpush.msra.mxu0 %v853
    %2115 = vmatpush.msra.mxu0 %v849
    %2116 = vmatpush.msra.mxu0 %v845
    %2117 = vmatpush.msra.mxu0 %v841
    %2118 = vmatpush.msra.mxu0 %v837
    %2119 = vmatpush.msra.mxu0 %v833
    %2120 = vmatpush.msra.mxu0 %v829
    %2121 = vmatpush.msra.mxu0 %v825
    %2122 = vmatpush.msra.mxu0 %v821
    %2123 = vmatpush.msra.mxu0 %v817
    %2124 = vmatpush.msra.mxu0 %v813
    %2125 = vmatpush.msra.mxu0 %v809
    %2126 = vmatpush.msra.mxu0 %v805
    %2127 = vmatpush.msra.mxu0 %v801
    %2128 = vmatmul.f32.gmra.mxu0 %v2009
    %v2129 = vpop.f32.mrf.mxu0
    %v2130 = vadd.f32 0.0, %v2129
    %2131 = vdwg.mxu0
    %2132 = vmatpush.msra.mxu0 %v862
    %2133 = vmatpush.msra.mxu0 %v858
    %2134 = vmatpush.msra.mxu0 %v854
    %2135 = vmatpush.msra.mxu0 %v850
    %2136 = vmatpush.msra.mxu0 %v846
    %2137 = vmatpush.msra.mxu0 %v842
    %2138 = vmatpush.msra.mxu0 %v838
    %2139 = vmatpush.msra.mxu0 %v834
    %2140 = vmatpush.msra.mxu0 %v830
    %2141 = vmatpush.msra.mxu0 %v826
    %2142 = vmatpush.msra.mxu0 %v822
    %2143 = vmatpush.msra.mxu0 %v818
    %2144 = vmatpush.msra.mxu0 %v814
    %2145 = vmatpush.msra.mxu0 %v810
    %2146 = vmatpush.msra.mxu0 %v806
    %2147 = vmatpush.msra.mxu0 %v802
    %2148 = vmatmul.f32.gmra.mxu0 %v2009
    %v2149 = vpop.f32.mrf.mxu0
    %v2150 = vadd.f32 0.0, %v2149
    %2151 = vdwg.mxu0
    %2152 = vmatpush.msra.mxu0 %v863
    %2153 = vmatpush.msra.mxu0 %v859
    %2154 = vmatpush.msra.mxu0 %v855
    %2155 = vmatpush.msra.mxu0 %v851
    %2156 = vmatpush.msra.mxu0 %v847
    %2157 = vmatpush.msra.mxu0 %v843
    %2158 = vmatpush.msra.mxu0 %v839
    %2159 = vmatpush.msra.mxu0 %v835
    %2160 = vmatpush.msra.mxu0 %v831
    %2161 = vmatpush.msra.mxu0 %v827
    %2162 = vmatpush.msra.mxu0 %v823
    %2163 = vmatpush.msra.mxu0 %v819
    %2164 = vmatpush.msra.mxu0 %v815
    %2165 = vmatpush.msra.mxu0 %v811
    %2166 = vmatpush.msra.mxu0 %v807
    %2167 = vmatpush.msra.mxu0 %v803
    %2168 = vmatmul.f32.gmra.mxu0 %v2009
    %v2169 = vpop.f32.mrf.mxu0
    %v2170 = vadd.f32 0.0, %v2169
    %2171 = vdwg.mxu0
    %2172 = vmatpush.msra.mxu0 %v864
    %2173 = vmatpush.msra.mxu0 %v860
    %2174 = vmatpush.msra.mxu0 %v856
    %2175 = vmatpush.msra.mxu0 %v852
    %2176 = vmatpush.msra.mxu0 %v848
    %2177 = vmatpush.msra.mxu0 %v844
    %2178 = vmatpush.msra.mxu0 %v840
    %2179 = vmatpush.msra.mxu0 %v836
    %2180 = vmatpush.msra.mxu0 %v832
    %2181 = vmatpush.msra.mxu0 %v828
    %2182 = vmatpush.msra.mxu0 %v824
    %2183 = vmatpush.msra.mxu0 %v820
    %2184 = vmatpush.msra.mxu0 %v816
    %2185 = vmatpush.msra.mxu0 %v812
    %2186 = vmatpush.msra.mxu0 %v808
    %2187 = vmatpush.msra.mxu0 %v804
    %2188 = vmatmul.f32.gmra.mxu0 %v2009
    %v2189 = vpop.f32.mrf.mxu0
    %v2190 = vadd.f32 0.0, %v2189
    %2191 = vdwg.mxu0
    %v2192 = vadd.f32 %v2108, %v2130
    %v2193 = vadd.f32 %v2109, %v2150
    %v2194 = vadd.f32 %v2110, %v2170
    %v2195 = vadd.f32 %v2111, %v2190
    %v2196 = vxor.u32 %v2103, 2147483648
    %v2197 = vmul.f32 %v2196, 1.442695
    %v2198 = vpow.pop %v2197
    %v2199 = vadd.f32 %v2198, 1.0
    %v2200 = vrcp.pop %v2199
    %v2201 = vmul.f32 %v2199, %v2200
    %v2202 = vsub.f32 1.0, %v2201
    %v2203 = vmul.f32 %v2200, %v2202
    %v2204 = vadd.f32 %v2200, %v2203
    %vm2205 = vweird.f32 %v2199
    %vm2206 = vweird.f32 %v2200
    %vm2207 = vmor %vm2205, %vm2206
    %v2208 = vsel %vm2207, %v2200, %v2204
    %v2209 = vand.u32 2147483647, %v2199
    %vm2210 = vcmp.eq.f32.partialorder %v2209, 8.507059e+37
    %v2211 = vand.u32 %v2199, 2147483648
    %v2212 = vor.u32 1.1754944e-38, %v2211
    %v2213 = vsel %vm2210, %v2212, %v2208
    %v2214 = vmul.f32 1.0, %v2213
    %v2215 = vxor.u32 %v2104, 2147483648
    %v2216 = vmul.f32 %v2215, 1.442695
    %v2217 = vpow.pop %v2216
    %v2218 = vadd.f32 %v2217, 1.0
    %v2219 = vrcp.pop %v2218
    %v2220 = vmul.f32 %v2218, %v2219
    %v2221 = vsub.f32 1.0, %v2220
    %v2222 = vmul.f32 %v2219, %v2221
    %v2223 = vadd.f32 %v2219, %v2222
    %vm2224 = vweird.f32 %v2218
    %vm2225 = vweird.f32 %v2219
    %vm2226 = vmor %vm2224, %vm2225
    %v2227 = vsel %vm2226, %v2219, %v2223
    %v2228 = vand.u32 2147483647, %v2218
    %vm2229 = vcmp.eq.f32.partialorder %v2228, 8.507059e+37
    %v2230 = vand.u32 %v2218, 2147483648
    %v2231 = vor.u32 1.1754944e-38, %v2230
    %v2232 = vsel %vm2229, %v2231, %v2227
    %v2233 = vmul.f32 1.0, %v2232
    %v2234 = vtanh.pop %v2105
    %v2235 = vxor.u32 %v2106, 2147483648
    %v2236 = vmul.f32 %v2235, 1.442695
    %v2237 = vpow.pop %v2236
    %v2238 = vadd.f32 %v2237, 1.0
    %v2239 = vrcp.pop %v2238
    %v2240 = vmul.f32 %v2238, %v2239
    %v2241 = vsub.f32 1.0, %v2240
    %v2242 = vmul.f32 %v2239, %v2241
    %v2243 = vadd.f32 %v2239, %v2242
    %vm2244 = vweird.f32 %v2238
    %vm2245 = vweird.f32 %v2239
    %vm2246 = vmor %vm2244, %vm2245
    %v2247 = vsel %vm2246, %v2239, %v2243
    %v2248 = vand.u32 2147483647, %v2238
    %vm2249 = vcmp.eq.f32.partialorder %v2248, 8.507059e+37
    %v2250 = vand.u32 %v2238, 2147483648
    %v2251 = vor.u32 1.1754944e-38, %v2250
    %v2252 = vsel %vm2249, %v2251, %v2247
    %v2253 = vmul.f32 1.0, %v2252
    %v2254 = vmul.f32 %v2233, %v1944
    %v2255 = vmul.f32 %v2214, %v2234
    %v2256 = vadd.f32 %v2254, %v2255
    %v2257 = vtanh.pop %v2256
    %v2258 = vmul.f32 %v2253, %v2257
    %v2259 = vxor.u32 %v2192, 2147483648
    %v2260 = vmul.f32 %v2259, 1.442695
    %v2261 = vpow.pop %v2260
    %v2262 = vadd.f32 %v2261, 1.0
    %v2263 = vrcp.pop %v2262
    %v2264 = vmul.f32 %v2262, %v2263
    %v2265 = vsub.f32 1.0, %v2264
    %v2266 = vmul.f32 %v2263, %v2265
    %v2267 = vadd.f32 %v2263, %v2266
    %vm2268 = vweird.f32 %v2262
    %vm2269 = vweird.f32 %v2263
    %vm2270 = vmor %vm2268, %vm2269
    %v2271 = vsel %vm2270, %v2263, %v2267
    %v2272 = vand.u32 2147483647, %v2262
    %vm2273 = vcmp.eq.f32.partialorder %v2272, 8.507059e+37
    %v2274 = vand.u32 %v2262, 2147483648
    %v2275 = vor.u32 1.1754944e-38, %v2274
    %v2276 = vsel %vm2273, %v2275, %v2271
    %v2277 = vmul.f32 1.0, %v2276
    %v2278 = vxor.u32 %v2193, 2147483648
    %v2279 = vmul.f32 %v2278, 1.442695
    %v2280 = vpow.pop %v2279
    %v2281 = vadd.f32 %v2280, 1.0
    %v2282 = vrcp.pop %v2281
    %v2283 = vmul.f32 %v2281, %v2282
    %v2284 = vsub.f32 1.0, %v2283
    %v2285 = vmul.f32 %v2282, %v2284
    %v2286 = vadd.f32 %v2282, %v2285
    %vm2287 = vweird.f32 %v2281
    %vm2288 = vweird.f32 %v2282
    %vm2289 = vmor %vm2287, %vm2288
    %v2290 = vsel %vm2289, %v2282, %v2286
    %v2291 = vand.u32 2147483647, %v2281
    %vm2292 = vcmp.eq.f32.partialorder %v2291, 8.507059e+37
    %v2293 = vand.u32 %v2281, 2147483648
    %v2294 = vor.u32 1.1754944e-38, %v2293
    %v2295 = vsel %vm2292, %v2294, %v2290
    %v2296 = vmul.f32 1.0, %v2295
    %v2297 = vtanh.pop %v2194
    %v2298 = vxor.u32 %v2195, 2147483648
    %v2299 = vmul.f32 %v2298, 1.442695
    %v2300 = vpow.pop %v2299
    %v2301 = vadd.f32 %v2300, 1.0
    %v2302 = vrcp.pop %v2301
    %v2303 = vmul.f32 %v2301, %v2302
    %v2304 = vsub.f32 1.0, %v2303
    %v2305 = vmul.f32 %v2302, %v2304
    %v2306 = vadd.f32 %v2302, %v2305
    %vm2307 = vweird.f32 %v2301
    %vm2308 = vweird.f32 %v2302
    %vm2309 = vmor %vm2307, %vm2308
    %v2310 = vsel %vm2309, %v2302, %v2306
    %v2311 = vand.u32 2147483647, %v2301
    %vm2312 = vcmp.eq.f32.partialorder %v2311, 8.507059e+37
    %v2313 = vand.u32 %v2301, 2147483648
    %v2314 = vor.u32 1.1754944e-38, %v2313
    %v2315 = vsel %vm2312, %v2314, %v2310
    %v2316 = vmul.f32 1.0, %v2315
    %v2317 = vmul.f32 %v2296, %v2007
    %v2318 = vmul.f32 %v2277, %v2297
    %v2319 = vadd.f32 %v2317, %v2318
    %v2320 = vtanh.pop %v2319
    %v2321 = vmul.f32 %v2316, %v2320
    %v2322 = vmul.f32 %v2015, %v2258
    %v2323 = vadd.f32 %v2013, %v2322
    %v2324 = vmul.f32 %v2011, %v2321
    %v2325 = vadd.f32 %v2017, %v2324
    %s2326 = scalar_lea.vmem [#allocation2], 160
    %v2327 = vld [vmem:[%s2326] sm:$0xff]
    %v2328 = vld [vmem:[%s2326 + $0x8] sm:$0xff]
    %v2329 = vld [vmem:[%s2326 + $0x10] sm:$0xff]
    %v2330 = vld [vmem:[%s2326 + $0x18] sm:$0xff]
    %2331 = vmatpush.msra.mxu0 %v708
    %2332 = vmatpush.msra.mxu0 %v704
    %2333 = vmatpush.msra.mxu0 %v700
    %2334 = vmatpush.msra.mxu0 %v696
    %2335 = vmatpush.msra.mxu0 %v692
    %2336 = vmatpush.msra.mxu0 %v688
    %2337 = vmatpush.msra.mxu0 %v684
    %2338 = vmatpush.msra.mxu0 %v680
    %2339 = vmatpush.msra.mxu0 %v676
    %2340 = vmatpush.msra.mxu0 %v672
    %2341 = vmatpush.msra.mxu0 %v668
    %2342 = vmatpush.msra.mxu0 %v664
    %2343 = vmatpush.msra.mxu0 %v660
    %2344 = vmatpush.msra.mxu0 %v656
    %2345 = vmatpush.msra.mxu0 %v652
    %2346 = vmatpush.msra.mxu0 %v648
    %2347 = vmatmul.f32.gmra.mxu0 %v2258
    %v2348 = vpop.f32.mrf.mxu0
    %v2349 = vadd.f32 0.0, %v2348
    %2350 = vdwg.mxu0
    %2351 = vmatpush.msra.mxu0 %v709
    %2352 = vmatpush.msra.mxu0 %v705
    %2353 = vmatpush.msra.mxu0 %v701
    %2354 = vmatpush.msra.mxu0 %v697
    %2355 = vmatpush.msra.mxu0 %v693
    %2356 = vmatpush.msra.mxu0 %v689
    %2357 = vmatpush.msra.mxu0 %v685
    %2358 = vmatpush.msra.mxu0 %v681
    %2359 = vmatpush.msra.mxu0 %v677
    %2360 = vmatpush.msra.mxu0 %v673
    %2361 = vmatpush.msra.mxu0 %v669
    %2362 = vmatpush.msra.mxu0 %v665
    %2363 = vmatpush.msra.mxu0 %v661
    %2364 = vmatpush.msra.mxu0 %v657
    %2365 = vmatpush.msra.mxu0 %v653
    %2366 = vmatpush.msra.mxu0 %v649
    %2367 = vmatmul.f32.gmra.mxu0 %v2258
    %v2368 = vpop.f32.mrf.mxu0
    %v2369 = vadd.f32 0.0, %v2368
    %2370 = vdwg.mxu0
    %2371 = vmatpush.msra.mxu0 %v710
    %2372 = vmatpush.msra.mxu0 %v706
    %2373 = vmatpush.msra.mxu0 %v702
    %2374 = vmatpush.msra.mxu0 %v698
    %2375 = vmatpush.msra.mxu0 %v694
    %2376 = vmatpush.msra.mxu0 %v690
    %2377 = vmatpush.msra.mxu0 %v686
    %2378 = vmatpush.msra.mxu0 %v682
    %2379 = vmatpush.msra.mxu0 %v678
    %2380 = vmatpush.msra.mxu0 %v674
    %2381 = vmatpush.msra.mxu0 %v670
    %2382 = vmatpush.msra.mxu0 %v666
    %2383 = vmatpush.msra.mxu0 %v662
    %2384 = vmatpush.msra.mxu0 %v658
    %2385 = vmatpush.msra.mxu0 %v654
    %2386 = vmatpush.msra.mxu0 %v650
    %2387 = vmatmul.f32.gmra.mxu0 %v2258
    %v2388 = vpop.f32.mrf.mxu0
    %v2389 = vadd.f32 0.0, %v2388
    %2390 = vdwg.mxu0
    %2391 = vmatpush.msra.mxu0 %v711
    %2392 = vmatpush.msra.mxu0 %v707
    %2393 = vmatpush.msra.mxu0 %v703
    %2394 = vmatpush.msra.mxu0 %v699
    %2395 = vmatpush.msra.mxu0 %v695
    %2396 = vmatpush.msra.mxu0 %v691
    %2397 = vmatpush.msra.mxu0 %v687
    %2398 = vmatpush.msra.mxu0 %v683
    %2399 = vmatpush.msra.mxu0 %v679
    %2400 = vmatpush.msra.mxu0 %v675
    %2401 = vmatpush.msra.mxu0 %v671
    %2402 = vmatpush.msra.mxu0 %v667
    %2403 = vmatpush.msra.mxu0 %v663
    %2404 = vmatpush.msra.mxu0 %v659
    %2405 = vmatpush.msra.mxu0 %v655
    %2406 = vmatpush.msra.mxu0 %v651
    %2407 = vmatmul.f32.gmra.mxu0 %v2258
    %v2408 = vpop.f32.mrf.mxu0
    %v2409 = vadd.f32 0.0, %v2408
    %2410 = vdwg.mxu0
    %v2411 = vadd.f32 %v2327, %v2349
    %v2412 = vadd.f32 %v2328, %v2369
    %v2413 = vadd.f32 %v2329, %v2389
    %v2414 = vadd.f32 %v2330, %v2409
    %s2415 = scalar_lea.vmem [#allocation3], 64
    %v2416 = vld [vmem:[%s2415] sm:$0xff]
    %v2417 = vld [vmem:[%s2415 + $0x8] sm:$0xff]
    %v2418 = vld [vmem:[%s2415 + $0x10] sm:$0xff]
    %v2419 = vld [vmem:[%s2415 + $0x18] sm:$0xff]
    %2420 = vmatpush.msra.mxu0 %v861
    %2421 = vmatpush.msra.mxu0 %v857
    %2422 = vmatpush.msra.mxu0 %v853
    %2423 = vmatpush.msra.mxu0 %v849
    %2424 = vmatpush.msra.mxu0 %v845
    %2425 = vmatpush.msra.mxu0 %v841
    %2426 = vmatpush.msra.mxu0 %v837
    %2427 = vmatpush.msra.mxu0 %v833
    %2428 = vmatpush.msra.mxu0 %v829
    %2429 = vmatpush.msra.mxu0 %v825
    %2430 = vmatpush.msra.mxu0 %v821
    %2431 = vmatpush.msra.mxu0 %v817
    %2432 = vmatpush.msra.mxu0 %v813
    %2433 = vmatpush.msra.mxu0 %v809
    %2434 = vmatpush.msra.mxu0 %v805
    %2435 = vmatpush.msra.mxu0 %v801
    %2436 = vmatmul.f32.gmra.mxu0 %v2321
    %v2437 = vpop.f32.mrf.mxu0
    %v2438 = vadd.f32 0.0, %v2437
    %2439 = vdwg.mxu0
    %2440 = vmatpush.msra.mxu0 %v862
    %2441 = vmatpush.msra.mxu0 %v858
    %2442 = vmatpush.msra.mxu0 %v854
    %2443 = vmatpush.msra.mxu0 %v850
    %2444 = vmatpush.msra.mxu0 %v846
    %2445 = vmatpush.msra.mxu0 %v842
    %2446 = vmatpush.msra.mxu0 %v838
    %2447 = vmatpush.msra.mxu0 %v834
    %2448 = vmatpush.msra.mxu0 %v830
    %2449 = vmatpush.msra.mxu0 %v826
    %2450 = vmatpush.msra.mxu0 %v822
    %2451 = vmatpush.msra.mxu0 %v818
    %2452 = vmatpush.msra.mxu0 %v814
    %2453 = vmatpush.msra.mxu0 %v810
    %2454 = vmatpush.msra.mxu0 %v806
    %2455 = vmatpush.msra.mxu0 %v802
    %2456 = vmatmul.f32.gmra.mxu0 %v2321
    %v2457 = vpop.f32.mrf.mxu0
    %v2458 = vadd.f32 0.0, %v2457
    %2459 = vdwg.mxu0
    %2460 = vmatpush.msra.mxu0 %v863
    %2461 = vmatpush.msra.mxu0 %v859
    %2462 = vmatpush.msra.mxu0 %v855
    %2463 = vmatpush.msra.mxu0 %v851
    %2464 = vmatpush.msra.mxu0 %v847
    %2465 = vmatpush.msra.mxu0 %v843
    %2466 = vmatpush.msra.mxu0 %v839
    %2467 = vmatpush.msra.mxu0 %v835
    %2468 = vmatpush.msra.mxu0 %v831
    %2469 = vmatpush.msra.mxu0 %v827
    %2470 = vmatpush.msra.mxu0 %v823
    %2471 = vmatpush.msra.mxu0 %v819
    %2472 = vmatpush.msra.mxu0 %v815
    %2473 = vmatpush.msra.mxu0 %v811
    %2474 = vmatpush.msra.mxu0 %v807
    %2475 = vmatpush.msra.mxu0 %v803
    %2476 = vmatmul.f32.gmra.mxu0 %v2321
    %v2477 = vpop.f32.mrf.mxu0
    %v2478 = vadd.f32 0.0, %v2477
    %2479 = vdwg.mxu0
    %2480 = vmatpush.msra.mxu0 %v864
    %2481 = vmatpush.msra.mxu0 %v860
    %2482 = vmatpush.msra.mxu0 %v856
    %2483 = vmatpush.msra.mxu0 %v852
    %2484 = vmatpush.msra.mxu0 %v848
    %2485 = vmatpush.msra.mxu0 %v844
    %2486 = vmatpush.msra.mxu0 %v840
    %2487 = vmatpush.msra.mxu0 %v836
    %2488 = vmatpush.msra.mxu0 %v832
    %2489 = vmatpush.msra.mxu0 %v828
    %2490 = vmatpush.msra.mxu0 %v824
    %2491 = vmatpush.msra.mxu0 %v820
    %2492 = vmatpush.msra.mxu0 %v816
    %2493 = vmatpush.msra.mxu0 %v812
    %2494 = vmatpush.msra.mxu0 %v808
    %2495 = vmatpush.msra.mxu0 %v804
    %2496 = vmatmul.f32.gmra.mxu0 %v2321
    %v2497 = vpop.f32.mrf.mxu0
    %v2498 = vadd.f32 0.0, %v2497
    %2499 = vdwg.mxu0
    %v2500 = vadd.f32 %v2416, %v2438
    %v2501 = vadd.f32 %v2417, %v2458
    %v2502 = vadd.f32 %v2418, %v2478
    %v2503 = vadd.f32 %v2419, %v2498
    %v2504 = vxor.u32 %v2411, 2147483648
    %v2505 = vmul.f32 %v2504, 1.442695
    %v2506 = vpow.pop %v2505
    %v2507 = vadd.f32 %v2506, 1.0
    %v2508 = vrcp.pop %v2507
    %v2509 = vmul.f32 %v2507, %v2508
    %v2510 = vsub.f32 1.0, %v2509
    %v2511 = vmul.f32 %v2508, %v2510
    %v2512 = vadd.f32 %v2508, %v2511
    %vm2513 = vweird.f32 %v2507
    %vm2514 = vweird.f32 %v2508
    %vm2515 = vmor %vm2513, %vm2514
    %v2516 = vsel %vm2515, %v2508, %v2512
    %v2517 = vand.u32 2147483647, %v2507
    %vm2518 = vcmp.eq.f32.partialorder %v2517, 8.507059e+37
    %v2519 = vand.u32 %v2507, 2147483648
    %v2520 = vor.u32 1.1754944e-38, %v2519
    %v2521 = vsel %vm2518, %v2520, %v2516
    %v2522 = vmul.f32 1.0, %v2521
    %v2523 = vxor.u32 %v2412, 2147483648
    %v2524 = vmul.f32 %v2523, 1.442695
    %v2525 = vpow.pop %v2524
    %v2526 = vadd.f32 %v2525, 1.0
    %v2527 = vrcp.pop %v2526
    %v2528 = vmul.f32 %v2526, %v2527
    %v2529 = vsub.f32 1.0, %v2528
    %v2530 = vmul.f32 %v2527, %v2529
    %v2531 = vadd.f32 %v2527, %v2530
    %vm2532 = vweird.f32 %v2526
    %vm2533 = vweird.f32 %v2527
    %vm2534 = vmor %vm2532, %vm2533
    %v2535 = vsel %vm2534, %v2527, %v2531
    %v2536 = vand.u32 2147483647, %v2526
    %vm2537 = vcmp.eq.f32.partialorder %v2536, 8.507059e+37
    %v2538 = vand.u32 %v2526, 2147483648
    %v2539 = vor.u32 1.1754944e-38, %v2538
    %v2540 = vsel %vm2537, %v2539, %v2535
    %v2541 = vmul.f32 1.0, %v2540
    %v2542 = vtanh.pop %v2413
    %v2543 = vxor.u32 %v2414, 2147483648
    %v2544 = vmul.f32 %v2543, 1.442695
    %v2545 = vpow.pop %v2544
    %v2546 = vadd.f32 %v2545, 1.0
    %v2547 = vrcp.pop %v2546
    %v2548 = vmul.f32 %v2546, %v2547
    %v2549 = vsub.f32 1.0, %v2548
    %v2550 = vmul.f32 %v2547, %v2549
    %v2551 = vadd.f32 %v2547, %v2550
    %vm2552 = vweird.f32 %v2546
    %vm2553 = vweird.f32 %v2547
    %vm2554 = vmor %vm2552, %vm2553
    %v2555 = vsel %vm2554, %v2547, %v2551
    %v2556 = vand.u32 2147483647, %v2546
    %vm2557 = vcmp.eq.f32.partialorder %v2556, 8.507059e+37
    %v2558 = vand.u32 %v2546, 2147483648
    %v2559 = vor.u32 1.1754944e-38, %v2558
    %v2560 = vsel %vm2557, %v2559, %v2555
    %v2561 = vmul.f32 1.0, %v2560
    %v2562 = vmul.f32 %v2541, %v2256
    %v2563 = vmul.f32 %v2522, %v2542
    %v2564 = vadd.f32 %v2562, %v2563
    %v2565 = vtanh.pop %v2564
    %v2566 = vmul.f32 %v2561, %v2565
    %v2567 = vxor.u32 %v2500, 2147483648
    %v2568 = vmul.f32 %v2567, 1.442695
    %v2569 = vpow.pop %v2568
    %v2570 = vadd.f32 %v2569, 1.0
    %v2571 = vrcp.pop %v2570
    %v2572 = vmul.f32 %v2570, %v2571
    %v2573 = vsub.f32 1.0, %v2572
    %v2574 = vmul.f32 %v2571, %v2573
    %v2575 = vadd.f32 %v2571, %v2574
    %vm2576 = vweird.f32 %v2570
    %vm2577 = vweird.f32 %v2571
    %vm2578 = vmor %vm2576, %vm2577
    %v2579 = vsel %vm2578, %v2571, %v2575
    %v2580 = vand.u32 2147483647, %v2570
    %vm2581 = vcmp.eq.f32.partialorder %v2580, 8.507059e+37
    %v2582 = vand.u32 %v2570, 2147483648
    %v2583 = vor.u32 1.1754944e-38, %v2582
    %v2584 = vsel %vm2581, %v2583, %v2579
    %v2585 = vmul.f32 1.0, %v2584
    %v2586 = vxor.u32 %v2501, 2147483648
    %v2587 = vmul.f32 %v2586, 1.442695
    %v2588 = vpow.pop %v2587
    %v2589 = vadd.f32 %v2588, 1.0
    %v2590 = vrcp.pop %v2589
    %v2591 = vmul.f32 %v2589, %v2590
    %v2592 = vsub.f32 1.0, %v2591
    %v2593 = vmul.f32 %v2590, %v2592
    %v2594 = vadd.f32 %v2590, %v2593
    %vm2595 = vweird.f32 %v2589
    %vm2596 = vweird.f32 %v2590
    %vm2597 = vmor %vm2595, %vm2596
    %v2598 = vsel %vm2597, %v2590, %v2594
    %v2599 = vand.u32 2147483647, %v2589
    %vm2600 = vcmp.eq.f32.partialorder %v2599, 8.507059e+37
    %v2601 = vand.u32 %v2589, 2147483648
    %v2602 = vor.u32 1.1754944e-38, %v2601
    %v2603 = vsel %vm2600, %v2602, %v2598
    %v2604 = vmul.f32 1.0, %v2603
    %v2605 = vtanh.pop %v2502
    %v2606 = vxor.u32 %v2503, 2147483648
    %v2607 = vmul.f32 %v2606, 1.442695
    %v2608 = vpow.pop %v2607
    %v2609 = vadd.f32 %v2608, 1.0
    %v2610 = vrcp.pop %v2609
    %v2611 = vmul.f32 %v2609, %v2610
    %v2612 = vsub.f32 1.0, %v2611
    %v2613 = vmul.f32 %v2610, %v2612
    %v2614 = vadd.f32 %v2610, %v2613
    %vm2615 = vweird.f32 %v2609
    %vm2616 = vweird.f32 %v2610
    %vm2617 = vmor %vm2615, %vm2616
    %v2618 = vsel %vm2617, %v2610, %v2614
    %v2619 = vand.u32 2147483647, %v2609
    %vm2620 = vcmp.eq.f32.partialorder %v2619, 8.507059e+37
    %v2621 = vand.u32 %v2609, 2147483648
    %v2622 = vor.u32 1.1754944e-38, %v2621
    %v2623 = vsel %vm2620, %v2622, %v2618
    %v2624 = vmul.f32 1.0, %v2623
    %v2625 = vmul.f32 %v2604, %v2319
    %v2626 = vmul.f32 %v2585, %v2605
    %v2627 = vadd.f32 %v2625, %v2626
    %v2628 = vtanh.pop %v2627
    %v2629 = vmul.f32 %v2624, %v2628
    %v2630 = vmul.f32 %v1703, %v2566
    %v2631 = vadd.f32 %v2323, %v2630
    %v2632 = vmul.f32 %v1699, %v2629
    %v2633 = vadd.f32 %v2325, %v2632
    %s2634 = scalar_lea.vmem [#allocation2], 192
    %v2635 = vld [vmem:[%s2634] sm:$0xff]
    %v2636 = vld [vmem:[%s2634 + $0x8] sm:$0xff]
    %v2637 = vld [vmem:[%s2634 + $0x10] sm:$0xff]
    %v2638 = vld [vmem:[%s2634 + $0x18] sm:$0xff]
    %2639 = vmatpush.msra.mxu0 %v708
    %2640 = vmatpush.msra.mxu0 %v704
    %2641 = vmatpush.msra.mxu0 %v700
    %2642 = vmatpush.msra.mxu0 %v696
    %2643 = vmatpush.msra.mxu0 %v692
    %2644 = vmatpush.msra.mxu0 %v688
    %2645 = vmatpush.msra.mxu0 %v684
    %2646 = vmatpush.msra.mxu0 %v680
    %2647 = vmatpush.msra.mxu0 %v676
    %2648 = vmatpush.msra.mxu0 %v672
    %2649 = vmatpush.msra.mxu0 %v668
    %2650 = vmatpush.msra.mxu0 %v664
    %2651 = vmatpush.msra.mxu0 %v660
    %2652 = vmatpush.msra.mxu0 %v656
    %2653 = vmatpush.msra.mxu0 %v652
    %2654 = vmatpush.msra.mxu0 %v648
    %2655 = vmatmul.f32.gmra.mxu0 %v2566
    %v2656 = vpop.f32.mrf.mxu0
    %v2657 = vadd.f32 0.0, %v2656
    %2658 = vdwg.mxu0
    %2659 = vmatpush.msra.mxu0 %v709
    %2660 = vmatpush.msra.mxu0 %v705
    %2661 = vmatpush.msra.mxu0 %v701
    %2662 = vmatpush.msra.mxu0 %v697
    %2663 = vmatpush.msra.mxu0 %v693
    %2664 = vmatpush.msra.mxu0 %v689
    %2665 = vmatpush.msra.mxu0 %v685
    %2666 = vmatpush.msra.mxu0 %v681
    %2667 = vmatpush.msra.mxu0 %v677
    %2668 = vmatpush.msra.mxu0 %v673
    %2669 = vmatpush.msra.mxu0 %v669
    %2670 = vmatpush.msra.mxu0 %v665
    %2671 = vmatpush.msra.mxu0 %v661
    %2672 = vmatpush.msra.mxu0 %v657
    %2673 = vmatpush.msra.mxu0 %v653
    %2674 = vmatpush.msra.mxu0 %v649
    %2675 = vmatmul.f32.gmra.mxu0 %v2566
    %v2676 = vpop.f32.mrf.mxu0
    %v2677 = vadd.f32 0.0, %v2676
    %2678 = vdwg.mxu0
    %2679 = vmatpush.msra.mxu0 %v710
    %2680 = vmatpush.msra.mxu0 %v706
    %2681 = vmatpush.msra.mxu0 %v702
    %2682 = vmatpush.msra.mxu0 %v698
    %2683 = vmatpush.msra.mxu0 %v694
    %2684 = vmatpush.msra.mxu0 %v690
    %2685 = vmatpush.msra.mxu0 %v686
    %2686 = vmatpush.msra.mxu0 %v682
    %2687 = vmatpush.msra.mxu0 %v678
    %2688 = vmatpush.msra.mxu0 %v674
    %2689 = vmatpush.msra.mxu0 %v670
    %2690 = vmatpush.msra.mxu0 %v666
    %2691 = vmatpush.msra.mxu0 %v662
    %2692 = vmatpush.msra.mxu0 %v658
    %2693 = vmatpush.msra.mxu0 %v654
    %2694 = vmatpush.msra.mxu0 %v650
    %2695 = vmatmul.f32.gmra.mxu0 %v2566
    %v2696 = vpop.f32.mrf.mxu0
    %v2697 = vadd.f32 0.0, %v2696
    %2698 = vdwg.mxu0
    %2699 = vmatpush.msra.mxu0 %v711
    %2700 = vmatpush.msra.mxu0 %v707
    %2701 = vmatpush.msra.mxu0 %v703
    %2702 = vmatpush.msra.mxu0 %v699
    %2703 = vmatpush.msra.mxu0 %v695
    %2704 = vmatpush.msra.mxu0 %v691
    %2705 = vmatpush.msra.mxu0 %v687
    %2706 = vmatpush.msra.mxu0 %v683
    %2707 = vmatpush.msra.mxu0 %v679
    %2708 = vmatpush.msra.mxu0 %v675
    %2709 = vmatpush.msra.mxu0 %v671
    %2710 = vmatpush.msra.mxu0 %v667
    %2711 = vmatpush.msra.mxu0 %v663
    %2712 = vmatpush.msra.mxu0 %v659
    %2713 = vmatpush.msra.mxu0 %v655
    %2714 = vmatpush.msra.mxu0 %v651
    %2715 = vmatmul.f32.gmra.mxu0 %v2566
    %v2716 = vpop.f32.mrf.mxu0
    %v2717 = vadd.f32 0.0, %v2716
    %2718 = vdwg.mxu0
    %v2719 = vadd.f32 %v2635, %v2657
    %v2720 = vadd.f32 %v2636, %v2677
    %v2721 = vadd.f32 %v2637, %v2697
    %v2722 = vadd.f32 %v2638, %v2717
    %s2723 = scalar_lea.vmem [#allocation3], 32
    %v2724 = vld [vmem:[%s2723] sm:$0xff]
    %v2725 = vld [vmem:[%s2723 + $0x8] sm:$0xff]
    %v2726 = vld [vmem:[%s2723 + $0x10] sm:$0xff]
    %v2727 = vld [vmem:[%s2723 + $0x18] sm:$0xff]
    %2728 = vmatpush.msra.mxu0 %v861
    %2729 = vmatpush.msra.mxu0 %v857
    %2730 = vmatpush.msra.mxu0 %v853
    %2731 = vmatpush.msra.mxu0 %v849
    %2732 = vmatpush.msra.mxu0 %v845
    %2733 = vmatpush.msra.mxu0 %v841
    %2734 = vmatpush.msra.mxu0 %v837
    %2735 = vmatpush.msra.mxu0 %v833
    %2736 = vmatpush.msra.mxu0 %v829
    %2737 = vmatpush.msra.mxu0 %v825
    %2738 = vmatpush.msra.mxu0 %v821
    %2739 = vmatpush.msra.mxu0 %v817
    %2740 = vmatpush.msra.mxu0 %v813
    %2741 = vmatpush.msra.mxu0 %v809
    %2742 = vmatpush.msra.mxu0 %v805
    %2743 = vmatpush.msra.mxu0 %v801
    %2744 = vmatmul.f32.gmra.mxu0 %v2629
    %v2745 = vpop.f32.mrf.mxu0
    %v2746 = vadd.f32 0.0, %v2745
    %2747 = vdwg.mxu0
    %2748 = vmatpush.msra.mxu0 %v862
    %2749 = vmatpush.msra.mxu0 %v858
    %2750 = vmatpush.msra.mxu0 %v854
    %2751 = vmatpush.msra.mxu0 %v850
    %2752 = vmatpush.msra.mxu0 %v846
    %2753 = vmatpush.msra.mxu0 %v842
    %2754 = vmatpush.msra.mxu0 %v838
    %2755 = vmatpush.msra.mxu0 %v834
    %2756 = vmatpush.msra.mxu0 %v830
    %2757 = vmatpush.msra.mxu0 %v826
    %2758 = vmatpush.msra.mxu0 %v822
    %2759 = vmatpush.msra.mxu0 %v818
    %2760 = vmatpush.msra.mxu0 %v814
    %2761 = vmatpush.msra.mxu0 %v810
    %2762 = vmatpush.msra.mxu0 %v806
    %2763 = vmatpush.msra.mxu0 %v802
    %2764 = vmatmul.f32.gmra.mxu0 %v2629
    %v2765 = vpop.f32.mrf.mxu0
    %v2766 = vadd.f32 0.0, %v2765
    %2767 = vdwg.mxu0
    %2768 = vmatpush.msra.mxu0 %v863
    %2769 = vmatpush.msra.mxu0 %v859
    %2770 = vmatpush.msra.mxu0 %v855
    %2771 = vmatpush.msra.mxu0 %v851
    %2772 = vmatpush.msra.mxu0 %v847
    %2773 = vmatpush.msra.mxu0 %v843
    %2774 = vmatpush.msra.mxu0 %v839
    %2775 = vmatpush.msra.mxu0 %v835
    %2776 = vmatpush.msra.mxu0 %v831
    %2777 = vmatpush.msra.mxu0 %v827
    %2778 = vmatpush.msra.mxu0 %v823
    %2779 = vmatpush.msra.mxu0 %v819
    %2780 = vmatpush.msra.mxu0 %v815
    %2781 = vmatpush.msra.mxu0 %v811
    %2782 = vmatpush.msra.mxu0 %v807
    %2783 = vmatpush.msra.mxu0 %v803
    %2784 = vmatmul.f32.gmra.mxu0 %v2629
    %v2785 = vpop.f32.mrf.mxu0
    %v2786 = vadd.f32 0.0, %v2785
    %2787 = vdwg.mxu0
    %2788 = vmatpush.msra.mxu0 %v864
    %2789 = vmatpush.msra.mxu0 %v860
    %2790 = vmatpush.msra.mxu0 %v856
    %2791 = vmatpush.msra.mxu0 %v852
    %2792 = vmatpush.msra.mxu0 %v848
    %2793 = vmatpush.msra.mxu0 %v844
    %2794 = vmatpush.msra.mxu0 %v840
    %2795 = vmatpush.msra.mxu0 %v836
    %2796 = vmatpush.msra.mxu0 %v832
    %2797 = vmatpush.msra.mxu0 %v828
    %2798 = vmatpush.msra.mxu0 %v824
    %2799 = vmatpush.msra.mxu0 %v820
    %2800 = vmatpush.msra.mxu0 %v816
    %2801 = vmatpush.msra.mxu0 %v812
    %2802 = vmatpush.msra.mxu0 %v808
    %2803 = vmatpush.msra.mxu0 %v804
    %2804 = vmatmul.f32.gmra.mxu0 %v2629
    %v2805 = vpop.f32.mrf.mxu0
    %v2806 = vadd.f32 0.0, %v2805
    %2807 = vdwg.mxu0
    %v2808 = vadd.f32 %v2724, %v2746
    %v2809 = vadd.f32 %v2725, %v2766
    %v2810 = vadd.f32 %v2726, %v2786
    %v2811 = vadd.f32 %v2727, %v2806
    %v2812 = vxor.u32 %v2719, 2147483648
    %v2813 = vmul.f32 %v2812, 1.442695
    %v2814 = vpow.pop %v2813
    %v2815 = vadd.f32 %v2814, 1.0
    %v2816 = vrcp.pop %v2815
    %v2817 = vmul.f32 %v2815, %v2816
    %v2818 = vsub.f32 1.0, %v2817
    %v2819 = vmul.f32 %v2816, %v2818
    %v2820 = vadd.f32 %v2816, %v2819
    %vm2821 = vweird.f32 %v2815
    %vm2822 = vweird.f32 %v2816
    %vm2823 = vmor %vm2821, %vm2822
    %v2824 = vsel %vm2823, %v2816, %v2820
    %v2825 = vand.u32 2147483647, %v2815
    %vm2826 = vcmp.eq.f32.partialorder %v2825, 8.507059e+37
    %v2827 = vand.u32 %v2815, 2147483648
    %v2828 = vor.u32 1.1754944e-38, %v2827
    %v2829 = vsel %vm2826, %v2828, %v2824
    %v2830 = vmul.f32 1.0, %v2829
    %v2831 = vxor.u32 %v2720, 2147483648
    %v2832 = vmul.f32 %v2831, 1.442695
    %v2833 = vpow.pop %v2832
    %v2834 = vadd.f32 %v2833, 1.0
    %v2835 = vrcp.pop %v2834
    %v2836 = vmul.f32 %v2834, %v2835
    %v2837 = vsub.f32 1.0, %v2836
    %v2838 = vmul.f32 %v2835, %v2837
    %v2839 = vadd.f32 %v2835, %v2838
    %vm2840 = vweird.f32 %v2834
    %vm2841 = vweird.f32 %v2835
    %vm2842 = vmor %vm2840, %vm2841
    %v2843 = vsel %vm2842, %v2835, %v2839
    %v2844 = vand.u32 2147483647, %v2834
    %vm2845 = vcmp.eq.f32.partialorder %v2844, 8.507059e+37
    %v2846 = vand.u32 %v2834, 2147483648
    %v2847 = vor.u32 1.1754944e-38, %v2846
    %v2848 = vsel %vm2845, %v2847, %v2843
    %v2849 = vmul.f32 1.0, %v2848
    %v2850 = vtanh.pop %v2721
    %v2851 = vxor.u32 %v2722, 2147483648
    %v2852 = vmul.f32 %v2851, 1.442695
    %v2853 = vpow.pop %v2852
    %v2854 = vadd.f32 %v2853, 1.0
    %v2855 = vrcp.pop %v2854
    %v2856 = vmul.f32 %v2854, %v2855
    %v2857 = vsub.f32 1.0, %v2856
    %v2858 = vmul.f32 %v2855, %v2857
    %v2859 = vadd.f32 %v2855, %v2858
    %vm2860 = vweird.f32 %v2854
    %vm2861 = vweird.f32 %v2855
    %vm2862 = vmor %vm2860, %vm2861
    %v2863 = vsel %vm2862, %v2855, %v2859
    %v2864 = vand.u32 2147483647, %v2854
    %vm2865 = vcmp.eq.f32.partialorder %v2864, 8.507059e+37
    %v2866 = vand.u32 %v2854, 2147483648
    %v2867 = vor.u32 1.1754944e-38, %v2866
    %v2868 = vsel %vm2865, %v2867, %v2863
    %v2869 = vmul.f32 1.0, %v2868
    %v2870 = vmul.f32 %v2849, %v2564
    %v2871 = vmul.f32 %v2830, %v2850
    %v2872 = vadd.f32 %v2870, %v2871
    %v2873 = vtanh.pop %v2872
    %v2874 = vmul.f32 %v2869, %v2873
    %v2875 = vxor.u32 %v2808, 2147483648
    %v2876 = vmul.f32 %v2875, 1.442695
    %v2877 = vpow.pop %v2876
    %v2878 = vadd.f32 %v2877, 1.0
    %v2879 = vrcp.pop %v2878
    %v2880 = vmul.f32 %v2878, %v2879
    %v2881 = vsub.f32 1.0, %v2880
    %v2882 = vmul.f32 %v2879, %v2881
    %v2883 = vadd.f32 %v2879, %v2882
    %vm2884 = vweird.f32 %v2878
    %vm2885 = vweird.f32 %v2879
    %vm2886 = vmor %vm2884, %vm2885
    %v2887 = vsel %vm2886, %v2879, %v2883
    %v2888 = vand.u32 2147483647, %v2878
    %vm2889 = vcmp.eq.f32.partialorder %v2888, 8.507059e+37
    %v2890 = vand.u32 %v2878, 2147483648
    %v2891 = vor.u32 1.1754944e-38, %v2890
    %v2892 = vsel %vm2889, %v2891, %v2887
    %v2893 = vmul.f32 1.0, %v2892
    %v2894 = vxor.u32 %v2809, 2147483648
    %v2895 = vmul.f32 %v2894, 1.442695
    %v2896 = vpow.pop %v2895
    %v2897 = vadd.f32 %v2896, 1.0
    %v2898 = vrcp.pop %v2897
    %v2899 = vmul.f32 %v2897, %v2898
    %v2900 = vsub.f32 1.0, %v2899
    %v2901 = vmul.f32 %v2898, %v2900
    %v2902 = vadd.f32 %v2898, %v2901
    %vm2903 = vweird.f32 %v2897
    %vm2904 = vweird.f32 %v2898
    %vm2905 = vmor %vm2903, %vm2904
    %v2906 = vsel %vm2905, %v2898, %v2902
    %v2907 = vand.u32 2147483647, %v2897
    %vm2908 = vcmp.eq.f32.partialorder %v2907, 8.507059e+37
    %v2909 = vand.u32 %v2897, 2147483648
    %v2910 = vor.u32 1.1754944e-38, %v2909
    %v2911 = vsel %vm2908, %v2910, %v2906
    %v2912 = vmul.f32 1.0, %v2911
    %v2913 = vtanh.pop %v2810
    %v2914 = vxor.u32 %v2811, 2147483648
    %v2915 = vmul.f32 %v2914, 1.442695
    %v2916 = vpow.pop %v2915
    %v2917 = vadd.f32 %v2916, 1.0
    %v2918 = vrcp.pop %v2917
    %v2919 = vmul.f32 %v2917, %v2918
    %v2920 = vsub.f32 1.0, %v2919
    %v2921 = vmul.f32 %v2918, %v2920
    %v2922 = vadd.f32 %v2918, %v2921
    %vm2923 = vweird.f32 %v2917
    %vm2924 = vweird.f32 %v2918
    %vm2925 = vmor %vm2923, %vm2924
    %v2926 = vsel %vm2925, %v2918, %v2922
    %v2927 = vand.u32 2147483647, %v2917
    %vm2928 = vcmp.eq.f32.partialorder %v2927, 8.507059e+37
    %v2929 = vand.u32 %v2917, 2147483648
    %v2930 = vor.u32 1.1754944e-38, %v2929
    %v2931 = vsel %vm2928, %v2930, %v2926
    %v2932 = vmul.f32 1.0, %v2931
    %v2933 = vmul.f32 %v2912, %v2627
    %v2934 = vmul.f32 %v2893, %v2913
    %v2935 = vadd.f32 %v2933, %v2934
    %v2936 = vtanh.pop %v2935
    %v2937 = vmul.f32 %v2932, %v2936
    %v2938 = vmul.f32 %v1391, %v2874
    %v2939 = vadd.f32 %v2631, %v2938
    %v2940 = vmul.f32 %v1387, %v2937
    %v2941 = vadd.f32 %v2633, %v2940
    %s2942 = scalar_lea.vmem [#allocation2], 224
    %v2943 = vld [vmem:[%s2942] sm:$0xff]
    %v2944 = vld [vmem:[%s2942 + $0x8] sm:$0xff]
    %v2945 = vld [vmem:[%s2942 + $0x10] sm:$0xff]
    %v2946 = vld [vmem:[%s2942 + $0x18] sm:$0xff]
    %2947 = vmatpush.msra.mxu0 %v708
    %2948 = vmatpush.msra.mxu0 %v704
    %2949 = vmatpush.msra.mxu0 %v700
    %2950 = vmatpush.msra.mxu0 %v696
    %2951 = vmatpush.msra.mxu0 %v692
    %2952 = vmatpush.msra.mxu0 %v688
    %2953 = vmatpush.msra.mxu0 %v684
    %2954 = vmatpush.msra.mxu0 %v680
    %2955 = vmatpush.msra.mxu0 %v676
    %2956 = vmatpush.msra.mxu0 %v672
    %2957 = vmatpush.msra.mxu0 %v668
    %2958 = vmatpush.msra.mxu0 %v664
    %2959 = vmatpush.msra.mxu0 %v660
    %2960 = vmatpush.msra.mxu0 %v656
    %2961 = vmatpush.msra.mxu0 %v652
    %2962 = vmatpush.msra.mxu0 %v648
    %2963 = vmatmul.f32.gmra.mxu0 %v2874
    %v2964 = vpop.f32.mrf.mxu0
    %v2965 = vadd.f32 0.0, %v2964
    %2966 = vdwg.mxu0
    %2967 = vmatpush.msra.mxu0 %v709
    %2968 = vmatpush.msra.mxu0 %v705
    %2969 = vmatpush.msra.mxu0 %v701
    %2970 = vmatpush.msra.mxu0 %v697
    %2971 = vmatpush.msra.mxu0 %v693
    %2972 = vmatpush.msra.mxu0 %v689
    %2973 = vmatpush.msra.mxu0 %v685
    %2974 = vmatpush.msra.mxu0 %v681
    %2975 = vmatpush.msra.mxu0 %v677
    %2976 = vmatpush.msra.mxu0 %v673
    %2977 = vmatpush.msra.mxu0 %v669
    %2978 = vmatpush.msra.mxu0 %v665
    %2979 = vmatpush.msra.mxu0 %v661
    %2980 = vmatpush.msra.mxu0 %v657
    %2981 = vmatpush.msra.mxu0 %v653
    %2982 = vmatpush.msra.mxu0 %v649
    %2983 = vmatmul.f32.gmra.mxu0 %v2874
    %v2984 = vpop.f32.mrf.mxu0
    %v2985 = vadd.f32 0.0, %v2984
    %2986 = vdwg.mxu0
    %2987 = vmatpush.msra.mxu0 %v710
    %2988 = vmatpush.msra.mxu0 %v706
    %2989 = vmatpush.msra.mxu0 %v702
    %2990 = vmatpush.msra.mxu0 %v698
    %2991 = vmatpush.msra.mxu0 %v694
    %2992 = vmatpush.msra.mxu0 %v690
    %2993 = vmatpush.msra.mxu0 %v686
    %2994 = vmatpush.msra.mxu0 %v682
    %2995 = vmatpush.msra.mxu0 %v678
    %2996 = vmatpush.msra.mxu0 %v674
    %2997 = vmatpush.msra.mxu0 %v670
    %2998 = vmatpush.msra.mxu0 %v666
    %2999 = vmatpush.msra.mxu0 %v662
    %3000 = vmatpush.msra.mxu0 %v658
    %3001 = vmatpush.msra.mxu0 %v654
    %3002 = vmatpush.msra.mxu0 %v650
    %3003 = vmatmul.f32.gmra.mxu0 %v2874
    %v3004 = vpop.f32.mrf.mxu0
    %v3005 = vadd.f32 0.0, %v3004
    %3006 = vdwg.mxu0
    %3007 = vmatpush.msra.mxu0 %v711
    %3008 = vmatpush.msra.mxu0 %v707
    %3009 = vmatpush.msra.mxu0 %v703
    %3010 = vmatpush.msra.mxu0 %v699
    %3011 = vmatpush.msra.mxu0 %v695
    %3012 = vmatpush.msra.mxu0 %v691
    %3013 = vmatpush.msra.mxu0 %v687
    %3014 = vmatpush.msra.mxu0 %v683
    %3015 = vmatpush.msra.mxu0 %v679
    %3016 = vmatpush.msra.mxu0 %v675
    %3017 = vmatpush.msra.mxu0 %v671
    %3018 = vmatpush.msra.mxu0 %v667
    %3019 = vmatpush.msra.mxu0 %v663
    %3020 = vmatpush.msra.mxu0 %v659
    %3021 = vmatpush.msra.mxu0 %v655
    %3022 = vmatpush.msra.mxu0 %v651
    %3023 = vmatmul.f32.gmra.mxu0 %v2874
    %v3024 = vpop.f32.mrf.mxu0
    %v3025 = vadd.f32 0.0, %v3024
    %3026 = vdwg.mxu0
    %v3027 = vadd.f32 %v2943, %v2965
    %v3028 = vadd.f32 %v2944, %v2985
    %v3029 = vadd.f32 %v2945, %v3005
    %v3030 = vadd.f32 %v2946, %v3025
    %v3031 = vld [vmem:[#allocation3] sm:$0xff]
    %v3032 = vld [vmem:[#allocation3 + $0x8] sm:$0xff]
    %v3033 = vld [vmem:[#allocation3 + $0x10] sm:$0xff]
    %v3034 = vld [vmem:[#allocation3 + $0x18] sm:$0xff]
    %3035 = vmatpush.msra.mxu0 %v861
    %3036 = vmatpush.msra.mxu0 %v857
    %3037 = vmatpush.msra.mxu0 %v853
    %3038 = vmatpush.msra.mxu0 %v849
    %3039 = vmatpush.msra.mxu0 %v845
    %3040 = vmatpush.msra.mxu0 %v841
    %3041 = vmatpush.msra.mxu0 %v837
    %3042 = vmatpush.msra.mxu0 %v833
    %3043 = vmatpush.msra.mxu0 %v829
    %3044 = vmatpush.msra.mxu0 %v825
    %3045 = vmatpush.msra.mxu0 %v821
    %3046 = vmatpush.msra.mxu0 %v817
    %3047 = vmatpush.msra.mxu0 %v813
    %3048 = vmatpush.msra.mxu0 %v809
    %3049 = vmatpush.msra.mxu0 %v805
    %3050 = vmatpush.msra.mxu0 %v801
    %3051 = vmatmul.f32.gmra.mxu0 %v2937
    %v3052 = vpop.f32.mrf.mxu0
    %v3053 = vadd.f32 0.0, %v3052
    %3054 = vdwg.mxu0
    %3055 = vmatpush.msra.mxu0 %v862
    %3056 = vmatpush.msra.mxu0 %v858
    %3057 = vmatpush.msra.mxu0 %v854
    %3058 = vmatpush.msra.mxu0 %v850
    %3059 = vmatpush.msra.mxu0 %v846
    %3060 = vmatpush.msra.mxu0 %v842
    %3061 = vmatpush.msra.mxu0 %v838
    %3062 = vmatpush.msra.mxu0 %v834
    %3063 = vmatpush.msra.mxu0 %v830
    %3064 = vmatpush.msra.mxu0 %v826
    %3065 = vmatpush.msra.mxu0 %v822
    %3066 = vmatpush.msra.mxu0 %v818
    %3067 = vmatpush.msra.mxu0 %v814
    %3068 = vmatpush.msra.mxu0 %v810
    %3069 = vmatpush.msra.mxu0 %v806
    %3070 = vmatpush.msra.mxu0 %v802
    %3071 = vmatmul.f32.gmra.mxu0 %v2937
    %v3072 = vpop.f32.mrf.mxu0
    %v3073 = vadd.f32 0.0, %v3072
    %3074 = vdwg.mxu0
    %3075 = vmatpush.msra.mxu0 %v863
    %3076 = vmatpush.msra.mxu0 %v859
    %3077 = vmatpush.msra.mxu0 %v855
    %3078 = vmatpush.msra.mxu0 %v851
    %3079 = vmatpush.msra.mxu0 %v847
    %3080 = vmatpush.msra.mxu0 %v843
    %3081 = vmatpush.msra.mxu0 %v839
    %3082 = vmatpush.msra.mxu0 %v835
    %3083 = vmatpush.msra.mxu0 %v831
    %3084 = vmatpush.msra.mxu0 %v827
    %3085 = vmatpush.msra.mxu0 %v823
    %3086 = vmatpush.msra.mxu0 %v819
    %3087 = vmatpush.msra.mxu0 %v815
    %3088 = vmatpush.msra.mxu0 %v811
    %3089 = vmatpush.msra.mxu0 %v807
    %3090 = vmatpush.msra.mxu0 %v803
    %3091 = vmatmul.f32.gmra.mxu0 %v2937
    %v3092 = vpop.f32.mrf.mxu0
    %v3093 = vadd.f32 0.0, %v3092
    %3094 = vdwg.mxu0
    %3095 = vmatpush.msra.mxu0 %v864
    %3096 = vmatpush.msra.mxu0 %v860
    %3097 = vmatpush.msra.mxu0 %v856
    %3098 = vmatpush.msra.mxu0 %v852
    %3099 = vmatpush.msra.mxu0 %v848
    %3100 = vmatpush.msra.mxu0 %v844
    %3101 = vmatpush.msra.mxu0 %v840
    %3102 = vmatpush.msra.mxu0 %v836
    %3103 = vmatpush.msra.mxu0 %v832
    %3104 = vmatpush.msra.mxu0 %v828
    %3105 = vmatpush.msra.mxu0 %v824
    %3106 = vmatpush.msra.mxu0 %v820
    %3107 = vmatpush.msra.mxu0 %v816
    %3108 = vmatpush.msra.mxu0 %v812
    %3109 = vmatpush.msra.mxu0 %v808
    %3110 = vmatpush.msra.mxu0 %v804
    %3111 = vmatmul.f32.gmra.mxu0 %v2937
    %v3112 = vpop.f32.mrf.mxu0
    %v3113 = vadd.f32 0.0, %v3112
    %3114 = vdwg.mxu0
    %v3115 = vadd.f32 %v3031, %v3053
    %v3116 = vadd.f32 %v3032, %v3073
    %v3117 = vadd.f32 %v3033, %v3093
    %v3118 = vadd.f32 %v3034, %v3113
    %v3119 = vxor.u32 %v3027, 2147483648
    %v3120 = vmul.f32 %v3119, 1.442695
    %v3121 = vpow.pop %v3120
    %v3122 = vadd.f32 %v3121, 1.0
    %v3123 = vrcp.pop %v3122
    %v3124 = vmul.f32 %v3122, %v3123
    %v3125 = vsub.f32 1.0, %v3124
    %v3126 = vmul.f32 %v3123, %v3125
    %v3127 = vadd.f32 %v3123, %v3126
    %vm3128 = vweird.f32 %v3122
    %vm3129 = vweird.f32 %v3123
    %vm3130 = vmor %vm3128, %vm3129
    %v3131 = vsel %vm3130, %v3123, %v3127
    %v3132 = vand.u32 2147483647, %v3122
    %vm3133 = vcmp.eq.f32.partialorder %v3132, 8.507059e+37
    %v3134 = vand.u32 %v3122, 2147483648
    %v3135 = vor.u32 1.1754944e-38, %v3134
    %v3136 = vsel %vm3133, %v3135, %v3131
    %v3137 = vmul.f32 1.0, %v3136
    %v3138 = vxor.u32 %v3028, 2147483648
    %v3139 = vmul.f32 %v3138, 1.442695
    %v3140 = vpow.pop %v3139
    %v3141 = vadd.f32 %v3140, 1.0
    %v3142 = vrcp.pop %v3141
    %v3143 = vmul.f32 %v3141, %v3142
    %v3144 = vsub.f32 1.0, %v3143
    %v3145 = vmul.f32 %v3142, %v3144
    %v3146 = vadd.f32 %v3142, %v3145
    %vm3147 = vweird.f32 %v3141
    %vm3148 = vweird.f32 %v3142
    %vm3149 = vmor %vm3147, %vm3148
    %v3150 = vsel %vm3149, %v3142, %v3146
    %v3151 = vand.u32 2147483647, %v3141
    %vm3152 = vcmp.eq.f32.partialorder %v3151, 8.507059e+37
    %v3153 = vand.u32 %v3141, 2147483648
    %v3154 = vor.u32 1.1754944e-38, %v3153
    %v3155 = vsel %vm3152, %v3154, %v3150
    %v3156 = vmul.f32 1.0, %v3155
    %v3157 = vtanh.pop %v3029
    %v3158 = vxor.u32 %v3030, 2147483648
    %v3159 = vmul.f32 %v3158, 1.442695
    %v3160 = vpow.pop %v3159
    %v3161 = vadd.f32 %v3160, 1.0
    %v3162 = vrcp.pop %v3161
    %v3163 = vmul.f32 %v3161, %v3162
    %v3164 = vsub.f32 1.0, %v3163
    %v3165 = vmul.f32 %v3162, %v3164
    %v3166 = vadd.f32 %v3162, %v3165
    %vm3167 = vweird.f32 %v3161
    %vm3168 = vweird.f32 %v3162
    %vm3169 = vmor %vm3167, %vm3168
    %v3170 = vsel %vm3169, %v3162, %v3166
    %v3171 = vand.u32 2147483647, %v3161
    %vm3172 = vcmp.eq.f32.partialorder %v3171, 8.507059e+37
    %v3173 = vand.u32 %v3161, 2147483648
    %v3174 = vor.u32 1.1754944e-38, %v3173
    %v3175 = vsel %vm3172, %v3174, %v3170
    %v3176 = vmul.f32 1.0, %v3175
    %v3177 = vmul.f32 %v3156, %v2872
    %v3178 = vmul.f32 %v3137, %v3157
    %v3179 = vadd.f32 %v3177, %v3178
    %v3180 = vtanh.pop %v3179
    %v3181 = vmul.f32 %v3176, %v3180
    %v3182 = vxor.u32 %v3115, 2147483648
    %v3183 = vmul.f32 %v3182, 1.442695
    %v3184 = vpow.pop %v3183
    %v3185 = vadd.f32 %v3184, 1.0
    %v3186 = vrcp.pop %v3185
    %v3187 = vmul.f32 %v3185, %v3186
    %v3188 = vsub.f32 1.0, %v3187
    %v3189 = vmul.f32 %v3186, %v3188
    %v3190 = vadd.f32 %v3186, %v3189
    %vm3191 = vweird.f32 %v3185
    %vm3192 = vweird.f32 %v3186
    %vm3193 = vmor %vm3191, %vm3192
    %v3194 = vsel %vm3193, %v3186, %v3190
    %v3195 = vand.u32 2147483647, %v3185
    %vm3196 = vcmp.eq.f32.partialorder %v3195, 8.507059e+37
    %v3197 = vand.u32 %v3185, 2147483648
    %v3198 = vor.u32 1.1754944e-38, %v3197
    %v3199 = vsel %vm3196, %v3198, %v3194
    %v3200 = vmul.f32 1.0, %v3199
    %v3201 = vxor.u32 %v3116, 2147483648
    %v3202 = vmul.f32 %v3201, 1.442695
    %v3203 = vpow.pop %v3202
    %v3204 = vadd.f32 %v3203, 1.0
    %v3205 = vrcp.pop %v3204
    %v3206 = vmul.f32 %v3204, %v3205
    %v3207 = vsub.f32 1.0, %v3206
    %v3208 = vmul.f32 %v3205, %v3207
    %v3209 = vadd.f32 %v3205, %v3208
    %vm3210 = vweird.f32 %v3204
    %vm3211 = vweird.f32 %v3205
    %vm3212 = vmor %vm3210, %vm3211
    %v3213 = vsel %vm3212, %v3205, %v3209
    %v3214 = vand.u32 2147483647, %v3204
    %vm3215 = vcmp.eq.f32.partialorder %v3214, 8.507059e+37
    %v3216 = vand.u32 %v3204, 2147483648
    %v3217 = vor.u32 1.1754944e-38, %v3216
    %v3218 = vsel %vm3215, %v3217, %v3213
    %v3219 = vmul.f32 1.0, %v3218
    %v3220 = vtanh.pop %v3117
    %v3221 = vxor.u32 %v3118, 2147483648
    %v3222 = vmul.f32 %v3221, 1.442695
    %v3223 = vpow.pop %v3222
    %v3224 = vadd.f32 %v3223, 1.0
    %v3225 = vrcp.pop %v3224
    %v3226 = vmul.f32 %v3224, %v3225
    %v3227 = vsub.f32 1.0, %v3226
    %v3228 = vmul.f32 %v3225, %v3227
    %v3229 = vadd.f32 %v3225, %v3228
    %vm3230 = vweird.f32 %v3224
    %vm3231 = vweird.f32 %v3225
    %vm3232 = vmor %vm3230, %vm3231
    %v3233 = vsel %vm3232, %v3225, %v3229
    %v3234 = vand.u32 2147483647, %v3224
    %vm3235 = vcmp.eq.f32.partialorder %v3234, 8.507059e+37
    %v3236 = vand.u32 %v3224, 2147483648
    %v3237 = vor.u32 1.1754944e-38, %v3236
    %v3238 = vsel %vm3235, %v3237, %v3233
    %v3239 = vmul.f32 1.0, %v3238
    %v3240 = vmul.f32 %v3219, %v2935
    %v3241 = vmul.f32 %v3200, %v3220
    %v3242 = vadd.f32 %v3240, %v3241
    %v3243 = vtanh.pop %v3242
    %v3244 = vmul.f32 %v3239, %v3243
    %v3245 = vmul.f32 %v1079, %v3181
    %v3246 = vadd.f32 %v2939, %v3245
    %v3247 = vmul.f32 %v1075, %v3244
    %v3248 = vadd.f32 %v2941, %v3247
    %v3249 = vld [vmem:[#allocation13] sm:$0xff]
    %v3250 = vld [vmem:[#allocation13 + $0x8] sm:$0xff]
    %v3251 = vld [vmem:[#allocation13 + $0x10] sm:$0xff]
    %v3252 = vld [vmem:[#allocation13 + $0x18] sm:$0xff]
    %v3253 = vld [vmem:[#allocation13 + $0x20] sm:$0xff]
    %v3254 = vld [vmem:[#allocation13 + $0x28] sm:$0xff]
    %v3255 = vld [vmem:[#allocation13 + $0x30] sm:$0xff]
    %v3256 = vld [vmem:[#allocation13 + $0x38] sm:$0xff]
    %v3257 = vld [vmem:[#allocation13 + $0x40] sm:$0xff]
    %v3258 = vld [vmem:[#allocation13 + $0x48] sm:$0xff]
    %v3259 = vld [vmem:[#allocation13 + $0x50] sm:$0xff]
    %v3260 = vld [vmem:[#allocation13 + $0x58] sm:$0xff]
    %v3261 = vld [vmem:[#allocation13 + $0x60] sm:$0xff]
    %v3262 = vld [vmem:[#allocation13 + $0x68] sm:$0xff]
    %v3263 = vld [vmem:[#allocation13 + $0x70] sm:$0xff]
    %v3264 = vld [vmem:[#allocation13 + $0x78] sm:$0xff]
    %v3265 = vld [vmem:[#allocation14] sm:$0xff]
    %v3266 = vld [vmem:[#allocation14 + $0x8] sm:$0xff]
    %v3267 = vld [vmem:[#allocation14 + $0x10] sm:$0xff]
    %v3268 = vld [vmem:[#allocation14 + $0x18] sm:$0xff]
    %v3269 = vld [vmem:[#allocation14 + $0x20] sm:$0xff]
    %v3270 = vld [vmem:[#allocation14 + $0x28] sm:$0xff]
    %v3271 = vld [vmem:[#allocation14 + $0x30] sm:$0xff]
    %v3272 = vld [vmem:[#allocation14 + $0x38] sm:$0xff]
    %v3273 = vld [vmem:[#allocation14 + $0x40] sm:$0xff]
    %v3274 = vld [vmem:[#allocation14 + $0x48] sm:$0xff]
    %v3275 = vld [vmem:[#allocation14 + $0x50] sm:$0xff]
    %v3276 = vld [vmem:[#allocation14 + $0x58] sm:$0xff]
    %v3277 = vld [vmem:[#allocation14 + $0x60] sm:$0xff]
    %v3278 = vld [vmem:[#allocation14 + $0x68] sm:$0xff]
    %v3279 = vld [vmem:[#allocation14 + $0x70] sm:$0xff]
    %v3280 = vld [vmem:[#allocation14 + $0x78] sm:$0xff]
    %3281 = vmatpush.msra.mxu0 %v3280
    %3282 = vmatpush.msra.mxu0 %v3279
    %3283 = vmatpush.msra.mxu0 %v3278
    %3284 = vmatpush.msra.mxu0 %v3277
    %3285 = vmatpush.msra.mxu0 %v3276
    %3286 = vmatpush.msra.mxu0 %v3275
    %3287 = vmatpush.msra.mxu0 %v3274
    %3288 = vmatpush.msra.mxu0 %v3273
    %3289 = vmatpush.msra.mxu0 %v3272
    %3290 = vmatpush.msra.mxu0 %v3271
    %3291 = vmatpush.msra.mxu0 %v3270
    %3292 = vmatpush.msra.mxu0 %v3269
    %3293 = vmatpush.msra.mxu0 %v3268
    %3294 = vmatpush.msra.mxu0 %v3267
    %3295 = vmatpush.msra.mxu0 %v3266
    %3296 = vmatpush.msra.mxu0 %v3265
    %3297 = vmatmul.f32.gmra.mxu0 %v3248
    %v3298 = vpop.f32.mrf.mxu0
    %v3299 = vadd.f32 0.0, %v3298
    %3300 = vdwg.mxu0
    %3301 = vmatpush.msra.mxu0 %v3264
    %3302 = vmatpush.msra.mxu0 %v3263
    %3303 = vmatpush.msra.mxu0 %v3262
    %3304 = vmatpush.msra.mxu0 %v3261
    %3305 = vmatpush.msra.mxu0 %v3260
    %3306 = vmatpush.msra.mxu0 %v3259
    %3307 = vmatpush.msra.mxu0 %v3258
    %3308 = vmatpush.msra.mxu0 %v3257
    %3309 = vmatpush.msra.mxu0 %v3256
    %3310 = vmatpush.msra.mxu0 %v3255
    %3311 = vmatpush.msra.mxu0 %v3254
    %3312 = vmatpush.msra.mxu0 %v3253
    %3313 = vmatpush.msra.mxu0 %v3252
    %3314 = vmatpush.msra.mxu0 %v3251
    %3315 = vmatpush.msra.mxu0 %v3250
    %3316 = vmatpush.msra.mxu0 %v3249
    %3317 = vmatmul.f32.gmra.mxu0 %v3246
    %v3318 = vpop.f32.mrf.mxu0
    %v3319 = vadd.f32 %v3299, %v3318
    %3320 = vdwg.mxu0
    %v3321 = vld [vmem:[%s8] sm:$0x1]
    %v3323 = vperm.slane %v3321, 0
    %v3325 = vadd.f32 %v3319, %v3323
    %v3326 = vmax.f32 %v3325, 0.0
    %v3327 = vld [vmem:[#allocation16] sm:$0xff]
    %v3328 = vld [vmem:[#allocation16 + $0x8] sm:$0xff]
    %v3329 = vld [vmem:[#allocation16 + $0x10] sm:$0xff]
    %v3330 = vld [vmem:[#allocation16 + $0x18] sm:$0xff]
    %v3331 = vld [vmem:[#allocation16 + $0x20] sm:$0xff]
    %v3332 = vld [vmem:[#allocation16 + $0x28] sm:$0xff]
    %v3333 = vld [vmem:[#allocation16 + $0x30] sm:$0xff]
    %v3334 = vld [vmem:[#allocation16 + $0x38] sm:$0xff]
    %v3335 = vld [vmem:[#allocation16 + $0x40] sm:$0xff]
    %v3336 = vld [vmem:[#allocation16 + $0x48] sm:$0xff]
    %v3337 = vld [vmem:[#allocation16 + $0x50] sm:$0xff]
    %v3338 = vld [vmem:[#allocation16 + $0x58] sm:$0xff]
    %v3339 = vld [vmem:[#allocation16 + $0x60] sm:$0xff]
    %v3340 = vld [vmem:[#allocation16 + $0x68] sm:$0xff]
    %v3341 = vld [vmem:[#allocation16 + $0x70] sm:$0xff]
    %v3342 = vld [vmem:[#allocation16 + $0x78] sm:$0xff]
    %v3343 = vld [vmem:[%s10] sm:$0x1]
    %v3345 = vperm.slane %v3343, 0
    %3347 = vmatpush.msra.mxu0 %v3342
    %3348 = vmatpush.msra.mxu0 %v3341
    %3349 = vmatpush.msra.mxu0 %v3340
    %3350 = vmatpush.msra.mxu0 %v3339
    %3351 = vmatpush.msra.mxu0 %v3338
    %3352 = vmatpush.msra.mxu0 %v3337
    %3353 = vmatpush.msra.mxu0 %v3336
    %3354 = vmatpush.msra.mxu0 %v3335
    %3355 = vmatpush.msra.mxu0 %v3334
    %3356 = vmatpush.msra.mxu0 %v3333
    %3357 = vmatpush.msra.mxu0 %v3332
    %3358 = vmatpush.msra.mxu0 %v3331
    %3359 = vmatpush.msra.mxu0 %v3330
    %3360 = vmatpush.msra.mxu0 %v3329
    %3361 = vmatpush.msra.mxu0 %v3328
    %3362 = vmatpush.msra.mxu0 %v3327
    %3363 = vmatmul.f32.gmra.mxu0 %v3326
    %v3364 = vpop.f32.mrf.mxu0
    %v3365 = vadd.f32 %v3345, %v3364
    %3366 = vdwg.mxu0
    %3367 = vst [vmem:[#allocation17] sm:$0xff] %v3365
    // Predicated region
    $region74: #{tpu_custom_call.1} parent=1 // pred_check
      _
    $region75: #{tpu_custom_call.1} parent=1 // pred_check_branch
      %3369 = sbr.rel (0) target = $region77
    $region76: #{tpu_custom_call.1} parent=1 // pred_region
      %3371 = vsyncadd [#allocation7], 0
      %s3373 = sshll.u32 [#allocation17], 4
      %s3374 = int_to_ptr.vmem [resolvable:$true] %s3373
      %s3375 = sshll.u32 %s11, 4
      %s3376 = int_to_ptr.hbm [resolvable:$true] %s3375
      %3378 = dma.vmem_to_hbm [thread:$0]  %s3374, 128, %s3376, [#allocation7]
    $region77: #{tpu_custom_call.1} parent=1 // pred_fallthru
      _
    // Predicated region
    $region78: #{tpu_custom_call.1} parent=1 // pred_check
      _
    $region79: #{tpu_custom_call.1} parent=1 // pred_check_branch
      %3380 = sbr.rel (0) target = $region81
    $region80: #{tpu_custom_call.1} parent=1 // pred_region
      %3382 = dma.done [#allocation7], 128
    $region81: #{tpu_custom_call.1} parent=1 // pred_fallthru
      _
    %3383 = vsyncpa [#allocation6], 1
    %3384 = vsyncpa [#allocation9], 1
    %3385 = vsyncpa [#allocation12], 1
    %3386 = vsyncpa [#allocation15], 1
    %3387 = vsyncpa [#allocation7], 1

</llo_original>
